<compile_context>
chip_gen: v7x
topology: tpu7x:2x2x1
jax: 0.10.0
libtpu: 0.0.40
codegen_flags: <defaults>
</compile_context>

<pallas_src>
import jax
import jax.numpy as jnp
import numpy as np
from jax.experimental import pallas as pl
from jax.experimental.pallas import tpu as pltpu


# ----------------------------------------------------------------------------
# Fused Inception forward, built once per static configuration
# ----------------------------------------------------------------------------
def build_inception_forward(input_size, output_size, conv_params, N, H, W,
                            dtype=jnp.float32):
    filter_sizes = tuple(int(cp[0]) for cp in conv_params)
    out_as = tuple(int(cp[1]) for cp in conv_params)
    out_bs = tuple(int(cp[2]) for cp in conv_params)
    nb = len(conv_params)
    # (fs-1)//2 SAME padding assumes odd filters (matches the PyTorch module).
    assert all(fs % 2 == 1 for fs in filter_sizes), "filter sizes must be odd"

    Cin = int(input_size)
    C0 = int(output_size)
    C1 = C0 + sum(out_as)                 # fused 1x1 output channels
    C1p = ((C1 + 7) // 8) * 8             # pad to a sublane multiple (layout insurance)
    Ctot = C0 + sum(out_bs)               # final concatenated channels
    HW = H * W

    pads = tuple((fs - 1) // 2 for fs in filter_sizes)
    pmax = max(pads) if nb else 0
    K1 = 2 * pmax + 1
    T = K1 * K1                           # number of fused spatial taps
    offsets = tuple((oy, ox) for oy in range(-pmax, pmax + 1)
                    for ox in range(-pmax, pmax + 1))

    # channel offsets inside fused z (1x1 outputs) and inside the final output
    off_a, o = [], C0
    for ca in out_as:
        off_a.append(o); o += ca
    off_b, o = [], C0
    for cb in out_bs:
        off_b.append(o); o += cb
    off_a, off_b = tuple(off_a), tuple(off_b)

    # ---- static 0/1 boundary masks per tap (host numpy -> kernel input) ----
    masks_np = np.zeros((T, 1, HW), np.float32)
    for t, (oy, ox) in enumerate(offsets):
        m = np.zeros((H, W), np.float32)
        m[max(0, -oy):min(H, H - oy), max(0, -ox):min(W, W - ox)] = 1.0
        masks_np[t, 0] = m.reshape(HW)
    masks_const = jnp.asarray(masks_np)

    # ------------------------------------------------------------------ kernel
    def kernel(x_ref, w1_ref, b1_ref, wk_ref, bk_ref, m_ref, o_ref):
        x = x_ref[0]                                             # (Cin, HW) lane-dense

        # fused 1x1 convs (branch0 + all branches' first conv), BN folded
        z = jnp.dot(w1_ref[...], x, preferred_element_type=jnp.float32)
        z = jnp.maximum(z + b1_ref[...], 0.0)                    # (C1p, HW)

        # tap accumulation: one roll (XLU) + one mask mul (VPU) + one small
        # matmul (MXU) per spatial offset; covers every branch (and branch0
        # via an identity block on the centre tap) in a single accumulator.
        acc = jnp.zeros((Ctot, HW), jnp.float32)
        for t, (oy, ox) in enumerate(offsets):
            s = oy * W + ox                                      # flat spatial shift
            if s == 0:
                zt = z
            else:
                zt = pltpu.roll(z, shift=(-s) % HW, axis=1)      # zt[f] = z[f + s]
            if not (oy == 0 and ox == 0):
                zt = zt * m_ref[t]                               # zero SAME-pad halo
            acc = acc + jnp.dot(wk_ref[t], zt,
                                preferred_element_type=jnp.float32)

        out = jnp.maximum(acc + bk_ref[...], 0.0)                # (Ctot, HW)
        o_ref[0] = out.astype(o_ref.dtype)                       # one dense store

    in_specs = [
        pl.BlockSpec((1, Cin, HW), lambda n: (n, 0, 0)),         # x (per image)
        pl.BlockSpec((C1p, Cin), lambda n: (0, 0)),              # fused 1x1 weight
        pl.BlockSpec((C1p, 1), lambda n: (0, 0)),                # fused 1x1 bias
        pl.BlockSpec((T, Ctot, C1p), lambda n: (0, 0, 0)),       # packed tap weights
        pl.BlockSpec((Ctot, 1), lambda n: (0, 0)),               # packed output bias
        pl.BlockSpec((T, 1, HW), lambda n: (0, 0, 0)),           # boundary masks
    ]

    call = pl.pallas_call(
        kernel,
        out_shape=jax.ShapeDtypeStruct((N, Ctot, HW), dtype),
        grid=(N,),
        in_specs=in_specs,
        out_specs=pl.BlockSpec((1, Ctot, HW), lambda n: (n, 0, 0)),
        compiler_params=pltpu.CompilerParams(
            dimension_semantics=("parallel",)),                  # v7x: 2-TC sharding
    )

    # ---------------------------------------------------------- host packing
    def pack_weights(params):
        w0, b0 = params["branch0"]
        was = [br[0] for br in params["branches"]]
        bas = [br[1] for br in params["branches"]]
        w1 = jnp.concatenate([w0] + was, axis=1)                 # (Cin, C1)
        b1 = jnp.concatenate([b0] + bas, axis=0)                 # (C1,)
        w1t = jnp.zeros((C1p, Cin), dtype).at[:C1, :].set(w1.T)
        b1p = jnp.zeros((C1p, 1), dtype).at[:C1, 0].set(b1)

        wk = jnp.zeros((T, Ctot, C1p), dtype)
        # branch0 pass-through: identity on the centre tap, zero bias
        ct = pmax * K1 + pmax
        wk = wk.at[ct, :C0, :C0].set(jnp.eye(C0, dtype=dtype))
        bk = jnp.zeros((Ctot,), dtype)
        for bi in range(nb):
            k, p = filter_sizes[bi], pads[bi]
            ca, cb = out_as[bi], out_bs[bi]
            wb = params["branches"][bi][2]                       # (k, k, Ca, Cb) HWIO
            bb = params["branches"][bi][3]                       # (Cb,)
            for dy in range(k):
                for dx in range(k):
                    t = (dy - p + pmax) * K1 + (dx - p + pmax)
                    wk = wk.at[t,
                               off_b[bi]:off_b[bi] + cb,
                               off_a[bi]:off_a[bi] + ca].set(wb[dy, dx].T)
            bk = bk.at[off_b[bi]:off_b[bi] + cb].set(bb)
        return w1t, b1p, wk, bk.reshape(Ctot, 1)

    @jax.jit
    def forward(x_nchw, params):
        w1t, b1p, wk, bk = pack_weights(params)
        x_flat = x_nchw.reshape(N, Cin, HW)                      # free (trailing dims)
        out = call(x_flat, w1t, b1p, wk, bk, masks_const)
        return out.reshape(N, Ctot, H, W)                        # free

    return forward


# ----------------------------------------------------------------------------
# deterministic parameter construction (BN folded into conv)
# ----------------------------------------------------------------------------
def init_params(key, input_size, output_size, conv_params, dtype=jnp.float32):
    eps = 1e-5  # nn.BatchNorm2d default

    def bn_params(k, c):
        k1, k2, k3, k4 = jax.random.split(k, 4)
        gamma = jax.random.uniform(k1, (c,), dtype, 0.5, 1.5)
        beta = 0.1 * jax.random.normal(k2, (c,), dtype)
        mean = 0.1 * jax.random.normal(k3, (c,), dtype)
        var = jax.random.uniform(k4, (c,), dtype, 0.5, 1.5)
        return gamma, beta, mean, var

    def fold(w, b, bn):
        gamma, beta, mean, var = bn
        scale = gamma / jnp.sqrt(var + eps)       # per output channel (last w axis)
        return w * scale, (b - mean) * scale + beta

    keys = jax.random.split(key, 1 + len(conv_params))

    k0a, k0b, k0c = jax.random.split(keys[0], 3)
    w0 = 0.3 * jax.random.normal(k0a, (input_size, output_size), dtype)
    b0 = 0.1 * jax.random.normal(k0b, (output_size,), dtype)
    w0, b0 = fold(w0, b0, bn_params(k0c, output_size))

    branches = []
    for i, (fs, out_a, out_b) in enumerate(conv_params):
        ka1, ka2, ka3, kb1, kb2, kb3 = jax.random.split(keys[1 + i], 6)
        wa = 0.3 * jax.random.normal(ka1, (input_size, out_a), dtype)
        ba = 0.1 * jax.random.normal(ka2, (out_a,), dtype)
        wa, ba = fold(wa, ba, bn_params(ka3, out_a))
        wk = 0.3 * jax.random.normal(kb1, (fs, fs, out_a, out_b), dtype)  # HWIO
        bk = 0.1 * jax.random.normal(kb2, (out_b,), dtype)
        wk, bk = fold(wk, bk, bn_params(kb3, out_b))
        branches.append((wa, ba, wk, bk))        # filter size stays static (closure)

    return {"branch0": (w0, b0), "branches": branches}


# ----------------------------------------------------------------------------
# pure-JAX reference for validation
# ----------------------------------------------------------------------------
def ref_forward(x_nchw, params):
    dn = ("NHWC", "HWIO", "NHWC")
    x = jnp.transpose(x_nchw, (0, 2, 3, 1))
    w0, b0 = params["branch0"]
    y0 = jax.nn.relu(
        jax.lax.conv_general_dilated(x, w0[None, None], (1, 1), "VALID",
                                     dimension_numbers=dn) + b0)
    outs = [y0]
    for (wa, ba, wk, bk) in params["branches"]:
        ya = jax.nn.relu(
            jax.lax.conv_general_dilated(x, wa[None, None], (1, 1), "VALID",
                                         dimension_numbers=dn) + ba)
        yb = jax.nn.relu(
            jax.lax.conv_general_dilated(ya, wk, (1, 1), "SAME",
                                         dimension_numbers=dn) + bk)
        outs.append(yb)
    return jnp.transpose(jnp.concatenate(outs, axis=-1), (0, 3, 1, 2))


# ----------------------------------------------------------------------------
if __name__ == "__main__":
    key = jax.random.PRNGKey(0)
    kx, kp = jax.random.split(key)

    # Inception(input_size=4, output_size=4, conv_params=[(3, 4, 8), (5, 4, 8)])
    input_size, output_size = 4, 4
    conv_params = [(3, 4, 8), (5, 4, 8)]
    N, H, W = 2, 16, 16

    x = jax.random.normal(kx, (N, input_size, H, W), jnp.float32)  # NCHW
    params = init_params(kp, input_size, output_size, conv_params)

    forward = build_inception_forward(input_size, output_size, conv_params, N, H, W)
    out = jax.block_until_ready(forward(x, params))

    expected_channels = output_size + sum(cp[2] for cp in conv_params)
    assert out.shape == (N, expected_channels, H, W), out.shape

    ref = jax.block_until_ready(ref_forward(x, params))
    np.testing.assert_allclose(np.asarray(out), np.asarray(ref), rtol=1e-4, atol=1e-4)

    print("KERNEL_OK")
</pallas_src>

<mosaic_0001>
module attributes {stable_mosaic.version = 11 : i64} {
  func.func @kernel(%arg0: i32, %arg1: memref<1x4x256xf32, #tpu.memory_space<vmem>>, %arg2: memref<16x4xf32, #tpu.memory_space<vmem>>, %arg3: memref<16x1xf32, #tpu.memory_space<vmem>>, %arg4: memref<25x20x16xf32, #tpu.memory_space<vmem>>, %arg5: memref<20x1xf32, #tpu.memory_space<vmem>>, %arg6: memref<25x1x256xf32, #tpu.memory_space<vmem>>, %arg7: memref<1x20x256xf32, #tpu.memory_space<vmem>>) attributes {dimension_semantics = [#tpu.dimension_semantics<parallel>], iteration_bounds = array<i64: 2>, scalar_prefetch = 0 : i64, scratch_operands = 0 : i64, tpu.core_type = #tpu.core_type<tc>, window_params = [{transform_indices = @transform_0, window_bounds = array<i64: 1, 4, 256>}, {pipeline_mode = #tpu.pipeline_mode<synchronous>, transform_indices = @transform_1, window_bounds = array<i64: 16, 4>}, {pipeline_mode = #tpu.pipeline_mode<synchronous>, transform_indices = @transform_2, window_bounds = array<i64: 16, 1>}, {pipeline_mode = #tpu.pipeline_mode<synchronous>, transform_indices = @transform_3, window_bounds = array<i64: 25, 20, 16>}, {pipeline_mode = #tpu.pipeline_mode<synchronous>, transform_indices = @transform_4, window_bounds = array<i64: 20, 1>}, {pipeline_mode = #tpu.pipeline_mode<synchronous>, transform_indices = @transform_5, window_bounds = array<i64: 25, 1, 256>}, {transform_indices = @transform_6, window_bounds = array<i64: 1, 20, 256>}]} {
    %c0 = arith.constant 0 : index
    %c0_0 = arith.constant 0 : index
    %c0_1 = arith.constant 0 : index
    %0 = vector.load %arg1[%c0, %c0_0, %c0_1] : memref<1x4x256xf32, #tpu.memory_space<vmem>>, vector<1x4x256xf32>
    %1 = vector.shape_cast %0 : vector<1x4x256xf32> to vector<4x256xf32>
    %c0_2 = arith.constant 0 : index
    %c0_3 = arith.constant 0 : index
    %2 = vector.load %arg2[%c0_2, %c0_3] : memref<16x4xf32, #tpu.memory_space<vmem>>, vector<16x4xf32>
    %cst = arith.constant dense<0.000000e+00> : vector<16x256xf32>
    %3 = tpu.matmul %2, %1, %cst {dimension_numbers = #tpu.dot_dimension_numbers<[1], [0], [0], [1], [0, 0, 1, 1], [], []>} : vector<16x4xf32>, vector<4x256xf32>, vector<16x256xf32> -> vector<16x256xf32>
    %c0_4 = arith.constant 0 : index
    %c0_5 = arith.constant 0 : index
    %4 = vector.load %arg3[%c0_4, %c0_5] : memref<16x1xf32, #tpu.memory_space<vmem>>, vector<16x1xf32>
    %5 = vector.broadcast %4 : vector<16x1xf32> to vector<16x256xf32>
    %6 = arith.addf %3, %5 : vector<16x256xf32>
    %cst_6 = arith.constant 0.000000e+00 : f32
    %7 = vector.broadcast %cst_6 : f32 to vector<16x256xf32>
    %8 = arith.maximumf %6, %7 : vector<16x256xf32>
    %cst_7 = arith.constant 0.000000e+00 : f32
    %9 = vector.broadcast %cst_7 : f32 to vector<20x256xf32>
    %c34_i32 = arith.constant 34 : i32
    %10 = tpu.dynamic_rotate %8 by %c34_i32 dim 1 : vector<16x256xf32>, i32 -> vector<16x256xf32>
    %c0_8 = arith.constant 0 : index
    %c0_9 = arith.constant 0 : index
    %c0_10 = arith.constant 0 : index
    %11 = vector.load %arg6[%c0_8, %c0_9, %c0_10] : memref<25x1x256xf32, #tpu.memory_space<vmem>>, vector<1x1x256xf32>
    %12 = vector.shape_cast %11 : vector<1x1x256xf32> to vector<1x256xf32>
    %13 = vector.broadcast %12 : vector<1x256xf32> to vector<16x256xf32>
    %14 = arith.mulf %10, %13 : vector<16x256xf32>
    %c0_11 = arith.constant 0 : index
    %c0_12 = arith.constant 0 : index
    %c0_13 = arith.constant 0 : index
    %15 = vector.load %arg4[%c0_11, %c0_12, %c0_13] : memref<25x20x16xf32, #tpu.memory_space<vmem>>, vector<1x20x16xf32>
    %16 = vector.shape_cast %15 : vector<1x20x16xf32> to vector<20x16xf32>
    %cst_14 = arith.constant dense<0.000000e+00> : vector<20x256xf32>
    %17 = tpu.matmul %16, %14, %cst_14 {dimension_numbers = #tpu.dot_dimension_numbers<[1], [0], [0], [1], [0, 0, 1, 1], [], []>} : vector<20x16xf32>, vector<16x256xf32>, vector<20x256xf32> -> vector<20x256xf32>
    %18 = arith.addf %9, %17 : vector<20x256xf32>
    %c33_i32 = arith.constant 33 : i32
    %19 = tpu.dynamic_rotate %8 by %c33_i32 dim 1 : vector<16x256xf32>, i32 -> vector<16x256xf32>
    %c1 = arith.constant 1 : index
    %c0_15 = arith.constant 0 : index
    %c0_16 = arith.constant 0 : index
    %20 = vector.load %arg6[%c1, %c0_15, %c0_16] : memref<25x1x256xf32, #tpu.memory_space<vmem>>, vector<1x1x256xf32>
    %21 = vector.shape_cast %20 : vector<1x1x256xf32> to vector<1x256xf32>
    %22 = vector.broadcast %21 : vector<1x256xf32> to vector<16x256xf32>
    %23 = arith.mulf %19, %22 : vector<16x256xf32>
    %c1_17 = arith.constant 1 : index
    %c0_18 = arith.constant 0 : index
    %c0_19 = arith.constant 0 : index
    %24 = vector.load %arg4[%c1_17, %c0_18, %c0_19] : memref<25x20x16xf32, #tpu.memory_space<vmem>>, vector<1x20x16xf32>
    %25 = vector.shape_cast %24 : vector<1x20x16xf32> to vector<20x16xf32>
    %cst_20 = arith.constant dense<0.000000e+00> : vector<20x256xf32>
    %26 = tpu.matmul %25, %23, %cst_20 {dimension_numbers = #tpu.dot_dimension_numbers<[1], [0], [0], [1], [0, 0, 1, 1], [], []>} : vector<20x16xf32>, vector<16x256xf32>, vector<20x256xf32> -> vector<20x256xf32>
    %27 = arith.addf %18, %26 : vector<20x256xf32>
    %c32_i32 = arith.constant 32 : i32
    %28 = tpu.dynamic_rotate %8 by %c32_i32 dim 1 : vector<16x256xf32>, i32 -> vector<16x256xf32>
    %c2 = arith.constant 2 : index
    %c0_21 = arith.constant 0 : index
    %c0_22 = arith.constant 0 : index
    %29 = vector.load %arg6[%c2, %c0_21, %c0_22] : memref<25x1x256xf32, #tpu.memory_space<vmem>>, vector<1x1x256xf32>
    %30 = vector.shape_cast %29 : vector<1x1x256xf32> to vector<1x256xf32>
    %31 = vector.broadcast %30 : vector<1x256xf32> to vector<16x256xf32>
    %32 = arith.mulf %28, %31 : vector<16x256xf32>
    %c2_23 = arith.constant 2 : index
    %c0_24 = arith.constant 0 : index
    %c0_25 = arith.constant 0 : index
    %33 = vector.load %arg4[%c2_23, %c0_24, %c0_25] : memref<25x20x16xf32, #tpu.memory_space<vmem>>, vector<1x20x16xf32>
    %34 = vector.shape_cast %33 : vector<1x20x16xf32> to vector<20x16xf32>
    %cst_26 = arith.constant dense<0.000000e+00> : vector<20x256xf32>
    %35 = tpu.matmul %34, %32, %cst_26 {dimension_numbers = #tpu.dot_dimension_numbers<[1], [0], [0], [1], [0, 0, 1, 1], [], []>} : vector<20x16xf32>, vector<16x256xf32>, vector<20x256xf32> -> vector<20x256xf32>
    %36 = arith.addf %27, %35 : vector<20x256xf32>
    %c31_i32 = arith.constant 31 : i32
    %37 = tpu.dynamic_rotate %8 by %c31_i32 dim 1 : vector<16x256xf32>, i32 -> vector<16x256xf32>
    %c3 = arith.constant 3 : index
    %c0_27 = arith.constant 0 : index
    %c0_28 = arith.constant 0 : index
    %38 = vector.load %arg6[%c3, %c0_27, %c0_28] : memref<25x1x256xf32, #tpu.memory_space<vmem>>, vector<1x1x256xf32>
    %39 = vector.shape_cast %38 : vector<1x1x256xf32> to vector<1x256xf32>
    %40 = vector.broadcast %39 : vector<1x256xf32> to vector<16x256xf32>
    %41 = arith.mulf %37, %40 : vector<16x256xf32>
    %c3_29 = arith.constant 3 : index
    %c0_30 = arith.constant 0 : index
    %c0_31 = arith.constant 0 : index
    %42 = vector.load %arg4[%c3_29, %c0_30, %c0_31] : memref<25x20x16xf32, #tpu.memory_space<vmem>>, vector<1x20x16xf32>
    %43 = vector.shape_cast %42 : vector<1x20x16xf32> to vector<20x16xf32>
    %cst_32 = arith.constant dense<0.000000e+00> : vector<20x256xf32>
    %44 = tpu.matmul %43, %41, %cst_32 {dimension_numbers = #tpu.dot_dimension_numbers<[1], [0], [0], [1], [0, 0, 1, 1], [], []>} : vector<20x16xf32>, vector<16x256xf32>, vector<20x256xf32> -> vector<20x256xf32>
    %45 = arith.addf %36, %44 : vector<20x256xf32>
    %c30_i32 = arith.constant 30 : i32
    %46 = tpu.dynamic_rotate %8 by %c30_i32 dim 1 : vector<16x256xf32>, i32 -> vector<16x256xf32>
    %c4 = arith.constant 4 : index
    %c0_33 = arith.constant 0 : index
    %c0_34 = arith.constant 0 : index
    %47 = vector.load %arg6[%c4, %c0_33, %c0_34] : memref<25x1x256xf32, #tpu.memory_space<vmem>>, vector<1x1x256xf32>
    %48 = vector.shape_cast %47 : vector<1x1x256xf32> to vector<1x256xf32>
    %49 = vector.broadcast %48 : vector<1x256xf32> to vector<16x256xf32>
    %50 = arith.mulf %46, %49 : vector<16x256xf32>
    %c4_35 = arith.constant 4 : index
    %c0_36 = arith.constant 0 : index
    %c0_37 = arith.constant 0 : index
    %51 = vector.load %arg4[%c4_35, %c0_36, %c0_37] : memref<25x20x16xf32, #tpu.memory_space<vmem>>, vector<1x20x16xf32>
    %52 = vector.shape_cast %51 : vector<1x20x16xf32> to vector<20x16xf32>
    %cst_38 = arith.constant dense<0.000000e+00> : vector<20x256xf32>
    %53 = tpu.matmul %52, %50, %cst_38 {dimension_numbers = #tpu.dot_dimension_numbers<[1], [0], [0], [1], [0, 0, 1, 1], [], []>} : vector<20x16xf32>, vector<16x256xf32>, vector<20x256xf32> -> vector<20x256xf32>
    %54 = arith.addf %45, %53 : vector<20x256xf32>
    %c18_i32 = arith.constant 18 : i32
    %55 = tpu.dynamic_rotate %8 by %c18_i32 dim 1 : vector<16x256xf32>, i32 -> vector<16x256xf32>
    %c5 = arith.constant 5 : index
    %c0_39 = arith.constant 0 : index
    %c0_40 = arith.constant 0 : index
    %56 = vector.load %arg6[%c5, %c0_39, %c0_40] : memref<25x1x256xf32, #tpu.memory_space<vmem>>, vector<1x1x256xf32>
    %57 = vector.shape_cast %56 : vector<1x1x256xf32> to vector<1x256xf32>
    %58 = vector.broadcast %57 : vector<1x256xf32> to vector<16x256xf32>
    %59 = arith.mulf %55, %58 : vector<16x256xf32>
    %c5_41 = arith.constant 5 : index
    %c0_42 = arith.constant 0 : index
    %c0_43 = arith.constant 0 : index
    %60 = vector.load %arg4[%c5_41, %c0_42, %c0_43] : memref<25x20x16xf32, #tpu.memory_space<vmem>>, vector<1x20x16xf32>
    %61 = vector.shape_cast %60 : vector<1x20x16xf32> to vector<20x16xf32>
    %cst_44 = arith.constant dense<0.000000e+00> : vector<20x256xf32>
    %62 = tpu.matmul %61, %59, %cst_44 {dimension_numbers = #tpu.dot_dimension_numbers<[1], [0], [0], [1], [0, 0, 1, 1], [], []>} : vector<20x16xf32>, vector<16x256xf32>, vector<20x256xf32> -> vector<20x256xf32>
    %63 = arith.addf %54, %62 : vector<20x256xf32>
    %c17_i32 = arith.constant 17 : i32
    %64 = tpu.dynamic_rotate %8 by %c17_i32 dim 1 : vector<16x256xf32>, i32 -> vector<16x256xf32>
    %c6 = arith.constant 6 : index
    %c0_45 = arith.constant 0 : index
    %c0_46 = arith.constant 0 : index
    %65 = vector.load %arg6[%c6, %c0_45, %c0_46] : memref<25x1x256xf32, #tpu.memory_space<vmem>>, vector<1x1x256xf32>
    %66 = vector.shape_cast %65 : vector<1x1x256xf32> to vector<1x256xf32>
    %67 = vector.broadcast %66 : vector<1x256xf32> to vector<16x256xf32>
    %68 = arith.mulf %64, %67 : vector<16x256xf32>
    %c6_47 = arith.constant 6 : index
    %c0_48 = arith.constant 0 : index
    %c0_49 = arith.constant 0 : index
    %69 = vector.load %arg4[%c6_47, %c0_48, %c0_49] : memref<25x20x16xf32, #tpu.memory_space<vmem>>, vector<1x20x16xf32>
    %70 = vector.shape_cast %69 : vector<1x20x16xf32> to vector<20x16xf32>
    %cst_50 = arith.constant dense<0.000000e+00> : vector<20x256xf32>
    %71 = tpu.matmul %70, %68, %cst_50 {dimension_numbers = #tpu.dot_dimension_numbers<[1], [0], [0], [1], [0, 0, 1, 1], [], []>} : vector<20x16xf32>, vector<16x256xf32>, vector<20x256xf32> -> vector<20x256xf32>
    %72 = arith.addf %63, %71 : vector<20x256xf32>
    %c16_i32 = arith.constant 16 : i32
    %73 = tpu.dynamic_rotate %8 by %c16_i32 dim 1 : vector<16x256xf32>, i32 -> vector<16x256xf32>
    %c7 = arith.constant 7 : index
    %c0_51 = arith.constant 0 : index
    %c0_52 = arith.constant 0 : index
    %74 = vector.load %arg6[%c7, %c0_51, %c0_52] : memref<25x1x256xf32, #tpu.memory_space<vmem>>, vector<1x1x256xf32>
    %75 = vector.shape_cast %74 : vector<1x1x256xf32> to vector<1x256xf32>
    %76 = vector.broadcast %75 : vector<1x256xf32> to vector<16x256xf32>
    %77 = arith.mulf %73, %76 : vector<16x256xf32>
    %c7_53 = arith.constant 7 : index
    %c0_54 = arith.constant 0 : index
    %c0_55 = arith.constant 0 : index
    %78 = vector.load %arg4[%c7_53, %c0_54, %c0_55] : memref<25x20x16xf32, #tpu.memory_space<vmem>>, vector<1x20x16xf32>
    %79 = vector.shape_cast %78 : vector<1x20x16xf32> to vector<20x16xf32>
    %cst_56 = arith.constant dense<0.000000e+00> : vector<20x256xf32>
    %80 = tpu.matmul %79, %77, %cst_56 {dimension_numbers = #tpu.dot_dimension_numbers<[1], [0], [0], [1], [0, 0, 1, 1], [], []>} : vector<20x16xf32>, vector<16x256xf32>, vector<20x256xf32> -> vector<20x256xf32>
    %81 = arith.addf %72, %80 : vector<20x256xf32>
    %c15_i32 = arith.constant 15 : i32
    %82 = tpu.dynamic_rotate %8 by %c15_i32 dim 1 : vector<16x256xf32>, i32 -> vector<16x256xf32>
    %c8 = arith.constant 8 : index
    %c0_57 = arith.constant 0 : index
    %c0_58 = arith.constant 0 : index
    %83 = vector.load %arg6[%c8, %c0_57, %c0_58] : memref<25x1x256xf32, #tpu.memory_space<vmem>>, vector<1x1x256xf32>
    %84 = vector.shape_cast %83 : vector<1x1x256xf32> to vector<1x256xf32>
    %85 = vector.broadcast %84 : vector<1x256xf32> to vector<16x256xf32>
    %86 = arith.mulf %82, %85 : vector<16x256xf32>
    %c8_59 = arith.constant 8 : index
    %c0_60 = arith.constant 0 : index
    %c0_61 = arith.constant 0 : index
    %87 = vector.load %arg4[%c8_59, %c0_60, %c0_61] : memref<25x20x16xf32, #tpu.memory_space<vmem>>, vector<1x20x16xf32>
    %88 = vector.shape_cast %87 : vector<1x20x16xf32> to vector<20x16xf32>
    %cst_62 = arith.constant dense<0.000000e+00> : vector<20x256xf32>
    %89 = tpu.matmul %88, %86, %cst_62 {dimension_numbers = #tpu.dot_dimension_numbers<[1], [0], [0], [1], [0, 0, 1, 1], [], []>} : vector<20x16xf32>, vector<16x256xf32>, vector<20x256xf32> -> vector<20x256xf32>
    %90 = arith.addf %81, %89 : vector<20x256xf32>
    %c14_i32 = arith.constant 14 : i32
    %91 = tpu.dynamic_rotate %8 by %c14_i32 dim 1 : vector<16x256xf32>, i32 -> vector<16x256xf32>
    %c9 = arith.constant 9 : index
    %c0_63 = arith.constant 0 : index
    %c0_64 = arith.constant 0 : index
    %92 = vector.load %arg6[%c9, %c0_63, %c0_64] : memref<25x1x256xf32, #tpu.memory_space<vmem>>, vector<1x1x256xf32>
    %93 = vector.shape_cast %92 : vector<1x1x256xf32> to vector<1x256xf32>
    %94 = vector.broadcast %93 : vector<1x256xf32> to vector<16x256xf32>
    %95 = arith.mulf %91, %94 : vector<16x256xf32>
    %c9_65 = arith.constant 9 : index
    %c0_66 = arith.constant 0 : index
    %c0_67 = arith.constant 0 : index
    %96 = vector.load %arg4[%c9_65, %c0_66, %c0_67] : memref<25x20x16xf32, #tpu.memory_space<vmem>>, vector<1x20x16xf32>
    %97 = vector.shape_cast %96 : vector<1x20x16xf32> to vector<20x16xf32>
    %cst_68 = arith.constant dense<0.000000e+00> : vector<20x256xf32>
    %98 = tpu.matmul %97, %95, %cst_68 {dimension_numbers = #tpu.dot_dimension_numbers<[1], [0], [0], [1], [0, 0, 1, 1], [], []>} : vector<20x16xf32>, vector<16x256xf32>, vector<20x256xf32> -> vector<20x256xf32>
    %99 = arith.addf %90, %98 : vector<20x256xf32>
    %c2_i32 = arith.constant 2 : i32
    %100 = tpu.dynamic_rotate %8 by %c2_i32 dim 1 : vector<16x256xf32>, i32 -> vector<16x256xf32>
    %c10 = arith.constant 10 : index
    %c0_69 = arith.constant 0 : index
    %c0_70 = arith.constant 0 : index
    %101 = vector.load %arg6[%c10, %c0_69, %c0_70] : memref<25x1x256xf32, #tpu.memory_space<vmem>>, vector<1x1x256xf32>
    %102 = vector.shape_cast %101 : vector<1x1x256xf32> to vector<1x256xf32>
    %103 = vector.broadcast %102 : vector<1x256xf32> to vector<16x256xf32>
    %104 = arith.mulf %100, %103 : vector<16x256xf32>
    %c10_71 = arith.constant 10 : index
    %c0_72 = arith.constant 0 : index
    %c0_73 = arith.constant 0 : index
    %105 = vector.load %arg4[%c10_71, %c0_72, %c0_73] : memref<25x20x16xf32, #tpu.memory_space<vmem>>, vector<1x20x16xf32>
    %106 = vector.shape_cast %105 : vector<1x20x16xf32> to vector<20x16xf32>
    %cst_74 = arith.constant dense<0.000000e+00> : vector<20x256xf32>
    %107 = tpu.matmul %106, %104, %cst_74 {dimension_numbers = #tpu.dot_dimension_numbers<[1], [0], [0], [1], [0, 0, 1, 1], [], []>} : vector<20x16xf32>, vector<16x256xf32>, vector<20x256xf32> -> vector<20x256xf32>
    %108 = arith.addf %99, %107 : vector<20x256xf32>
    %c1_i32 = arith.constant 1 : i32
    %109 = tpu.dynamic_rotate %8 by %c1_i32 dim 1 : vector<16x256xf32>, i32 -> vector<16x256xf32>
    %c11 = arith.constant 11 : index
    %c0_75 = arith.constant 0 : index
    %c0_76 = arith.constant 0 : index
    %110 = vector.load %arg6[%c11, %c0_75, %c0_76] : memref<25x1x256xf32, #tpu.memory_space<vmem>>, vector<1x1x256xf32>
    %111 = vector.shape_cast %110 : vector<1x1x256xf32> to vector<1x256xf32>
    %112 = vector.broadcast %111 : vector<1x256xf32> to vector<16x256xf32>
    %113 = arith.mulf %109, %112 : vector<16x256xf32>
    %c11_77 = arith.constant 11 : index
    %c0_78 = arith.constant 0 : index
    %c0_79 = arith.constant 0 : index
    %114 = vector.load %arg4[%c11_77, %c0_78, %c0_79] : memref<25x20x16xf32, #tpu.memory_space<vmem>>, vector<1x20x16xf32>
    %115 = vector.shape_cast %114 : vector<1x20x16xf32> to vector<20x16xf32>
    %cst_80 = arith.constant dense<0.000000e+00> : vector<20x256xf32>
    %116 = tpu.matmul %115, %113, %cst_80 {dimension_numbers = #tpu.dot_dimension_numbers<[1], [0], [0], [1], [0, 0, 1, 1], [], []>} : vector<20x16xf32>, vector<16x256xf32>, vector<20x256xf32> -> vector<20x256xf32>
    %117 = arith.addf %108, %116 : vector<20x256xf32>
    %c12 = arith.constant 12 : index
    %c0_81 = arith.constant 0 : index
    %c0_82 = arith.constant 0 : index
    %118 = vector.load %arg4[%c12, %c0_81, %c0_82] : memref<25x20x16xf32, #tpu.memory_space<vmem>>, vector<1x20x16xf32>
    %119 = vector.shape_cast %118 : vector<1x20x16xf32> to vector<20x16xf32>
    %cst_83 = arith.constant dense<0.000000e+00> : vector<20x256xf32>
    %120 = tpu.matmul %119, %8, %cst_83 {dimension_numbers = #tpu.dot_dimension_numbers<[1], [0], [0], [1], [0, 0, 1, 1], [], []>} : vector<20x16xf32>, vector<16x256xf32>, vector<20x256xf32> -> vector<20x256xf32>
    %121 = arith.addf %117, %120 : vector<20x256xf32>
    %c255_i32 = arith.constant 255 : i32
    %122 = tpu.dynamic_rotate %8 by %c255_i32 dim 1 : vector<16x256xf32>, i32 -> vector<16x256xf32>
    %c13 = arith.constant 13 : index
    %c0_84 = arith.constant 0 : index
    %c0_85 = arith.constant 0 : index
    %123 = vector.load %arg6[%c13, %c0_84, %c0_85] : memref<25x1x256xf32, #tpu.memory_space<vmem>>, vector<1x1x256xf32>
    %124 = vector.shape_cast %123 : vector<1x1x256xf32> to vector<1x256xf32>
    %125 = vector.broadcast %124 : vector<1x256xf32> to vector<16x256xf32>
    %126 = arith.mulf %122, %125 : vector<16x256xf32>
    %c13_86 = arith.constant 13 : index
    %c0_87 = arith.constant 0 : index
    %c0_88 = arith.constant 0 : index
    %127 = vector.load %arg4[%c13_86, %c0_87, %c0_88] : memref<25x20x16xf32, #tpu.memory_space<vmem>>, vector<1x20x16xf32>
    %128 = vector.shape_cast %127 : vector<1x20x16xf32> to vector<20x16xf32>
    %cst_89 = arith.constant dense<0.000000e+00> : vector<20x256xf32>
    %129 = tpu.matmul %128, %126, %cst_89 {dimension_numbers = #tpu.dot_dimension_numbers<[1], [0], [0], [1], [0, 0, 1, 1], [], []>} : vector<20x16xf32>, vector<16x256xf32>, vector<20x256xf32> -> vector<20x256xf32>
    %130 = arith.addf %121, %129 : vector<20x256xf32>
    %c254_i32 = arith.constant 254 : i32
    %131 = tpu.dynamic_rotate %8 by %c254_i32 dim 1 : vector<16x256xf32>, i32 -> vector<16x256xf32>
    %c14 = arith.constant 14 : index
    %c0_90 = arith.constant 0 : index
    %c0_91 = arith.constant 0 : index
    %132 = vector.load %arg6[%c14, %c0_90, %c0_91] : memref<25x1x256xf32, #tpu.memory_space<vmem>>, vector<1x1x256xf32>
    %133 = vector.shape_cast %132 : vector<1x1x256xf32> to vector<1x256xf32>
    %134 = vector.broadcast %133 : vector<1x256xf32> to vector<16x256xf32>
    %135 = arith.mulf %131, %134 : vector<16x256xf32>
    %c14_92 = arith.constant 14 : index
    %c0_93 = arith.constant 0 : index
    %c0_94 = arith.constant 0 : index
    %136 = vector.load %arg4[%c14_92, %c0_93, %c0_94] : memref<25x20x16xf32, #tpu.memory_space<vmem>>, vector<1x20x16xf32>
    %137 = vector.shape_cast %136 : vector<1x20x16xf32> to vector<20x16xf32>
    %cst_95 = arith.constant dense<0.000000e+00> : vector<20x256xf32>
    %138 = tpu.matmul %137, %135, %cst_95 {dimension_numbers = #tpu.dot_dimension_numbers<[1], [0], [0], [1], [0, 0, 1, 1], [], []>} : vector<20x16xf32>, vector<16x256xf32>, vector<20x256xf32> -> vector<20x256xf32>
    %139 = arith.addf %130, %138 : vector<20x256xf32>
    %c242_i32 = arith.constant 242 : i32
    %140 = tpu.dynamic_rotate %8 by %c242_i32 dim 1 : vector<16x256xf32>, i32 -> vector<16x256xf32>
    %c15 = arith.constant 15 : index
    %c0_96 = arith.constant 0 : index
    %c0_97 = arith.constant 0 : index
    %141 = vector.load %arg6[%c15, %c0_96, %c0_97] : memref<25x1x256xf32, #tpu.memory_space<vmem>>, vector<1x1x256xf32>
    %142 = vector.shape_cast %141 : vector<1x1x256xf32> to vector<1x256xf32>
    %143 = vector.broadcast %142 : vector<1x256xf32> to vector<16x256xf32>
    %144 = arith.mulf %140, %143 : vector<16x256xf32>
    %c15_98 = arith.constant 15 : index
    %c0_99 = arith.constant 0 : index
    %c0_100 = arith.constant 0 : index
    %145 = vector.load %arg4[%c15_98, %c0_99, %c0_100] : memref<25x20x16xf32, #tpu.memory_space<vmem>>, vector<1x20x16xf32>
    %146 = vector.shape_cast %145 : vector<1x20x16xf32> to vector<20x16xf32>
    %cst_101 = arith.constant dense<0.000000e+00> : vector<20x256xf32>
    %147 = tpu.matmul %146, %144, %cst_101 {dimension_numbers = #tpu.dot_dimension_numbers<[1], [0], [0], [1], [0, 0, 1, 1], [], []>} : vector<20x16xf32>, vector<16x256xf32>, vector<20x256xf32> -> vector<20x256xf32>
    %148 = arith.addf %139, %147 : vector<20x256xf32>
    %c241_i32 = arith.constant 241 : i32
    %149 = tpu.dynamic_rotate %8 by %c241_i32 dim 1 : vector<16x256xf32>, i32 -> vector<16x256xf32>
    %c16 = arith.constant 16 : index
    %c0_102 = arith.constant 0 : index
    %c0_103 = arith.constant 0 : index
    %150 = vector.load %arg6[%c16, %c0_102, %c0_103] : memref<25x1x256xf32, #tpu.memory_space<vmem>>, vector<1x1x256xf32>
    %151 = vector.shape_cast %150 : vector<1x1x256xf32> to vector<1x256xf32>
    %152 = vector.broadcast %151 : vector<1x256xf32> to vector<16x256xf32>
    %153 = arith.mulf %149, %152 : vector<16x256xf32>
    %c16_104 = arith.constant 16 : index
    %c0_105 = arith.constant 0 : index
    %c0_106 = arith.constant 0 : index
    %154 = vector.load %arg4[%c16_104, %c0_105, %c0_106] : memref<25x20x16xf32, #tpu.memory_space<vmem>>, vector<1x20x16xf32>
    %155 = vector.shape_cast %154 : vector<1x20x16xf32> to vector<20x16xf32>
    %cst_107 = arith.constant dense<0.000000e+00> : vector<20x256xf32>
    %156 = tpu.matmul %155, %153, %cst_107 {dimension_numbers = #tpu.dot_dimension_numbers<[1], [0], [0], [1], [0, 0, 1, 1], [], []>} : vector<20x16xf32>, vector<16x256xf32>, vector<20x256xf32> -> vector<20x256xf32>
    %157 = arith.addf %148, %156 : vector<20x256xf32>
    %c240_i32 = arith.constant 240 : i32
    %158 = tpu.dynamic_rotate %8 by %c240_i32 dim 1 : vector<16x256xf32>, i32 -> vector<16x256xf32>
    %c17 = arith.constant 17 : index
    %c0_108 = arith.constant 0 : index
    %c0_109 = arith.constant 0 : index
    %159 = vector.load %arg6[%c17, %c0_108, %c0_109] : memref<25x1x256xf32, #tpu.memory_space<vmem>>, vector<1x1x256xf32>
    %160 = vector.shape_cast %159 : vector<1x1x256xf32> to vector<1x256xf32>
    %161 = vector.broadcast %160 : vector<1x256xf32> to vector<16x256xf32>
    %162 = arith.mulf %158, %161 : vector<16x256xf32>
    %c17_110 = arith.constant 17 : index
    %c0_111 = arith.constant 0 : index
    %c0_112 = arith.constant 0 : index
    %163 = vector.load %arg4[%c17_110, %c0_111, %c0_112] : memref<25x20x16xf32, #tpu.memory_space<vmem>>, vector<1x20x16xf32>
    %164 = vector.shape_cast %163 : vector<1x20x16xf32> to vector<20x16xf32>
    %cst_113 = arith.constant dense<0.000000e+00> : vector<20x256xf32>
    %165 = tpu.matmul %164, %162, %cst_113 {dimension_numbers = #tpu.dot_dimension_numbers<[1], [0], [0], [1], [0, 0, 1, 1], [], []>} : vector<20x16xf32>, vector<16x256xf32>, vector<20x256xf32> -> vector<20x256xf32>
    %166 = arith.addf %157, %165 : vector<20x256xf32>
    %c239_i32 = arith.constant 239 : i32
    %167 = tpu.dynamic_rotate %8 by %c239_i32 dim 1 : vector<16x256xf32>, i32 -> vector<16x256xf32>
    %c18 = arith.constant 18 : index
    %c0_114 = arith.constant 0 : index
    %c0_115 = arith.constant 0 : index
    %168 = vector.load %arg6[%c18, %c0_114, %c0_115] : memref<25x1x256xf32, #tpu.memory_space<vmem>>, vector<1x1x256xf32>
    %169 = vector.shape_cast %168 : vector<1x1x256xf32> to vector<1x256xf32>
    %170 = vector.broadcast %169 : vector<1x256xf32> to vector<16x256xf32>
    %171 = arith.mulf %167, %170 : vector<16x256xf32>
    %c18_116 = arith.constant 18 : index
    %c0_117 = arith.constant 0 : index
    %c0_118 = arith.constant 0 : index
    %172 = vector.load %arg4[%c18_116, %c0_117, %c0_118] : memref<25x20x16xf32, #tpu.memory_space<vmem>>, vector<1x20x16xf32>
    %173 = vector.shape_cast %172 : vector<1x20x16xf32> to vector<20x16xf32>
    %cst_119 = arith.constant dense<0.000000e+00> : vector<20x256xf32>
    %174 = tpu.matmul %173, %171, %cst_119 {dimension_numbers = #tpu.dot_dimension_numbers<[1], [0], [0], [1], [0, 0, 1, 1], [], []>} : vector<20x16xf32>, vector<16x256xf32>, vector<20x256xf32> -> vector<20x256xf32>
    %175 = arith.addf %166, %174 : vector<20x256xf32>
    %c238_i32 = arith.constant 238 : i32
    %176 = tpu.dynamic_rotate %8 by %c238_i32 dim 1 : vector<16x256xf32>, i32 -> vector<16x256xf32>
    %c19 = arith.constant 19 : index
    %c0_120 = arith.constant 0 : index
    %c0_121 = arith.constant 0 : index
    %177 = vector.load %arg6[%c19, %c0_120, %c0_121] : memref<25x1x256xf32, #tpu.memory_space<vmem>>, vector<1x1x256xf32>
    %178 = vector.shape_cast %177 : vector<1x1x256xf32> to vector<1x256xf32>
    %179 = vector.broadcast %178 : vector<1x256xf32> to vector<16x256xf32>
    %180 = arith.mulf %176, %179 : vector<16x256xf32>
    %c19_122 = arith.constant 19 : index
    %c0_123 = arith.constant 0 : index
    %c0_124 = arith.constant 0 : index
    %181 = vector.load %arg4[%c19_122, %c0_123, %c0_124] : memref<25x20x16xf32, #tpu.memory_space<vmem>>, vector<1x20x16xf32>
    %182 = vector.shape_cast %181 : vector<1x20x16xf32> to vector<20x16xf32>
    %cst_125 = arith.constant dense<0.000000e+00> : vector<20x256xf32>
    %183 = tpu.matmul %182, %180, %cst_125 {dimension_numbers = #tpu.dot_dimension_numbers<[1], [0], [0], [1], [0, 0, 1, 1], [], []>} : vector<20x16xf32>, vector<16x256xf32>, vector<20x256xf32> -> vector<20x256xf32>
    %184 = arith.addf %175, %183 : vector<20x256xf32>
    %c226_i32 = arith.constant 226 : i32
    %185 = tpu.dynamic_rotate %8 by %c226_i32 dim 1 : vector<16x256xf32>, i32 -> vector<16x256xf32>
    %c20 = arith.constant 20 : index
    %c0_126 = arith.constant 0 : index
    %c0_127 = arith.constant 0 : index
    %186 = vector.load %arg6[%c20, %c0_126, %c0_127] : memref<25x1x256xf32, #tpu.memory_space<vmem>>, vector<1x1x256xf32>
    %187 = vector.shape_cast %186 : vector<1x1x256xf32> to vector<1x256xf32>
    %188 = vector.broadcast %187 : vector<1x256xf32> to vector<16x256xf32>
    %189 = arith.mulf %185, %188 : vector<16x256xf32>
    %c20_128 = arith.constant 20 : index
    %c0_129 = arith.constant 0 : index
    %c0_130 = arith.constant 0 : index
    %190 = vector.load %arg4[%c20_128, %c0_129, %c0_130] : memref<25x20x16xf32, #tpu.memory_space<vmem>>, vector<1x20x16xf32>
    %191 = vector.shape_cast %190 : vector<1x20x16xf32> to vector<20x16xf32>
    %cst_131 = arith.constant dense<0.000000e+00> : vector<20x256xf32>
    %192 = tpu.matmul %191, %189, %cst_131 {dimension_numbers = #tpu.dot_dimension_numbers<[1], [0], [0], [1], [0, 0, 1, 1], [], []>} : vector<20x16xf32>, vector<16x256xf32>, vector<20x256xf32> -> vector<20x256xf32>
    %193 = arith.addf %184, %192 : vector<20x256xf32>
    %c225_i32 = arith.constant 225 : i32
    %194 = tpu.dynamic_rotate %8 by %c225_i32 dim 1 : vector<16x256xf32>, i32 -> vector<16x256xf32>
    %c21 = arith.constant 21 : index
    %c0_132 = arith.constant 0 : index
    %c0_133 = arith.constant 0 : index
    %195 = vector.load %arg6[%c21, %c0_132, %c0_133] : memref<25x1x256xf32, #tpu.memory_space<vmem>>, vector<1x1x256xf32>
    %196 = vector.shape_cast %195 : vector<1x1x256xf32> to vector<1x256xf32>
    %197 = vector.broadcast %196 : vector<1x256xf32> to vector<16x256xf32>
    %198 = arith.mulf %194, %197 : vector<16x256xf32>
    %c21_134 = arith.constant 21 : index
    %c0_135 = arith.constant 0 : index
    %c0_136 = arith.constant 0 : index
    %199 = vector.load %arg4[%c21_134, %c0_135, %c0_136] : memref<25x20x16xf32, #tpu.memory_space<vmem>>, vector<1x20x16xf32>
    %200 = vector.shape_cast %199 : vector<1x20x16xf32> to vector<20x16xf32>
    %cst_137 = arith.constant dense<0.000000e+00> : vector<20x256xf32>
    %201 = tpu.matmul %200, %198, %cst_137 {dimension_numbers = #tpu.dot_dimension_numbers<[1], [0], [0], [1], [0, 0, 1, 1], [], []>} : vector<20x16xf32>, vector<16x256xf32>, vector<20x256xf32> -> vector<20x256xf32>
    %202 = arith.addf %193, %201 : vector<20x256xf32>
    %c224_i32 = arith.constant 224 : i32
    %203 = tpu.dynamic_rotate %8 by %c224_i32 dim 1 : vector<16x256xf32>, i32 -> vector<16x256xf32>
    %c22 = arith.constant 22 : index
    %c0_138 = arith.constant 0 : index
    %c0_139 = arith.constant 0 : index
    %204 = vector.load %arg6[%c22, %c0_138, %c0_139] : memref<25x1x256xf32, #tpu.memory_space<vmem>>, vector<1x1x256xf32>
    %205 = vector.shape_cast %204 : vector<1x1x256xf32> to vector<1x256xf32>
    %206 = vector.broadcast %205 : vector<1x256xf32> to vector<16x256xf32>
    %207 = arith.mulf %203, %206 : vector<16x256xf32>
    %c22_140 = arith.constant 22 : index
    %c0_141 = arith.constant 0 : index
    %c0_142 = arith.constant 0 : index
    %208 = vector.load %arg4[%c22_140, %c0_141, %c0_142] : memref<25x20x16xf32, #tpu.memory_space<vmem>>, vector<1x20x16xf32>
    %209 = vector.shape_cast %208 : vector<1x20x16xf32> to vector<20x16xf32>
    %cst_143 = arith.constant dense<0.000000e+00> : vector<20x256xf32>
    %210 = tpu.matmul %209, %207, %cst_143 {dimension_numbers = #tpu.dot_dimension_numbers<[1], [0], [0], [1], [0, 0, 1, 1], [], []>} : vector<20x16xf32>, vector<16x256xf32>, vector<20x256xf32> -> vector<20x256xf32>
    %211 = arith.addf %202, %210 : vector<20x256xf32>
    %c223_i32 = arith.constant 223 : i32
    %212 = tpu.dynamic_rotate %8 by %c223_i32 dim 1 : vector<16x256xf32>, i32 -> vector<16x256xf32>
    %c23 = arith.constant 23 : index
    %c0_144 = arith.constant 0 : index
    %c0_145 = arith.constant 0 : index
    %213 = vector.load %arg6[%c23, %c0_144, %c0_145] : memref<25x1x256xf32, #tpu.memory_space<vmem>>, vector<1x1x256xf32>
    %214 = vector.shape_cast %213 : vector<1x1x256xf32> to vector<1x256xf32>
    %215 = vector.broadcast %214 : vector<1x256xf32> to vector<16x256xf32>
    %216 = arith.mulf %212, %215 : vector<16x256xf32>
    %c23_146 = arith.constant 23 : index
    %c0_147 = arith.constant 0 : index
    %c0_148 = arith.constant 0 : index
    %217 = vector.load %arg4[%c23_146, %c0_147, %c0_148] : memref<25x20x16xf32, #tpu.memory_space<vmem>>, vector<1x20x16xf32>
    %218 = vector.shape_cast %217 : vector<1x20x16xf32> to vector<20x16xf32>
    %cst_149 = arith.constant dense<0.000000e+00> : vector<20x256xf32>
    %219 = tpu.matmul %218, %216, %cst_149 {dimension_numbers = #tpu.dot_dimension_numbers<[1], [0], [0], [1], [0, 0, 1, 1], [], []>} : vector<20x16xf32>, vector<16x256xf32>, vector<20x256xf32> -> vector<20x256xf32>
    %220 = arith.addf %211, %219 : vector<20x256xf32>
    %c222_i32 = arith.constant 222 : i32
    %221 = tpu.dynamic_rotate %8 by %c222_i32 dim 1 : vector<16x256xf32>, i32 -> vector<16x256xf32>
    %c24 = arith.constant 24 : index
    %c0_150 = arith.constant 0 : index
    %c0_151 = arith.constant 0 : index
    %222 = vector.load %arg6[%c24, %c0_150, %c0_151] : memref<25x1x256xf32, #tpu.memory_space<vmem>>, vector<1x1x256xf32>
    %223 = vector.shape_cast %222 : vector<1x1x256xf32> to vector<1x256xf32>
    %224 = vector.broadcast %223 : vector<1x256xf32> to vector<16x256xf32>
    %225 = arith.mulf %221, %224 : vector<16x256xf32>
    %c24_152 = arith.constant 24 : index
    %c0_153 = arith.constant 0 : index
    %c0_154 = arith.constant 0 : index
    %226 = vector.load %arg4[%c24_152, %c0_153, %c0_154] : memref<25x20x16xf32, #tpu.memory_space<vmem>>, vector<1x20x16xf32>
    %227 = vector.shape_cast %226 : vector<1x20x16xf32> to vector<20x16xf32>
    %cst_155 = arith.constant dense<0.000000e+00> : vector<20x256xf32>
    %228 = tpu.matmul %227, %225, %cst_155 {dimension_numbers = #tpu.dot_dimension_numbers<[1], [0], [0], [1], [0, 0, 1, 1], [], []>} : vector<20x16xf32>, vector<16x256xf32>, vector<20x256xf32> -> vector<20x256xf32>
    %229 = arith.addf %220, %228 : vector<20x256xf32>
    %c0_156 = arith.constant 0 : index
    %c0_157 = arith.constant 0 : index
    %230 = vector.load %arg5[%c0_156, %c0_157] : memref<20x1xf32, #tpu.memory_space<vmem>>, vector<20x1xf32>
    %231 = vector.broadcast %230 : vector<20x1xf32> to vector<20x256xf32>
    %232 = arith.addf %229, %231 : vector<20x256xf32>
    %cst_158 = arith.constant 0.000000e+00 : f32
    %233 = vector.broadcast %cst_158 : f32 to vector<20x256xf32>
    %234 = arith.maximumf %232, %233 : vector<20x256xf32>
    %c0_159 = arith.constant 0 : index
    %c0_160 = arith.constant 0 : index
    %c0_161 = arith.constant 0 : index
    %235 = vector.load %arg7[%c0_159, %c0_160, %c0_161] : memref<1x20x256xf32, #tpu.memory_space<vmem>>, vector<1x20x256xf32>
    %236 = vector.shape_cast %235 : vector<1x20x256xf32> to vector<20x256xf32>
    %237 = vector.shape_cast %234 : vector<20x256xf32> to vector<1x20x256xf32>
    tpu.vector_store %arg7[%c0_159, %c0_160, %c0_161], %237 {strides = array<i32>} : memref<1x20x256xf32, #tpu.memory_space<vmem>>, vector<1x20x256xf32>,
    return
  }
  func.func @transform_0(%arg0: i32) -> (i32, i32, i32) {
    %c0_i32 = arith.constant 0 : i32
    %c0_i32_0 = arith.constant 0 : i32
    %c0_i32_1 = arith.constant 0 : i32
    return %arg0, %c0_i32, %c0_i32_0 : i32, i32, i32
  }
  func.func @transform_1(%arg0: i32) -> (i32, i32) {
    %c0_i32 = arith.constant 0 : i32
    %c0_i32_0 = arith.constant 0 : i32
    %c0_i32_1 = arith.constant 0 : i32
    return %c0_i32, %c0_i32_0 : i32, i32
  }
  func.func @transform_2(%arg0: i32) -> (i32, i32) {
    %c0_i32 = arith.constant 0 : i32
    %c0_i32_0 = arith.constant 0 : i32
    %c0_i32_1 = arith.constant 0 : i32
    return %c0_i32, %c0_i32_0 : i32, i32
  }
  func.func @transform_3(%arg0: i32) -> (i32, i32, i32) {
    %c0_i32 = arith.constant 0 : i32
    %c0_i32_0 = arith.constant 0 : i32
    %c0_i32_1 = arith.constant 0 : i32
    %c0_i32_2 = arith.constant 0 : i32
    return %c0_i32, %c0_i32_0, %c0_i32_1 : i32, i32, i32
  }
  func.func @transform_4(%arg0: i32) -> (i32, i32) {
    %c0_i32 = arith.constant 0 : i32
    %c0_i32_0 = arith.constant 0 : i32
    %c0_i32_1 = arith.constant 0 : i32
    return %c0_i32, %c0_i32_0 : i32, i32
  }
  func.func @transform_5(%arg0: i32) -> (i32, i32, i32) {
    %c0_i32 = arith.constant 0 : i32
    %c0_i32_0 = arith.constant 0 : i32
    %c0_i32_1 = arith.constant 0 : i32
    %c0_i32_2 = arith.constant 0 : i32
    return %c0_i32, %c0_i32_0, %c0_i32_1 : i32, i32, i32
  }
  func.func @transform_6(%arg0: i32) -> (i32, i32, i32) {
    %c0_i32 = arith.constant 0 : i32
    %c0_i32_0 = arith.constant 0 : i32
    %c0_i32_1 = arith.constant 0 : i32
    return %arg0, %c0_i32, %c0_i32_0 : i32, i32, i32
  }
}

</mosaic_0001>

<llo_original>
// kernel: forward.1
$region0: #{forward.1}
  #allocation0 [shape = 'u32[]', space=smem, size = 0x4, offset = 0x4, fixed_abs, tag = 'smem constant byte address 0x4 - core index']
  #allocation1 [shape = 'u32[144,128]{1,0:T(1,128)}', space=vmem, size = 0x12000, scoped, tag = 'internal scratch']
  %s0 = inlined_call_operand.vmem [shape: f32[2,4,256], index: 0, kind: input, shape index: {}]
  %s1 = inlined_call_operand.vmem [shape: f32[16,4], index: 1, kind: input, shape index: {}]
  %s2 = inlined_call_operand.vmem [shape: f32[16,1], index: 2, kind: input, shape index: {}]
  %s3 = inlined_call_operand.vmem [shape: f32[25,20,16], index: 3, kind: input, shape index: {}]
  %s4 = inlined_call_operand.vmem [shape: f32[20,1], index: 4, kind: input, shape index: {}]
  %s5 = inlined_call_operand.vmem [shape: f32[25,1,256], index: 5, kind: input, shape index: {}]
  %s6 = inlined_call_operand.vmem [shape: f32[2,20,256], index: 6, kind: output, shape index: {}]
  %s7 = sld [smem:[#allocation0]]
  $region57: #{forward.1} parent=0
    _
  %s9 = ssub.s32 1, %s7
  %s10 = scalar_select 0, %s9, %s7
  loop: start=0, step=1, limit=4
  $region2: #{forward.1} parent=0 // loop_pre_header
    _
  $region3: #{forward.1} parent=0 // loop_header
    %s12 = sphi 0, %s16
    %p13 = scmp.ge.s32.totalorder %s12, 4
    %s22 = sphi 0, %s24
    %s25 = sphi 0, %s22
    %s26 = sphi 0, %s25
    %s42 = sphi 0, %s26
    %s46 = sphi 0, %s46
    %s48 = sphi 0, %s46
    %s49 = sphi 0, %s48
    %s63 = sphi 0, %s49
    %s67 = sphi 0, %s67
    %s69 = sphi 0, %s67
    %s70 = sphi 0, %s69
    %s84 = sphi 0, %s70
    %s88 = sphi 0, %s88
    %s90 = sphi 0, %s88
    %s91 = sphi 0, %s90
    %s105 = sphi 0, %s91
    %s109 = sphi 0, %s109
    %s111 = sphi 0, %s109
    %s112 = sphi 0, %s111
    %s126 = sphi 0, %s112
    %s130 = sphi 0, %s130
    %s132 = sphi 0, %s130
    %s133 = sphi 0, %s132
    %s147 = sphi 0, %s133
    %s153 = sphi 0, %s155
    %s156 = sphi 0, %s153
    %s157 = sphi 0, %s156
    %s173 = sphi 0, %s157
  $region4: #{forward.1} parent=0 // loop_header_branch
    %15 = sbr.rel (%p13) target = $region8
  $region5: #{forward.1} parent=0 // loop_body
    %s17 = ssub.s32 %s12, 1
    %s18 = ssub.s32 %s12, 2
    %s19 = sadd.s32 %s12, 1
    %s20 = ssub.s32 %s12, %s19
    %p21 = scmp.eq.s32.totalorder %s20, 0
    %s23 = sadd.s32 %s22, 1
    %s24 = scalar_select %p21, %s22, %s23
    %p27 = pneg %p21
    %p28 = scmp.eq.s32.totalorder %s12, 1
    %p29 = por %p27, %p28
    %p30 = scmp.ne.s32.totalorder %s22, %s25
    %p31 = scmp.eq.s32.totalorder %s12, 0
    %p32 = por %p30, %p31
    %p33 = scmp.ne.s32.totalorder %s22, %s25
    %p34 = scmp.eq.s32.totalorder %s17, 1
    %p35 = por %p33, %p34
    %p36 = scmp.ne.s32.totalorder %s25, %s26
    %p37 = scmp.eq.s32.totalorder %s17, 0
    %p38 = por %p36, %p37
    %p39 = scmp.ne.s32.totalorder %s25, %s26
    %p40 = scmp.eq.s32.totalorder %s18, 1
    %p41 = por %p39, %p40
    %p43 = scmp.ne.s32.totalorder %s26, %s42
    %p44 = scmp.eq.s32.totalorder %s18, 0
    %p45 = por %p43, %p44
    %s47 = sadd.s32 %s46, 1
    %p50 = scmp.eq.s32.totalorder %s12, 1
    %p51 = scmp.ne.s32.totalorder %s46, %s48
    %p52 = scmp.eq.s32.totalorder %s12, 0
    %p53 = por %p51, %p52
    %p54 = scmp.ne.s32.totalorder %s46, %s48
    %p55 = scmp.eq.s32.totalorder %s17, 1
    %p56 = por %p54, %p55
    %p57 = scmp.ne.s32.totalorder %s48, %s49
    %p58 = scmp.eq.s32.totalorder %s17, 0
    %p59 = por %p57, %p58
    %p60 = scmp.ne.s32.totalorder %s48, %s49
    %p61 = scmp.eq.s32.totalorder %s18, 1
    %p62 = por %p60, %p61
    %p64 = scmp.ne.s32.totalorder %s49, %s63
    %p65 = scmp.eq.s32.totalorder %s18, 0
    %p66 = por %p64, %p65
    %s68 = sadd.s32 %s67, 1
    %p71 = scmp.eq.s32.totalorder %s12, 1
    %p72 = scmp.ne.s32.totalorder %s67, %s69
    %p73 = scmp.eq.s32.totalorder %s12, 0
    %p74 = por %p72, %p73
    %p75 = scmp.ne.s32.totalorder %s67, %s69
    %p76 = scmp.eq.s32.totalorder %s17, 1
    %p77 = por %p75, %p76
    %p78 = scmp.ne.s32.totalorder %s69, %s70
    %p79 = scmp.eq.s32.totalorder %s17, 0
    %p80 = por %p78, %p79
    %p81 = scmp.ne.s32.totalorder %s69, %s70
    %p82 = scmp.eq.s32.totalorder %s18, 1
    %p83 = por %p81, %p82
    %p85 = scmp.ne.s32.totalorder %s70, %s84
    %p86 = scmp.eq.s32.totalorder %s18, 0
    %p87 = por %p85, %p86
    %s89 = sadd.s32 %s88, 1
    %p92 = scmp.eq.s32.totalorder %s12, 1
    %p93 = scmp.ne.s32.totalorder %s88, %s90
    %p94 = scmp.eq.s32.totalorder %s12, 0
    %p95 = por %p93, %p94
    %p96 = scmp.ne.s32.totalorder %s88, %s90
    %p97 = scmp.eq.s32.totalorder %s17, 1
    %p98 = por %p96, %p97
    %p99 = scmp.ne.s32.totalorder %s90, %s91
    %p100 = scmp.eq.s32.totalorder %s17, 0
    %p101 = por %p99, %p100
    %p102 = scmp.ne.s32.totalorder %s90, %s91
    %p103 = scmp.eq.s32.totalorder %s18, 1
    %p104 = por %p102, %p103
    %p106 = scmp.ne.s32.totalorder %s91, %s105
    %p107 = scmp.eq.s32.totalorder %s18, 0
    %p108 = por %p106, %p107
    %s110 = sadd.s32 %s109, 1
    %p113 = scmp.eq.s32.totalorder %s12, 1
    %p114 = scmp.ne.s32.totalorder %s109, %s111
    %p115 = scmp.eq.s32.totalorder %s12, 0
    %p116 = por %p114, %p115
    %p117 = scmp.ne.s32.totalorder %s109, %s111
    %p118 = scmp.eq.s32.totalorder %s17, 1
    %p119 = por %p117, %p118
    %p120 = scmp.ne.s32.totalorder %s111, %s112
    %p121 = scmp.eq.s32.totalorder %s17, 0
    %p122 = por %p120, %p121
    %p123 = scmp.ne.s32.totalorder %s111, %s112
    %p124 = scmp.eq.s32.totalorder %s18, 1
    %p125 = por %p123, %p124
    %p127 = scmp.ne.s32.totalorder %s112, %s126
    %p128 = scmp.eq.s32.totalorder %s18, 0
    %p129 = por %p127, %p128
    %s131 = sadd.s32 %s130, 1
    %p134 = scmp.eq.s32.totalorder %s12, 1
    %p135 = scmp.ne.s32.totalorder %s130, %s132
    %p136 = scmp.eq.s32.totalorder %s12, 0
    %p137 = por %p135, %p136
    %p138 = scmp.ne.s32.totalorder %s130, %s132
    %p139 = scmp.eq.s32.totalorder %s17, 1
    %p140 = por %p138, %p139
    %p141 = scmp.ne.s32.totalorder %s132, %s133
    %p142 = scmp.eq.s32.totalorder %s17, 0
    %p143 = por %p141, %p142
    %p144 = scmp.ne.s32.totalorder %s132, %s133
    %p145 = scmp.eq.s32.totalorder %s18, 1
    %p146 = por %p144, %p145
    %p148 = scmp.ne.s32.totalorder %s133, %s147
    %p149 = scmp.eq.s32.totalorder %s18, 0
    %p150 = por %p148, %p149
    %s151 = ssub.s32 %s12, %s19
    %p152 = scmp.eq.s32.totalorder %s151, 0
    %s154 = sadd.s32 %s153, 1
    %s155 = scalar_select %p152, %s153, %s154
    %p158 = pneg %p152
    %p159 = scmp.eq.s32.totalorder %s12, 1
    %p160 = por %p158, %p159
    %p161 = scmp.ne.s32.totalorder %s153, %s156
    %p162 = scmp.eq.s32.totalorder %s12, 0
    %p163 = por %p161, %p162
    %p164 = scmp.ne.s32.totalorder %s153, %s156
    %p165 = scmp.eq.s32.totalorder %s17, 1
    %p166 = por %p164, %p165
    %p167 = scmp.ne.s32.totalorder %s156, %s157
    %p168 = scmp.eq.s32.totalorder %s17, 0
    %p169 = por %p167, %p168
    %p170 = scmp.ne.s32.totalorder %s156, %s157
    %p171 = scmp.eq.s32.totalorder %s18, 1
    %p172 = por %p170, %p171
    %p174 = scmp.ne.s32.totalorder %s157, %s173
    %p175 = scmp.eq.s32.totalorder %s18, 0
    %p176 = por %p174, %p175
    %p177 = scmp.le.s32.totalorder 1, %s12
    %p178 = scmp.lt.s32.totalorder %s12, 3
    %p179 = pnand %p177, %p178
    %p180 = pneg %p179
    // Predicated region
    $region9: #{forward.1} parent=5 // pred_check
      _
    $region10: #{forward.1} parent=5 // pred_check_branch
      %182 = sbr.rel (%p179) target = $region12
    $region11: #{forward.1} parent=5 // pred_region
      %s183 = ssub.s32 %s12, 1
      // Predicated region
      $region13: #{forward.1} parent=11 // pred_check
        %p184 = pneg %p59
      $region14: #{forward.1} parent=11 // pred_check_branch
        %186 = sbr.rel (%p184) target = $region16
      $region15: #{forward.1} parent=11 // pred_region
        _
      $region16: #{forward.1} parent=11 // pred_fallthru
        _
      // Predicated region
      $region17: #{forward.1} parent=11 // pred_check
        %p187 = pneg %p80
      $region18: #{forward.1} parent=11 // pred_check_branch
        %189 = sbr.rel (%p187) target = $region20
      $region19: #{forward.1} parent=11 // pred_region
        _
      $region20: #{forward.1} parent=11 // pred_fallthru
        _
      // Predicated region
      $region21: #{forward.1} parent=11 // pred_check
        %p190 = pneg %p101
      $region22: #{forward.1} parent=11 // pred_check_branch
        %192 = sbr.rel (%p190) target = $region24
      $region23: #{forward.1} parent=11 // pred_region
        _
      $region24: #{forward.1} parent=11 // pred_fallthru
        _
      // Predicated region
      $region25: #{forward.1} parent=11 // pred_check
        %p193 = pneg %p122
      $region26: #{forward.1} parent=11 // pred_check_branch
        %195 = sbr.rel (%p193) target = $region28
      $region27: #{forward.1} parent=11 // pred_region
        _
      $region28: #{forward.1} parent=11 // pred_fallthru
        _
      // Predicated region
      $region29: #{forward.1} parent=11 // pred_check
        %p196 = pneg %p143
      $region30: #{forward.1} parent=11 // pred_check_branch
        %198 = sbr.rel (%p196) target = $region32
      $region31: #{forward.1} parent=11 // pred_region
        _
      $region32: #{forward.1} parent=11 // pred_fallthru
        _
    $region12: #{forward.1} parent=5 // pred_fallthru
      _
    %p199 = scmp.lt.s32.totalorder %s12, 2
    // Predicated region
    $region33: #{forward.1} parent=5 // pred_check
      %p200 = pneg %p199
    $region34: #{forward.1} parent=5 // pred_check_branch
      %202 = sbr.rel (%p200) target = $region36
    $region35: #{forward.1} parent=5 // pred_region
      // Predicated region
      $region37: #{forward.1} parent=35 // pred_check
        %p203 = pneg %p32
      $region38: #{forward.1} parent=35 // pred_check_branch
        %205 = sbr.rel (%p203) target = $region40
      $region39: #{forward.1} parent=35 // pred_region
        %p206 = scmp.lt.s32.totalorder %s12, 1
        %s207 = scalar_select %p206, %s12, 1
        %s208 = smul.addr %s207, 2
        %s209 = smul.addr %s208, 4
        %s210 = scalar_lea.vmem %s0, %s209
      $region40: #{forward.1} parent=35 // pred_fallthru
        _
    $region36: #{forward.1} parent=5 // pred_fallthru
      _
    %p211 = scmp.le.s32.totalorder 1, %s12
    %p212 = scmp.lt.s32.totalorder %s12, 3
    %p213 = pnand %p211, %p212
    %p214 = pneg %p213
    // Predicated region
    $region41: #{forward.1} parent=5 // pred_check
      _
    $region42: #{forward.1} parent=5 // pred_check_branch
      %216 = sbr.rel (%p213) target = $region44
    $region43: #{forward.1} parent=5 // pred_region
      %s217 = ssub.s32 %s12, 1
      %p218 = scmp.lt.s32.totalorder %s17, 1
      %s219 = scalar_select %p218, %s17, 1
      %s220 = smul.addr %s219, 2
      %s221 = smul.addr %s220, 4
      %s222 = scalar_lea.vmem %s0, %s221
      %p223 = pneg %p38
      %p224 = pneg %p35
      %p225 = pneg %p59
      %p226 = pneg %p56
      %p227 = pneg %p80
      %p228 = pneg %p77
      %p229 = pneg %p101
      %p230 = pneg %p98
      %p231 = pneg %p122
      %p232 = pneg %p119
      %p233 = pneg %p143
      %p234 = pneg %p140
      %p235 = pneg %p169
      %p236 = pneg %p166
      %p237 = scmp.lt.s32.totalorder %s17, 1
      %s238 = scalar_select %p237, %s17, 1
      %s239 = smul.addr %s238, 6
      %s240 = smul.addr %s239, 8
      %s241 = scalar_lea.vmem %s6, %s240
      %p242 = scmp.lt.s32.totalorder %s17, 1
      %s243 = scalar_select %p242, %s17, 1
      %s244 = smul.addr %s243, 2
      %s245 = smul.addr %s244, 4
      %s246 = scalar_lea.vmem %s0, %s245
      %p247 = scmp.lt.s32.totalorder %s17, 1
      %s248 = scalar_select %p247, %s17, 1
      %s249 = smul.addr %s248, 6
      %s250 = smul.addr %s249, 8
      %s251 = scalar_lea.vmem %s6, %s250
      %v252 = vld [vmem:[%s246] sm:$0xff]
      %v253 = vld [vmem:[%s1] sm:$0xff]
      %v254 = vld [vmem:[%s1 + $0x8] sm:$0xff]
      %v255 = vld [vmem:[%s2] sm:$0xff]
      %v256 = vld [vmem:[%s2 + $0x8] sm:$0xff]
      %258 = vset.pattern.permute.xlu0 0
      %259 = vperm.xlu0 %258, %v255
      %v260 = vpop.permute.xlu0 %259
      %263 = vset.pattern.permute.xlu0 0
      %264 = vperm.xlu0 %263, %v256
      %v265 = vpop.permute.xlu0 %264
      %v268 = vcombine.high %v252, %v252
      %vm269 = vcmask 31744
      %v271 = vsel %vm269, %v253, 0
      %v274 = vsel %vm269, %v254, 0
      %vm276 = vcmask 1043456
      %v277 = vsel %vm276, %v252, 0
      %v279 = vsel %vm276, %v268, 0
      %281 = vmatprep.subr.mxu0 %v279
      %282 = vmatpush1.msra.mxu0 %v277
      %283 = vmatprep.subr.mxu0 0.0
      %284 = vmatpush1.msra.mxu0 0.0
      %285 = vmatprep.subr.mxu0 0.0
      %286 = vmatpush1.msra.mxu0 0.0
      %287 = vmatprep.subr.mxu0 0.0
      %288 = vmatpush1.msra.mxu0 0.0
      %289 = vmatprep.subr.mxu0 0.0
      %290 = vmatpush1.msra.mxu0 0.0
      %291 = vmatprep.subr.mxu0 0.0
      %292 = vmatpush1.msra.mxu0 0.0
      %293 = vmatprep.subr.mxu0 0.0
      %294 = vmatpush1.msra.mxu0 0.0
      %295 = vmatprep.subr.mxu0 0.0
      %296 = vmatpush1.msra.mxu0 0.0
      %297 = vmatprep.subr.mxu0 0.0
      %298 = vmatpush1.msra.mxu0 0.0
      %299 = vmatprep.subr.mxu0 0.0
      %300 = vmatpush1.msra.mxu0 0.0
      %301 = vmatprep.subr.mxu0 0.0
      %302 = vmatpush1.msra.mxu0 0.0
      %303 = vmatprep.subr.mxu0 0.0
      %304 = vmatpush1.msra.mxu0 0.0
      %305 = vmatprep.subr.mxu0 0.0
      %306 = vmatpush1.msra.mxu0 0.0
      %307 = vmatprep.subr.mxu0 0.0
      %308 = vmatpush1.msra.mxu0 0.0
      %309 = vmatprep.subr.mxu0 0.0
      %310 = vmatpush1.msra.mxu0 0.0
      %311 = vmatprep.subr.mxu0 0.0
      %312 = vmatpush1.msra.mxu0 0.0
      %313 = vmatprep.subr.mxu0 0.0
      %314 = vmatpush1.msra.mxu0 0.0
      %315 = vmatprep.subr.mxu0 0.0
      %316 = vmatpush1.msra.mxu0 0.0
      %317 = vmatprep.subr.mxu0 0.0
      %318 = vmatpush1.msra.mxu0 0.0
      %319 = vmatprep.subr.mxu0 0.0
      %320 = vmatpush1.msra.mxu0 0.0
      %321 = vmatprep.subr.mxu0 0.0
      %322 = vmatpush1.msra.mxu0 0.0
      %323 = vmatprep.subr.mxu0 0.0
      %324 = vmatpush1.msra.mxu0 0.0
      %325 = vmatprep.subr.mxu0 0.0
      %326 = vmatpush1.msra.mxu0 0.0
      %327 = vmatprep.subr.mxu0 0.0
      %328 = vmatpush1.msra.mxu0 0.0
      %329 = vmatprep.subr.mxu0 0.0
      %330 = vmatpush1.msra.mxu0 0.0
      %331 = vmatprep.subr.mxu0 0.0
      %332 = vmatpush1.msra.mxu0 0.0
      %333 = vmatprep.subr.mxu0 0.0
      %334 = vmatpush1.msra.mxu0 0.0
      %335 = vmatprep.subr.mxu0 0.0
      %336 = vmatpush1.msra.mxu0 0.0
      %337 = vmatprep.subr.mxu0 0.0
      %338 = vmatpush1.msra.mxu0 0.0
      %339 = vmatprep.subr.mxu0 0.0
      %340 = vmatpush1.msra.mxu0 0.0
      %341 = vmatprep.subr.mxu0 0.0
      %342 = vmatpush1.msra.mxu0 0.0
      %343 = vmatprep.subr.mxu0 0.0
      %344 = vmatpush1.msra.mxu0 0.0
      %345 = vmatprep.mubr.f32.mxu0 0.0
      %346 = vmatmul.mubr.f32.gmra.mrb[0].mxu0 %v271
      %v347 = vpop.f32.mrb[0].mxu0
      %v348 = vadd.f32 %v260, %v347
      %v349 = vpop.f32.mrb[0].mxu0
      %v350 = vadd.f32 %v260, %v349
      %351 = vmatprep.mubr.f32.mxu0 0.0
      %352 = vmatmul.mubr.f32.gmra.mrb[0].mxu0 %v274
      %v353 = vpop.f32.mrb[0].mxu0
      %v354 = vadd.f32 %v265, %v353
      %v355 = vpop.f32.mrb[0].mxu0
      %v356 = vadd.f32 %v265, %v355
      %357 = vdwg.mxu0
      %v358 = vmax.f32 %v348, 0.0
      %v359 = vmax.f32 %v350, 0.0
      %v360 = vmax.f32 %v354, 0.0
      %v361 = vmax.f32 %v356, 0.0
      %362 = vrot.lane.b32.xlu0 %v358, 34
      %v363 = vpop.permute.xlu0 %362
      %364 = vrot.lane.b32.xlu0 %v360, 34
      %v365 = vpop.permute.xlu0 %364
      %366 = vrot.lane.b32.xlu0 %v359, 34
      %v367 = vpop.permute.xlu0 %366
      %368 = vrot.lane.b32.xlu0 %v361, 34
      %v369 = vpop.permute.xlu0 %368
      %v370 = vlaneseq
      %v371 = vand.u32 %v370, 127
      %vm372 = vcmp.lt.s32.totalorder %v371, 34
      %v373 = vsel %vm372, %v363, %v367
      %v374 = vsel %vm372, %v365, %v369
      %v375 = vsel %vm372, %v367, %v363
      %v376 = vsel %vm372, %v369, %v365
      %v377 = vld [vmem:[%s5] sm:$0x3]
      %v379 = vlaneseq
      %v380 = vshrl.u32 %v379, 7
      %v381 = vsub.s32 0, %v380
      %v382 = vrot.slane %v377, %v381
      %v383 = vlaneseq
      %v384 = vshrl.u32 %v383, 7
      %v385 = vsub.s32 1, %v384
      %v386 = vrot.slane %v377, %v385
      %v389 = vmul.f32 %v375, %v382
      %v390 = vmul.f32 %v373, %v386
      %v391 = vmul.f32 %v376, %v382
      %v392 = vmul.f32 %v374, %v386
      %v393 = vld [vmem:[%s3] sm:$0xff]
      %v394 = vld [vmem:[%s3 + $0x8] sm:$0xff]
      %v395 = vld [vmem:[%s3 + $0x10] sm:$0xf]
      %396 = vrot.lane.b32.xlu0 %v358, 33
      %v397 = vpop.permute.xlu0 %396
      %398 = vrot.lane.b32.xlu0 %v360, 33
      %v399 = vpop.permute.xlu0 %398
      %400 = vrot.lane.b32.xlu0 %v359, 33
      %v401 = vpop.permute.xlu0 %400
      %402 = vrot.lane.b32.xlu0 %v361, 33
      %v403 = vpop.permute.xlu0 %402
      %vm404 = vcmp.lt.s32.totalorder %v371, 33
      %v405 = vsel %vm404, %v397, %v401
      %v406 = vsel %vm404, %v399, %v403
      %v407 = vsel %vm404, %v401, %v397
      %v408 = vsel %vm404, %v403, %v399
      %s409 = scalar_lea.vmem %s5, 2
      %v410 = vld [vmem:[%s409] sm:$0x3]
      %v412 = vlaneseq
      %v413 = vshrl.u32 %v412, 7
      %v414 = vsub.s32 0, %v413
      %v415 = vrot.slane %v410, %v414
      %v416 = vlaneseq
      %v417 = vshrl.u32 %v416, 7
      %v418 = vsub.s32 1, %v417
      %v419 = vrot.slane %v410, %v418
      %v422 = vmul.f32 %v407, %v415
      %v423 = vmul.f32 %v405, %v419
      %v424 = vmul.f32 %v408, %v415
      %v425 = vmul.f32 %v406, %v419
      %s426 = scalar_lea.vmem %s3, 24
      %v427 = vld [vmem:[%s426] sm:$0xff]
      %v428 = vld [vmem:[%s426 + $0x8] sm:$0xff]
      %v429 = vld [vmem:[%s426 + $0x10] sm:$0xf]
      %vm430 = vcmask 130048
      %v432 = vsel %vm430, %v427, 0
      %v435 = vsel %vm430, %v428, 0
      %v438 = vsel %vm430, %v429, 0
      %440 = vmatprep.subr.mxu0 %v423
      %441 = vmatpush1.msra.mxu0 %v422
      %442 = vmatprep.subr.mxu0 %v425
      %443 = vmatpush1.msra.mxu0 %v424
      %444 = vmatprep.subr.mxu0 0.0
      %445 = vmatpush1.msra.mxu0 0.0
      %446 = vmatprep.subr.mxu0 0.0
      %447 = vmatpush1.msra.mxu0 0.0
      %448 = vmatprep.subr.mxu0 0.0
      %449 = vmatpush1.msra.mxu0 0.0
      %450 = vmatprep.subr.mxu0 0.0
      %451 = vmatpush1.msra.mxu0 0.0
      %452 = vmatprep.subr.mxu0 0.0
      %453 = vmatpush1.msra.mxu0 0.0
      %454 = vmatprep.subr.mxu0 0.0
      %455 = vmatpush1.msra.mxu0 0.0
      %456 = vmatprep.subr.mxu0 0.0
      %457 = vmatpush1.msra.mxu0 0.0
      %458 = vmatprep.subr.mxu0 0.0
      %459 = vmatpush1.msra.mxu0 0.0
      %460 = vmatprep.subr.mxu0 0.0
      %461 = vmatpush1.msra.mxu0 0.0
      %462 = vmatprep.subr.mxu0 0.0
      %463 = vmatpush1.msra.mxu0 0.0
      %464 = vmatprep.subr.mxu0 0.0
      %465 = vmatpush1.msra.mxu0 0.0
      %466 = vmatprep.subr.mxu0 0.0
      %467 = vmatpush1.msra.mxu0 0.0
      %468 = vmatprep.subr.mxu0 0.0
      %469 = vmatpush1.msra.mxu0 0.0
      %470 = vmatprep.subr.mxu0 0.0
      %471 = vmatpush1.msra.mxu0 0.0
      %472 = vmatprep.subr.mxu0 0.0
      %473 = vmatpush1.msra.mxu0 0.0
      %474 = vmatprep.subr.mxu0 0.0
      %475 = vmatpush1.msra.mxu0 0.0
      %476 = vmatprep.subr.mxu0 0.0
      %477 = vmatpush1.msra.mxu0 0.0
      %478 = vmatprep.subr.mxu0 0.0
      %479 = vmatpush1.msra.mxu0 0.0
      %480 = vmatprep.subr.mxu0 0.0
      %481 = vmatpush1.msra.mxu0 0.0
      %482 = vmatprep.subr.mxu0 0.0
      %483 = vmatpush1.msra.mxu0 0.0
      %484 = vmatprep.subr.mxu0 0.0
      %485 = vmatpush1.msra.mxu0 0.0
      %486 = vmatprep.subr.mxu0 0.0
      %487 = vmatpush1.msra.mxu0 0.0
      %488 = vmatprep.subr.mxu0 0.0
      %489 = vmatpush1.msra.mxu0 0.0
      %490 = vmatprep.subr.mxu0 0.0
      %491 = vmatpush1.msra.mxu0 0.0
      %492 = vmatprep.subr.mxu0 0.0
      %493 = vmatpush1.msra.mxu0 0.0
      %494 = vmatprep.subr.mxu0 0.0
      %495 = vmatpush1.msra.mxu0 0.0
      %496 = vmatprep.subr.mxu0 0.0
      %497 = vmatpush1.msra.mxu0 0.0
      %498 = vmatprep.subr.mxu0 0.0
      %499 = vmatpush1.msra.mxu0 0.0
      %500 = vmatprep.subr.mxu0 0.0
      %501 = vmatpush1.msra.mxu0 0.0
      %502 = vmatprep.subr.mxu0 0.0
      %503 = vmatpush1.msra.mxu0 0.0
      %504 = vmatprep.mubr.f32.mxu0 0.0
      %505 = vmatmul.mubr.f32.gmra.mrb[0].mxu0 %v432
      %v506 = vpop.f32.mrb[0].mxu0
      %v507 = vadd.f32 0.0, %v506
      %v508 = vpop.f32.mrb[0].mxu0
      %v509 = vadd.f32 0.0, %v508
      %510 = vmatprep.mubr.f32.mxu0 0.0
      %511 = vmatmul.mubr.f32.gmra.mrb[0].mxu0 %v435
      %v512 = vpop.f32.mrb[0].mxu0
      %v513 = vadd.f32 0.0, %v512
      %v514 = vpop.f32.mrb[0].mxu0
      %v515 = vadd.f32 0.0, %v514
      %516 = vmatprep.mubr.f32.mxu0 0.0
      %517 = vmatmul.mubr.f32.gmra.mrb[0].mxu0 %v438
      %v518 = vpop.f32.mrb[0].mxu0
      %v519 = vadd.f32 0.0, %v518
      %v520 = vpop.f32.mrb[0].mxu0
      %v521 = vadd.f32 0.0, %v520
      %522 = vdwg.mxu0
      %v524 = vsel %vm430, %v393, 0
      %v527 = vsel %vm430, %v394, 0
      %v530 = vsel %vm430, %v395, 0
      %532 = vmatprep.subr.mxu0 %v390
      %533 = vmatpush1.msra.mxu0 %v389
      %534 = vmatprep.subr.mxu0 %v392
      %535 = vmatpush1.msra.mxu0 %v391
      %536 = vmatprep.subr.mxu0 0.0
      %537 = vmatpush1.msra.mxu0 0.0
      %538 = vmatprep.subr.mxu0 0.0
      %539 = vmatpush1.msra.mxu0 0.0
      %540 = vmatprep.subr.mxu0 0.0
      %541 = vmatpush1.msra.mxu0 0.0
      %542 = vmatprep.subr.mxu0 0.0
      %543 = vmatpush1.msra.mxu0 0.0
      %544 = vmatprep.subr.mxu0 0.0
      %545 = vmatpush1.msra.mxu0 0.0
      %546 = vmatprep.subr.mxu0 0.0
      %547 = vmatpush1.msra.mxu0 0.0
      %548 = vmatprep.subr.mxu0 0.0
      %549 = vmatpush1.msra.mxu0 0.0
      %550 = vmatprep.subr.mxu0 0.0
      %551 = vmatpush1.msra.mxu0 0.0
      %552 = vmatprep.subr.mxu0 0.0
      %553 = vmatpush1.msra.mxu0 0.0
      %554 = vmatprep.subr.mxu0 0.0
      %555 = vmatpush1.msra.mxu0 0.0
      %556 = vmatprep.subr.mxu0 0.0
      %557 = vmatpush1.msra.mxu0 0.0
      %558 = vmatprep.subr.mxu0 0.0
      %559 = vmatpush1.msra.mxu0 0.0
      %560 = vmatprep.subr.mxu0 0.0
      %561 = vmatpush1.msra.mxu0 0.0
      %562 = vmatprep.subr.mxu0 0.0
      %563 = vmatpush1.msra.mxu0 0.0
      %564 = vmatprep.subr.mxu0 0.0
      %565 = vmatpush1.msra.mxu0 0.0
      %566 = vmatprep.subr.mxu0 0.0
      %567 = vmatpush1.msra.mxu0 0.0
      %568 = vmatprep.subr.mxu0 0.0
      %569 = vmatpush1.msra.mxu0 0.0
      %570 = vmatprep.subr.mxu0 0.0
      %571 = vmatpush1.msra.mxu0 0.0
      %572 = vmatprep.subr.mxu0 0.0
      %573 = vmatpush1.msra.mxu0 0.0
      %574 = vmatprep.subr.mxu0 0.0
      %575 = vmatpush1.msra.mxu0 0.0
      %576 = vmatprep.subr.mxu0 0.0
      %577 = vmatpush1.msra.mxu0 0.0
      %578 = vmatprep.subr.mxu0 0.0
      %579 = vmatpush1.msra.mxu0 0.0
      %580 = vmatprep.subr.mxu0 0.0
      %581 = vmatpush1.msra.mxu0 0.0
      %582 = vmatprep.subr.mxu0 0.0
      %583 = vmatpush1.msra.mxu0 0.0
      %584 = vmatprep.subr.mxu0 0.0
      %585 = vmatpush1.msra.mxu0 0.0
      %586 = vmatprep.subr.mxu0 0.0
      %587 = vmatpush1.msra.mxu0 0.0
      %588 = vmatprep.subr.mxu0 0.0
      %589 = vmatpush1.msra.mxu0 0.0
      %590 = vmatprep.subr.mxu0 0.0
      %591 = vmatpush1.msra.mxu0 0.0
      %592 = vmatprep.subr.mxu0 0.0
      %593 = vmatpush1.msra.mxu0 0.0
      %594 = vmatprep.subr.mxu0 0.0
      %595 = vmatpush1.msra.mxu0 0.0
      %596 = vmatprep.mubr.f32.mxu0 0.0
      %597 = vmatmul.mubr.f32.gmra.mrb[0].mxu0 %v524
      %v598 = vpop.f32.mrb[0].mxu0
      %v599 = vadd.f32 %v507, %v598
      %v600 = vpop.f32.mrb[0].mxu0
      %v601 = vadd.f32 %v509, %v600
      %602 = vmatprep.mubr.f32.mxu0 0.0
      %603 = vmatmul.mubr.f32.gmra.mrb[0].mxu0 %v527
      %v604 = vpop.f32.mrb[0].mxu0
      %v605 = vadd.f32 %v513, %v604
      %v606 = vpop.f32.mrb[0].mxu0
      %v607 = vadd.f32 %v515, %v606
      %608 = vmatprep.mubr.f32.mxu0 0.0
      %609 = vmatmul.mubr.f32.gmra.mrb[0].mxu0 %v530
      %v610 = vpop.f32.mrb[0].mxu0
      %v611 = vadd.f32 %v519, %v610
      %v612 = vpop.f32.mrb[0].mxu0
      %v613 = vadd.f32 %v521, %v612
      %614 = vdwg.mxu0
      %615 = vrot.lane.b32.xlu0 %v358, 32
      %v616 = vpop.permute.xlu0 %615
      %617 = vrot.lane.b32.xlu0 %v360, 32
      %v618 = vpop.permute.xlu0 %617
      %619 = vrot.lane.b32.xlu0 %v359, 32
      %v620 = vpop.permute.xlu0 %619
      %621 = vrot.lane.b32.xlu0 %v361, 32
      %v622 = vpop.permute.xlu0 %621
      %vm623 = vcmp.lt.s32.totalorder %v371, 32
      %v624 = vsel %vm623, %v616, %v620
      %v625 = vsel %vm623, %v618, %v622
      %v626 = vsel %vm623, %v620, %v616
      %v627 = vsel %vm623, %v622, %v618
      %s628 = scalar_lea.vmem %s5, 4
      %v629 = vld [vmem:[%s628] sm:$0x3]
      %v631 = vlaneseq
      %v632 = vshrl.u32 %v631, 7
      %v633 = vsub.s32 0, %v632
      %v634 = vrot.slane %v629, %v633
      %v635 = vlaneseq
      %v636 = vshrl.u32 %v635, 7
      %v637 = vsub.s32 1, %v636
      %v638 = vrot.slane %v629, %v637
      %v641 = vmul.f32 %v626, %v634
      %v642 = vmul.f32 %v624, %v638
      %v643 = vmul.f32 %v627, %v634
      %v644 = vmul.f32 %v625, %v638
      %s645 = scalar_lea.vmem %s3, 48
      %v646 = vld [vmem:[%s645] sm:$0xff]
      %v647 = vld [vmem:[%s645 + $0x8] sm:$0xff]
      %v648 = vld [vmem:[%s645 + $0x10] sm:$0xf]
      %v650 = vsel %vm430, %v646, 0
      %v653 = vsel %vm430, %v647, 0
      %v656 = vsel %vm430, %v648, 0
      %658 = vmatprep.subr.mxu0 %v642
      %659 = vmatpush1.msra.mxu0 %v641
      %660 = vmatprep.subr.mxu0 %v644
      %661 = vmatpush1.msra.mxu0 %v643
      %662 = vmatprep.subr.mxu0 0.0
      %663 = vmatpush1.msra.mxu0 0.0
      %664 = vmatprep.subr.mxu0 0.0
      %665 = vmatpush1.msra.mxu0 0.0
      %666 = vmatprep.subr.mxu0 0.0
      %667 = vmatpush1.msra.mxu0 0.0
      %668 = vmatprep.subr.mxu0 0.0
      %669 = vmatpush1.msra.mxu0 0.0
      %670 = vmatprep.subr.mxu0 0.0
      %671 = vmatpush1.msra.mxu0 0.0
      %672 = vmatprep.subr.mxu0 0.0
      %673 = vmatpush1.msra.mxu0 0.0
      %674 = vmatprep.subr.mxu0 0.0
      %675 = vmatpush1.msra.mxu0 0.0
      %676 = vmatprep.subr.mxu0 0.0
      %677 = vmatpush1.msra.mxu0 0.0
      %678 = vmatprep.subr.mxu0 0.0
      %679 = vmatpush1.msra.mxu0 0.0
      %680 = vmatprep.subr.mxu0 0.0
      %681 = vmatpush1.msra.mxu0 0.0
      %682 = vmatprep.subr.mxu0 0.0
      %683 = vmatpush1.msra.mxu0 0.0
      %684 = vmatprep.subr.mxu0 0.0
      %685 = vmatpush1.msra.mxu0 0.0
      %686 = vmatprep.subr.mxu0 0.0
      %687 = vmatpush1.msra.mxu0 0.0
      %688 = vmatprep.subr.mxu0 0.0
      %689 = vmatpush1.msra.mxu0 0.0
      %690 = vmatprep.subr.mxu0 0.0
      %691 = vmatpush1.msra.mxu0 0.0
      %692 = vmatprep.subr.mxu0 0.0
      %693 = vmatpush1.msra.mxu0 0.0
      %694 = vmatprep.subr.mxu0 0.0
      %695 = vmatpush1.msra.mxu0 0.0
      %696 = vmatprep.subr.mxu0 0.0
      %697 = vmatpush1.msra.mxu0 0.0
      %698 = vmatprep.subr.mxu0 0.0
      %699 = vmatpush1.msra.mxu0 0.0
      %700 = vmatprep.subr.mxu0 0.0
      %701 = vmatpush1.msra.mxu0 0.0
      %702 = vmatprep.subr.mxu0 0.0
      %703 = vmatpush1.msra.mxu0 0.0
      %704 = vmatprep.subr.mxu0 0.0
      %705 = vmatpush1.msra.mxu0 0.0
      %706 = vmatprep.subr.mxu0 0.0
      %707 = vmatpush1.msra.mxu0 0.0
      %708 = vmatprep.subr.mxu0 0.0
      %709 = vmatpush1.msra.mxu0 0.0
      %710 = vmatprep.subr.mxu0 0.0
      %711 = vmatpush1.msra.mxu0 0.0
      %712 = vmatprep.subr.mxu0 0.0
      %713 = vmatpush1.msra.mxu0 0.0
      %714 = vmatprep.subr.mxu0 0.0
      %715 = vmatpush1.msra.mxu0 0.0
      %716 = vmatprep.subr.mxu0 0.0
      %717 = vmatpush1.msra.mxu0 0.0
      %718 = vmatprep.subr.mxu0 0.0
      %719 = vmatpush1.msra.mxu0 0.0
      %720 = vmatprep.subr.mxu0 0.0
      %721 = vmatpush1.msra.mxu0 0.0
      %722 = vmatprep.mubr.f32.mxu0 0.0
      %723 = vmatmul.mubr.f32.gmra.mrb[0].mxu0 %v650
      %v724 = vpop.f32.mrb[0].mxu0
      %v725 = vadd.f32 0.0, %v724
      %v726 = vpop.f32.mrb[0].mxu0
      %v727 = vadd.f32 0.0, %v726
      %728 = vmatprep.mubr.f32.mxu0 0.0
      %729 = vmatmul.mubr.f32.gmra.mrb[0].mxu0 %v653
      %v730 = vpop.f32.mrb[0].mxu0
      %v731 = vadd.f32 0.0, %v730
      %v732 = vpop.f32.mrb[0].mxu0
      %v733 = vadd.f32 0.0, %v732
      %734 = vmatprep.mubr.f32.mxu0 0.0
      %735 = vmatmul.mubr.f32.gmra.mrb[0].mxu0 %v656
      %v736 = vpop.f32.mrb[0].mxu0
      %v737 = vadd.f32 0.0, %v736
      %v738 = vpop.f32.mrb[0].mxu0
      %v739 = vadd.f32 0.0, %v738
      %740 = vdwg.mxu0
      %v741 = vadd.f32 %v599, %v725
      %v742 = vadd.f32 %v601, %v727
      %v743 = vadd.f32 %v605, %v731
      %v744 = vadd.f32 %v607, %v733
      %v745 = vadd.f32 %v611, %v737
      %v746 = vadd.f32 %v613, %v739
      %747 = vrot.lane.b32.xlu0 %v358, 31
      %v748 = vpop.permute.xlu0 %747
      %749 = vrot.lane.b32.xlu0 %v360, 31
      %v750 = vpop.permute.xlu0 %749
      %751 = vrot.lane.b32.xlu0 %v359, 31
      %v752 = vpop.permute.xlu0 %751
      %753 = vrot.lane.b32.xlu0 %v361, 31
      %v754 = vpop.permute.xlu0 %753
      %vm755 = vcmp.lt.s32.totalorder %v371, 31
      %v756 = vsel %vm755, %v748, %v752
      %v757 = vsel %vm755, %v750, %v754
      %v758 = vsel %vm755, %v752, %v748
      %v759 = vsel %vm755, %v754, %v750
      %s760 = scalar_lea.vmem %s5, 6
      %v761 = vld [vmem:[%s760] sm:$0x3]
      %v763 = vlaneseq
      %v764 = vshrl.u32 %v763, 7
      %v765 = vsub.s32 0, %v764
      %v766 = vrot.slane %v761, %v765
      %v767 = vlaneseq
      %v768 = vshrl.u32 %v767, 7
      %v769 = vsub.s32 1, %v768
      %v770 = vrot.slane %v761, %v769
      %v773 = vmul.f32 %v758, %v766
      %v774 = vmul.f32 %v756, %v770
      %v775 = vmul.f32 %v759, %v766
      %v776 = vmul.f32 %v757, %v770
      %s777 = scalar_lea.vmem %s3, 72
      %v778 = vld [vmem:[%s777] sm:$0xff]
      %v779 = vld [vmem:[%s777 + $0x8] sm:$0xff]
      %v780 = vld [vmem:[%s777 + $0x10] sm:$0xf]
      %v782 = vsel %vm430, %v778, 0
      %v785 = vsel %vm430, %v779, 0
      %v788 = vsel %vm430, %v780, 0
      %790 = vmatprep.subr.mxu0 %v774
      %791 = vmatpush1.msra.mxu0 %v773
      %792 = vmatprep.subr.mxu0 %v776
      %793 = vmatpush1.msra.mxu0 %v775
      %794 = vmatprep.subr.mxu0 0.0
      %795 = vmatpush1.msra.mxu0 0.0
      %796 = vmatprep.subr.mxu0 0.0
      %797 = vmatpush1.msra.mxu0 0.0
      %798 = vmatprep.subr.mxu0 0.0
      %799 = vmatpush1.msra.mxu0 0.0
      %800 = vmatprep.subr.mxu0 0.0
      %801 = vmatpush1.msra.mxu0 0.0
      %802 = vmatprep.subr.mxu0 0.0
      %803 = vmatpush1.msra.mxu0 0.0
      %804 = vmatprep.subr.mxu0 0.0
      %805 = vmatpush1.msra.mxu0 0.0
      %806 = vmatprep.subr.mxu0 0.0
      %807 = vmatpush1.msra.mxu0 0.0
      %808 = vmatprep.subr.mxu0 0.0
      %809 = vmatpush1.msra.mxu0 0.0
      %810 = vmatprep.subr.mxu0 0.0
      %811 = vmatpush1.msra.mxu0 0.0
      %812 = vmatprep.subr.mxu0 0.0
      %813 = vmatpush1.msra.mxu0 0.0
      %814 = vmatprep.subr.mxu0 0.0
      %815 = vmatpush1.msra.mxu0 0.0
      %816 = vmatprep.subr.mxu0 0.0
      %817 = vmatpush1.msra.mxu0 0.0
      %818 = vmatprep.subr.mxu0 0.0
      %819 = vmatpush1.msra.mxu0 0.0
      %820 = vmatprep.subr.mxu0 0.0
      %821 = vmatpush1.msra.mxu0 0.0
      %822 = vmatprep.subr.mxu0 0.0
      %823 = vmatpush1.msra.mxu0 0.0
      %824 = vmatprep.subr.mxu0 0.0
      %825 = vmatpush1.msra.mxu0 0.0
      %826 = vmatprep.subr.mxu0 0.0
      %827 = vmatpush1.msra.mxu0 0.0
      %828 = vmatprep.subr.mxu0 0.0
      %829 = vmatpush1.msra.mxu0 0.0
      %830 = vmatprep.subr.mxu0 0.0
      %831 = vmatpush1.msra.mxu0 0.0
      %832 = vmatprep.subr.mxu0 0.0
      %833 = vmatpush1.msra.mxu0 0.0
      %834 = vmatprep.subr.mxu0 0.0
      %835 = vmatpush1.msra.mxu0 0.0
      %836 = vmatprep.subr.mxu0 0.0
      %837 = vmatpush1.msra.mxu0 0.0
      %838 = vmatprep.subr.mxu0 0.0
      %839 = vmatpush1.msra.mxu0 0.0
      %840 = vmatprep.subr.mxu0 0.0
      %841 = vmatpush1.msra.mxu0 0.0
      %842 = vmatprep.subr.mxu0 0.0
      %843 = vmatpush1.msra.mxu0 0.0
      %844 = vmatprep.subr.mxu0 0.0
      %845 = vmatpush1.msra.mxu0 0.0
      %846 = vmatprep.subr.mxu0 0.0
      %847 = vmatpush1.msra.mxu0 0.0
      %848 = vmatprep.subr.mxu0 0.0
      %849 = vmatpush1.msra.mxu0 0.0
      %850 = vmatprep.subr.mxu0 0.0
      %851 = vmatpush1.msra.mxu0 0.0
      %852 = vmatprep.subr.mxu0 0.0
      %853 = vmatpush1.msra.mxu0 0.0
      %854 = vmatprep.mubr.f32.mxu0 0.0
      %855 = vmatmul.mubr.f32.gmra.mrb[0].mxu0 %v782
      %v856 = vpop.f32.mrb[0].mxu0
      %v857 = vadd.f32 0.0, %v856
      %v858 = vpop.f32.mrb[0].mxu0
      %v859 = vadd.f32 0.0, %v858
      %860 = vmatprep.mubr.f32.mxu0 0.0
      %861 = vmatmul.mubr.f32.gmra.mrb[0].mxu0 %v785
      %v862 = vpop.f32.mrb[0].mxu0
      %v863 = vadd.f32 0.0, %v862
      %v864 = vpop.f32.mrb[0].mxu0
      %v865 = vadd.f32 0.0, %v864
      %866 = vmatprep.mubr.f32.mxu0 0.0
      %867 = vmatmul.mubr.f32.gmra.mrb[0].mxu0 %v788
      %v868 = vpop.f32.mrb[0].mxu0
      %v869 = vadd.f32 0.0, %v868
      %v870 = vpop.f32.mrb[0].mxu0
      %v871 = vadd.f32 0.0, %v870
      %872 = vdwg.mxu0
      %v873 = vadd.f32 %v741, %v857
      %v874 = vadd.f32 %v742, %v859
      %v875 = vadd.f32 %v743, %v863
      %v876 = vadd.f32 %v744, %v865
      %v877 = vadd.f32 %v745, %v869
      %v878 = vadd.f32 %v746, %v871
      %879 = vrot.lane.b32.xlu0 %v358, 30
      %v880 = vpop.permute.xlu0 %879
      %881 = vrot.lane.b32.xlu0 %v360, 30
      %v882 = vpop.permute.xlu0 %881
      %883 = vrot.lane.b32.xlu0 %v359, 30
      %v884 = vpop.permute.xlu0 %883
      %885 = vrot.lane.b32.xlu0 %v361, 30
      %v886 = vpop.permute.xlu0 %885
      %vm887 = vcmp.lt.s32.totalorder %v371, 30
      %v888 = vsel %vm887, %v880, %v884
      %v889 = vsel %vm887, %v882, %v886
      %v890 = vsel %vm887, %v884, %v880
      %v891 = vsel %vm887, %v886, %v882
      %s892 = scalar_lea.vmem %s5, 8
      %v893 = vld [vmem:[%s892] sm:$0x3]
      %v895 = vlaneseq
      %v896 = vshrl.u32 %v895, 7
      %v897 = vsub.s32 0, %v896
      %v898 = vrot.slane %v893, %v897
      %v899 = vlaneseq
      %v900 = vshrl.u32 %v899, 7
      %v901 = vsub.s32 1, %v900
      %v902 = vrot.slane %v893, %v901
      %v905 = vmul.f32 %v890, %v898
      %v906 = vmul.f32 %v888, %v902
      %v907 = vmul.f32 %v891, %v898
      %v908 = vmul.f32 %v889, %v902
      %s909 = scalar_lea.vmem %s3, 96
      %v910 = vld [vmem:[%s909] sm:$0xff]
      %v911 = vld [vmem:[%s909 + $0x8] sm:$0xff]
      %v912 = vld [vmem:[%s909 + $0x10] sm:$0xf]
      %v914 = vsel %vm430, %v910, 0
      %v917 = vsel %vm430, %v911, 0
      %v920 = vsel %vm430, %v912, 0
      %922 = vmatprep.subr.mxu0 %v906
      %923 = vmatpush1.msra.mxu0 %v905
      %924 = vmatprep.subr.mxu0 %v908
      %925 = vmatpush1.msra.mxu0 %v907
      %926 = vmatprep.subr.mxu0 0.0
      %927 = vmatpush1.msra.mxu0 0.0
      %928 = vmatprep.subr.mxu0 0.0
      %929 = vmatpush1.msra.mxu0 0.0
      %930 = vmatprep.subr.mxu0 0.0
      %931 = vmatpush1.msra.mxu0 0.0
      %932 = vmatprep.subr.mxu0 0.0
      %933 = vmatpush1.msra.mxu0 0.0
      %934 = vmatprep.subr.mxu0 0.0
      %935 = vmatpush1.msra.mxu0 0.0
      %936 = vmatprep.subr.mxu0 0.0
      %937 = vmatpush1.msra.mxu0 0.0
      %938 = vmatprep.subr.mxu0 0.0
      %939 = vmatpush1.msra.mxu0 0.0
      %940 = vmatprep.subr.mxu0 0.0
      %941 = vmatpush1.msra.mxu0 0.0
      %942 = vmatprep.subr.mxu0 0.0
      %943 = vmatpush1.msra.mxu0 0.0
      %944 = vmatprep.subr.mxu0 0.0
      %945 = vmatpush1.msra.mxu0 0.0
      %946 = vmatprep.subr.mxu0 0.0
      %947 = vmatpush1.msra.mxu0 0.0
      %948 = vmatprep.subr.mxu0 0.0
      %949 = vmatpush1.msra.mxu0 0.0
      %950 = vmatprep.subr.mxu0 0.0
      %951 = vmatpush1.msra.mxu0 0.0
      %952 = vmatprep.subr.mxu0 0.0
      %953 = vmatpush1.msra.mxu0 0.0
      %954 = vmatprep.subr.mxu0 0.0
      %955 = vmatpush1.msra.mxu0 0.0
      %956 = vmatprep.subr.mxu0 0.0
      %957 = vmatpush1.msra.mxu0 0.0
      %958 = vmatprep.subr.mxu0 0.0
      %959 = vmatpush1.msra.mxu0 0.0
      %960 = vmatprep.subr.mxu0 0.0
      %961 = vmatpush1.msra.mxu0 0.0
      %962 = vmatprep.subr.mxu0 0.0
      %963 = vmatpush1.msra.mxu0 0.0
      %964 = vmatprep.subr.mxu0 0.0
      %965 = vmatpush1.msra.mxu0 0.0
      %966 = vmatprep.subr.mxu0 0.0
      %967 = vmatpush1.msra.mxu0 0.0
      %968 = vmatprep.subr.mxu0 0.0
      %969 = vmatpush1.msra.mxu0 0.0
      %970 = vmatprep.subr.mxu0 0.0
      %971 = vmatpush1.msra.mxu0 0.0
      %972 = vmatprep.subr.mxu0 0.0
      %973 = vmatpush1.msra.mxu0 0.0
      %974 = vmatprep.subr.mxu0 0.0
      %975 = vmatpush1.msra.mxu0 0.0
      %976 = vmatprep.subr.mxu0 0.0
      %977 = vmatpush1.msra.mxu0 0.0
      %978 = vmatprep.subr.mxu0 0.0
      %979 = vmatpush1.msra.mxu0 0.0
      %980 = vmatprep.subr.mxu0 0.0
      %981 = vmatpush1.msra.mxu0 0.0
      %982 = vmatprep.subr.mxu0 0.0
      %983 = vmatpush1.msra.mxu0 0.0
      %984 = vmatprep.subr.mxu0 0.0
      %985 = vmatpush1.msra.mxu0 0.0
      %986 = vmatprep.mubr.f32.mxu0 0.0
      %987 = vmatmul.mubr.f32.gmra.mrb[0].mxu0 %v914
      %v988 = vpop.f32.mrb[0].mxu0
      %v989 = vadd.f32 0.0, %v988
      %v990 = vpop.f32.mrb[0].mxu0
      %v991 = vadd.f32 0.0, %v990
      %992 = vmatprep.mubr.f32.mxu0 0.0
      %993 = vmatmul.mubr.f32.gmra.mrb[0].mxu0 %v917
      %v994 = vpop.f32.mrb[0].mxu0
      %v995 = vadd.f32 0.0, %v994
      %v996 = vpop.f32.mrb[0].mxu0
      %v997 = vadd.f32 0.0, %v996
      %998 = vmatprep.mubr.f32.mxu0 0.0
      %999 = vmatmul.mubr.f32.gmra.mrb[0].mxu0 %v920
      %v1000 = vpop.f32.mrb[0].mxu0
      %v1001 = vadd.f32 0.0, %v1000
      %v1002 = vpop.f32.mrb[0].mxu0
      %v1003 = vadd.f32 0.0, %v1002
      %1004 = vdwg.mxu0
      %v1005 = vadd.f32 %v873, %v989
      %v1006 = vadd.f32 %v874, %v991
      %v1007 = vadd.f32 %v875, %v995
      %v1008 = vadd.f32 %v876, %v997
      %v1009 = vadd.f32 %v877, %v1001
      %v1010 = vadd.f32 %v878, %v1003
      %1011 = vrot.lane.b32.xlu0 %v358, 18
      %v1012 = vpop.permute.xlu0 %1011
      %1013 = vrot.lane.b32.xlu0 %v360, 18
      %v1014 = vpop.permute.xlu0 %1013
      %1015 = vrot.lane.b32.xlu0 %v359, 18
      %v1016 = vpop.permute.xlu0 %1015
      %1017 = vrot.lane.b32.xlu0 %v361, 18
      %v1018 = vpop.permute.xlu0 %1017
      %vm1019 = vcmp.lt.s32.totalorder %v371, 18
      %v1020 = vsel %vm1019, %v1012, %v1016
      %v1021 = vsel %vm1019, %v1014, %v1018
      %v1022 = vsel %vm1019, %v1016, %v1012
      %v1023 = vsel %vm1019, %v1018, %v1014
      %s1024 = scalar_lea.vmem %s5, 10
      %v1025 = vld [vmem:[%s1024] sm:$0x3]
      %v1027 = vlaneseq
      %v1028 = vshrl.u32 %v1027, 7
      %v1029 = vsub.s32 0, %v1028
      %v1030 = vrot.slane %v1025, %v1029
      %v1031 = vlaneseq
      %v1032 = vshrl.u32 %v1031, 7
      %v1033 = vsub.s32 1, %v1032
      %v1034 = vrot.slane %v1025, %v1033
      %v1037 = vmul.f32 %v1022, %v1030
      %v1038 = vmul.f32 %v1020, %v1034
      %v1039 = vmul.f32 %v1023, %v1030
      %v1040 = vmul.f32 %v1021, %v1034
      %s1041 = scalar_lea.vmem %s3, 120
      %v1042 = vld [vmem:[%s1041] sm:$0xff]
      %v1043 = vld [vmem:[%s1041 + $0x8] sm:$0xff]
      %v1044 = vld [vmem:[%s1041 + $0x10] sm:$0xf]
      %v1046 = vsel %vm430, %v1042, 0
      %v1049 = vsel %vm430, %v1043, 0
      %v1052 = vsel %vm430, %v1044, 0
      %1054 = vmatprep.subr.mxu0 %v1038
      %1055 = vmatpush1.msra.mxu0 %v1037
      %1056 = vmatprep.subr.mxu0 %v1040
      %1057 = vmatpush1.msra.mxu0 %v1039
      %1058 = vmatprep.subr.mxu0 0.0
      %1059 = vmatpush1.msra.mxu0 0.0
      %1060 = vmatprep.subr.mxu0 0.0
      %1061 = vmatpush1.msra.mxu0 0.0
      %1062 = vmatprep.subr.mxu0 0.0
      %1063 = vmatpush1.msra.mxu0 0.0
      %1064 = vmatprep.subr.mxu0 0.0
      %1065 = vmatpush1.msra.mxu0 0.0
      %1066 = vmatprep.subr.mxu0 0.0
      %1067 = vmatpush1.msra.mxu0 0.0
      %1068 = vmatprep.subr.mxu0 0.0
      %1069 = vmatpush1.msra.mxu0 0.0
      %1070 = vmatprep.subr.mxu0 0.0
      %1071 = vmatpush1.msra.mxu0 0.0
      %1072 = vmatprep.subr.mxu0 0.0
      %1073 = vmatpush1.msra.mxu0 0.0
      %1074 = vmatprep.subr.mxu0 0.0
      %1075 = vmatpush1.msra.mxu0 0.0
      %1076 = vmatprep.subr.mxu0 0.0
      %1077 = vmatpush1.msra.mxu0 0.0
      %1078 = vmatprep.subr.mxu0 0.0
      %1079 = vmatpush1.msra.mxu0 0.0
      %1080 = vmatprep.subr.mxu0 0.0
      %1081 = vmatpush1.msra.mxu0 0.0
      %1082 = vmatprep.subr.mxu0 0.0
      %1083 = vmatpush1.msra.mxu0 0.0
      %1084 = vmatprep.subr.mxu0 0.0
      %1085 = vmatpush1.msra.mxu0 0.0
      %1086 = vmatprep.subr.mxu0 0.0
      %1087 = vmatpush1.msra.mxu0 0.0
      %1088 = vmatprep.subr.mxu0 0.0
      %1089 = vmatpush1.msra.mxu0 0.0
      %1090 = vmatprep.subr.mxu0 0.0
      %1091 = vmatpush1.msra.mxu0 0.0
      %1092 = vmatprep.subr.mxu0 0.0
      %1093 = vmatpush1.msra.mxu0 0.0
      %1094 = vmatprep.subr.mxu0 0.0
      %1095 = vmatpush1.msra.mxu0 0.0
      %1096 = vmatprep.subr.mxu0 0.0
      %1097 = vmatpush1.msra.mxu0 0.0
      %1098 = vmatprep.subr.mxu0 0.0
      %1099 = vmatpush1.msra.mxu0 0.0
      %1100 = vmatprep.subr.mxu0 0.0
      %1101 = vmatpush1.msra.mxu0 0.0
      %1102 = vmatprep.subr.mxu0 0.0
      %1103 = vmatpush1.msra.mxu0 0.0
      %1104 = vmatprep.subr.mxu0 0.0
      %1105 = vmatpush1.msra.mxu0 0.0
      %1106 = vmatprep.subr.mxu0 0.0
      %1107 = vmatpush1.msra.mxu0 0.0
      %1108 = vmatprep.subr.mxu0 0.0
      %1109 = vmatpush1.msra.mxu0 0.0
      %1110 = vmatprep.subr.mxu0 0.0
      %1111 = vmatpush1.msra.mxu0 0.0
      %1112 = vmatprep.subr.mxu0 0.0
      %1113 = vmatpush1.msra.mxu0 0.0
      %1114 = vmatprep.subr.mxu0 0.0
      %1115 = vmatpush1.msra.mxu0 0.0
      %1116 = vmatprep.subr.mxu0 0.0
      %1117 = vmatpush1.msra.mxu0 0.0
      %1118 = vmatprep.mubr.f32.mxu0 0.0
      %1119 = vmatmul.mubr.f32.gmra.mrb[0].mxu0 %v1046
      %v1120 = vpop.f32.mrb[0].mxu0
      %v1121 = vadd.f32 0.0, %v1120
      %v1122 = vpop.f32.mrb[0].mxu0
      %v1123 = vadd.f32 0.0, %v1122
      %1124 = vmatprep.mubr.f32.mxu0 0.0
      %1125 = vmatmul.mubr.f32.gmra.mrb[0].mxu0 %v1049
      %v1126 = vpop.f32.mrb[0].mxu0
      %v1127 = vadd.f32 0.0, %v1126
      %v1128 = vpop.f32.mrb[0].mxu0
      %v1129 = vadd.f32 0.0, %v1128
      %1130 = vmatprep.mubr.f32.mxu0 0.0
      %1131 = vmatmul.mubr.f32.gmra.mrb[0].mxu0 %v1052
      %v1132 = vpop.f32.mrb[0].mxu0
      %v1133 = vadd.f32 0.0, %v1132
      %v1134 = vpop.f32.mrb[0].mxu0
      %v1135 = vadd.f32 0.0, %v1134
      %1136 = vdwg.mxu0
      %v1137 = vadd.f32 %v1005, %v1121
      %v1138 = vadd.f32 %v1006, %v1123
      %v1139 = vadd.f32 %v1007, %v1127
      %v1140 = vadd.f32 %v1008, %v1129
      %v1141 = vadd.f32 %v1009, %v1133
      %v1142 = vadd.f32 %v1010, %v1135
      %1143 = vrot.lane.b32.xlu0 %v358, 17
      %v1144 = vpop.permute.xlu0 %1143
      %1145 = vrot.lane.b32.xlu0 %v360, 17
      %v1146 = vpop.permute.xlu0 %1145
      %1147 = vrot.lane.b32.xlu0 %v359, 17
      %v1148 = vpop.permute.xlu0 %1147
      %1149 = vrot.lane.b32.xlu0 %v361, 17
      %v1150 = vpop.permute.xlu0 %1149
      %vm1151 = vcmp.lt.s32.totalorder %v371, 17
      %v1152 = vsel %vm1151, %v1144, %v1148
      %v1153 = vsel %vm1151, %v1146, %v1150
      %v1154 = vsel %vm1151, %v1148, %v1144
      %v1155 = vsel %vm1151, %v1150, %v1146
      %s1156 = scalar_lea.vmem %s5, 12
      %v1157 = vld [vmem:[%s1156] sm:$0x3]
      %v1159 = vlaneseq
      %v1160 = vshrl.u32 %v1159, 7
      %v1161 = vsub.s32 0, %v1160
      %v1162 = vrot.slane %v1157, %v1161
      %v1163 = vlaneseq
      %v1164 = vshrl.u32 %v1163, 7
      %v1165 = vsub.s32 1, %v1164
      %v1166 = vrot.slane %v1157, %v1165
      %v1169 = vmul.f32 %v1154, %v1162
      %v1170 = vmul.f32 %v1152, %v1166
      %v1171 = vmul.f32 %v1155, %v1162
      %v1172 = vmul.f32 %v1153, %v1166
      %s1173 = scalar_lea.vmem %s3, 144
      %v1174 = vld [vmem:[%s1173] sm:$0xff]
      %v1175 = vld [vmem:[%s1173 + $0x8] sm:$0xff]
      %v1176 = vld [vmem:[%s1173 + $0x10] sm:$0xf]
      %v1178 = vsel %vm430, %v1174, 0
      %v1181 = vsel %vm430, %v1175, 0
      %v1184 = vsel %vm430, %v1176, 0
      %1186 = vmatprep.subr.mxu0 %v1170
      %1187 = vmatpush1.msra.mxu0 %v1169
      %1188 = vmatprep.subr.mxu0 %v1172
      %1189 = vmatpush1.msra.mxu0 %v1171
      %1190 = vmatprep.subr.mxu0 0.0
      %1191 = vmatpush1.msra.mxu0 0.0
      %1192 = vmatprep.subr.mxu0 0.0
      %1193 = vmatpush1.msra.mxu0 0.0
      %1194 = vmatprep.subr.mxu0 0.0
      %1195 = vmatpush1.msra.mxu0 0.0
      %1196 = vmatprep.subr.mxu0 0.0
      %1197 = vmatpush1.msra.mxu0 0.0
      %1198 = vmatprep.subr.mxu0 0.0
      %1199 = vmatpush1.msra.mxu0 0.0
      %1200 = vmatprep.subr.mxu0 0.0
      %1201 = vmatpush1.msra.mxu0 0.0
      %1202 = vmatprep.subr.mxu0 0.0
      %1203 = vmatpush1.msra.mxu0 0.0
      %1204 = vmatprep.subr.mxu0 0.0
      %1205 = vmatpush1.msra.mxu0 0.0
      %1206 = vmatprep.subr.mxu0 0.0
      %1207 = vmatpush1.msra.mxu0 0.0
      %1208 = vmatprep.subr.mxu0 0.0
      %1209 = vmatpush1.msra.mxu0 0.0
      %1210 = vmatprep.subr.mxu0 0.0
      %1211 = vmatpush1.msra.mxu0 0.0
      %1212 = vmatprep.subr.mxu0 0.0
      %1213 = vmatpush1.msra.mxu0 0.0
      %1214 = vmatprep.subr.mxu0 0.0
      %1215 = vmatpush1.msra.mxu0 0.0
      %1216 = vmatprep.subr.mxu0 0.0
      %1217 = vmatpush1.msra.mxu0 0.0
      %1218 = vmatprep.subr.mxu0 0.0
      %1219 = vmatpush1.msra.mxu0 0.0
      %1220 = vmatprep.subr.mxu0 0.0
      %1221 = vmatpush1.msra.mxu0 0.0
      %1222 = vmatprep.subr.mxu0 0.0
      %1223 = vmatpush1.msra.mxu0 0.0
      %1224 = vmatprep.subr.mxu0 0.0
      %1225 = vmatpush1.msra.mxu0 0.0
      %1226 = vmatprep.subr.mxu0 0.0
      %1227 = vmatpush1.msra.mxu0 0.0
      %1228 = vmatprep.subr.mxu0 0.0
      %1229 = vmatpush1.msra.mxu0 0.0
      %1230 = vmatprep.subr.mxu0 0.0
      %1231 = vmatpush1.msra.mxu0 0.0
      %1232 = vmatprep.subr.mxu0 0.0
      %1233 = vmatpush1.msra.mxu0 0.0
      %1234 = vmatprep.subr.mxu0 0.0
      %1235 = vmatpush1.msra.mxu0 0.0
      %1236 = vmatprep.subr.mxu0 0.0
      %1237 = vmatpush1.msra.mxu0 0.0
      %1238 = vmatprep.subr.mxu0 0.0
      %1239 = vmatpush1.msra.mxu0 0.0
      %1240 = vmatprep.subr.mxu0 0.0
      %1241 = vmatpush1.msra.mxu0 0.0
      %1242 = vmatprep.subr.mxu0 0.0
      %1243 = vmatpush1.msra.mxu0 0.0
      %1244 = vmatprep.subr.mxu0 0.0
      %1245 = vmatpush1.msra.mxu0 0.0
      %1246 = vmatprep.subr.mxu0 0.0
      %1247 = vmatpush1.msra.mxu0 0.0
      %1248 = vmatprep.subr.mxu0 0.0
      %1249 = vmatpush1.msra.mxu0 0.0
      %1250 = vmatprep.mubr.f32.mxu0 0.0
      %1251 = vmatmul.mubr.f32.gmra.mrb[0].mxu0 %v1178
      %v1252 = vpop.f32.mrb[0].mxu0
      %v1253 = vadd.f32 0.0, %v1252
      %v1254 = vpop.f32.mrb[0].mxu0
      %v1255 = vadd.f32 0.0, %v1254
      %1256 = vmatprep.mubr.f32.mxu0 0.0
      %1257 = vmatmul.mubr.f32.gmra.mrb[0].mxu0 %v1181
      %v1258 = vpop.f32.mrb[0].mxu0
      %v1259 = vadd.f32 0.0, %v1258
      %v1260 = vpop.f32.mrb[0].mxu0
      %v1261 = vadd.f32 0.0, %v1260
      %1262 = vmatprep.mubr.f32.mxu0 0.0
      %1263 = vmatmul.mubr.f32.gmra.mrb[0].mxu0 %v1184
      %v1264 = vpop.f32.mrb[0].mxu0
      %v1265 = vadd.f32 0.0, %v1264
      %v1266 = vpop.f32.mrb[0].mxu0
      %v1267 = vadd.f32 0.0, %v1266
      %1268 = vdwg.mxu0
      %v1269 = vadd.f32 %v1137, %v1253
      %v1270 = vadd.f32 %v1138, %v1255
      %v1271 = vadd.f32 %v1139, %v1259
      %v1272 = vadd.f32 %v1140, %v1261
      %v1273 = vadd.f32 %v1141, %v1265
      %v1274 = vadd.f32 %v1142, %v1267
      %1275 = vrot.lane.b32.xlu0 %v358, 16
      %v1276 = vpop.permute.xlu0 %1275
      %1277 = vrot.lane.b32.xlu0 %v360, 16
      %v1278 = vpop.permute.xlu0 %1277
      %1279 = vrot.lane.b32.xlu0 %v359, 16
      %v1280 = vpop.permute.xlu0 %1279
      %1281 = vrot.lane.b32.xlu0 %v361, 16
      %v1282 = vpop.permute.xlu0 %1281
      %vm1283 = vcmp.lt.s32.totalorder %v371, 16
      %v1284 = vsel %vm1283, %v1276, %v1280
      %v1285 = vsel %vm1283, %v1278, %v1282
      %v1286 = vsel %vm1283, %v1280, %v1276
      %v1287 = vsel %vm1283, %v1282, %v1278
      %s1288 = scalar_lea.vmem %s5, 14
      %v1289 = vld [vmem:[%s1288] sm:$0x3]
      %v1291 = vlaneseq
      %v1292 = vshrl.u32 %v1291, 7
      %v1293 = vsub.s32 0, %v1292
      %v1294 = vrot.slane %v1289, %v1293
      %v1295 = vlaneseq
      %v1296 = vshrl.u32 %v1295, 7
      %v1297 = vsub.s32 1, %v1296
      %v1298 = vrot.slane %v1289, %v1297
      %v1301 = vmul.f32 %v1286, %v1294
      %v1302 = vmul.f32 %v1284, %v1298
      %v1303 = vmul.f32 %v1287, %v1294
      %v1304 = vmul.f32 %v1285, %v1298
      %s1305 = scalar_lea.vmem %s3, 168
      %v1306 = vld [vmem:[%s1305] sm:$0xff]
      %v1307 = vld [vmem:[%s1305 + $0x8] sm:$0xff]
      %v1308 = vld [vmem:[%s1305 + $0x10] sm:$0xf]
      %v1310 = vsel %vm430, %v1306, 0
      %v1313 = vsel %vm430, %v1307, 0
      %v1316 = vsel %vm430, %v1308, 0
      %1318 = vmatprep.subr.mxu0 %v1302
      %1319 = vmatpush1.msra.mxu0 %v1301
      %1320 = vmatprep.subr.mxu0 %v1304
      %1321 = vmatpush1.msra.mxu0 %v1303
      %1322 = vmatprep.subr.mxu0 0.0
      %1323 = vmatpush1.msra.mxu0 0.0
      %1324 = vmatprep.subr.mxu0 0.0
      %1325 = vmatpush1.msra.mxu0 0.0
      %1326 = vmatprep.subr.mxu0 0.0
      %1327 = vmatpush1.msra.mxu0 0.0
      %1328 = vmatprep.subr.mxu0 0.0
      %1329 = vmatpush1.msra.mxu0 0.0
      %1330 = vmatprep.subr.mxu0 0.0
      %1331 = vmatpush1.msra.mxu0 0.0
      %1332 = vmatprep.subr.mxu0 0.0
      %1333 = vmatpush1.msra.mxu0 0.0
      %1334 = vmatprep.subr.mxu0 0.0
      %1335 = vmatpush1.msra.mxu0 0.0
      %1336 = vmatprep.subr.mxu0 0.0
      %1337 = vmatpush1.msra.mxu0 0.0
      %1338 = vmatprep.subr.mxu0 0.0
      %1339 = vmatpush1.msra.mxu0 0.0
      %1340 = vmatprep.subr.mxu0 0.0
      %1341 = vmatpush1.msra.mxu0 0.0
      %1342 = vmatprep.subr.mxu0 0.0
      %1343 = vmatpush1.msra.mxu0 0.0
      %1344 = vmatprep.subr.mxu0 0.0
      %1345 = vmatpush1.msra.mxu0 0.0
      %1346 = vmatprep.subr.mxu0 0.0
      %1347 = vmatpush1.msra.mxu0 0.0
      %1348 = vmatprep.subr.mxu0 0.0
      %1349 = vmatpush1.msra.mxu0 0.0
      %1350 = vmatprep.subr.mxu0 0.0
      %1351 = vmatpush1.msra.mxu0 0.0
      %1352 = vmatprep.subr.mxu0 0.0
      %1353 = vmatpush1.msra.mxu0 0.0
      %1354 = vmatprep.subr.mxu0 0.0
      %1355 = vmatpush1.msra.mxu0 0.0
      %1356 = vmatprep.subr.mxu0 0.0
      %1357 = vmatpush1.msra.mxu0 0.0
      %1358 = vmatprep.subr.mxu0 0.0
      %1359 = vmatpush1.msra.mxu0 0.0
      %1360 = vmatprep.subr.mxu0 0.0
      %1361 = vmatpush1.msra.mxu0 0.0
      %1362 = vmatprep.subr.mxu0 0.0
      %1363 = vmatpush1.msra.mxu0 0.0
      %1364 = vmatprep.subr.mxu0 0.0
      %1365 = vmatpush1.msra.mxu0 0.0
      %1366 = vmatprep.subr.mxu0 0.0
      %1367 = vmatpush1.msra.mxu0 0.0
      %1368 = vmatprep.subr.mxu0 0.0
      %1369 = vmatpush1.msra.mxu0 0.0
      %1370 = vmatprep.subr.mxu0 0.0
      %1371 = vmatpush1.msra.mxu0 0.0
      %1372 = vmatprep.subr.mxu0 0.0
      %1373 = vmatpush1.msra.mxu0 0.0
      %1374 = vmatprep.subr.mxu0 0.0
      %1375 = vmatpush1.msra.mxu0 0.0
      %1376 = vmatprep.subr.mxu0 0.0
      %1377 = vmatpush1.msra.mxu0 0.0
      %1378 = vmatprep.subr.mxu0 0.0
      %1379 = vmatpush1.msra.mxu0 0.0
      %1380 = vmatprep.subr.mxu0 0.0
      %1381 = vmatpush1.msra.mxu0 0.0
      %1382 = vmatprep.mubr.f32.mxu0 0.0
      %1383 = vmatmul.mubr.f32.gmra.mrb[0].mxu0 %v1310
      %v1384 = vpop.f32.mrb[0].mxu0
      %v1385 = vadd.f32 0.0, %v1384
      %v1386 = vpop.f32.mrb[0].mxu0
      %v1387 = vadd.f32 0.0, %v1386
      %1388 = vmatprep.mubr.f32.mxu0 0.0
      %1389 = vmatmul.mubr.f32.gmra.mrb[0].mxu0 %v1313
      %v1390 = vpop.f32.mrb[0].mxu0
      %v1391 = vadd.f32 0.0, %v1390
      %v1392 = vpop.f32.mrb[0].mxu0
      %v1393 = vadd.f32 0.0, %v1392
      %1394 = vmatprep.mubr.f32.mxu0 0.0
      %1395 = vmatmul.mubr.f32.gmra.mrb[0].mxu0 %v1316
      %v1396 = vpop.f32.mrb[0].mxu0
      %v1397 = vadd.f32 0.0, %v1396
      %v1398 = vpop.f32.mrb[0].mxu0
      %v1399 = vadd.f32 0.0, %v1398
      %1400 = vdwg.mxu0
      %v1401 = vadd.f32 %v1269, %v1385
      %v1402 = vadd.f32 %v1270, %v1387
      %v1403 = vadd.f32 %v1271, %v1391
      %v1404 = vadd.f32 %v1272, %v1393
      %v1405 = vadd.f32 %v1273, %v1397
      %v1406 = vadd.f32 %v1274, %v1399
      %1407 = vrot.lane.b32.xlu0 %v358, 15
      %v1408 = vpop.permute.xlu0 %1407
      %1409 = vrot.lane.b32.xlu0 %v360, 15
      %v1410 = vpop.permute.xlu0 %1409
      %1411 = vrot.lane.b32.xlu0 %v359, 15
      %v1412 = vpop.permute.xlu0 %1411
      %1413 = vrot.lane.b32.xlu0 %v361, 15
      %v1414 = vpop.permute.xlu0 %1413
      %vm1415 = vcmp.lt.s32.totalorder %v371, 15
      %v1416 = vsel %vm1415, %v1408, %v1412
      %v1417 = vsel %vm1415, %v1410, %v1414
      %v1418 = vsel %vm1415, %v1412, %v1408
      %v1419 = vsel %vm1415, %v1414, %v1410
      %s1420 = scalar_lea.vmem %s5, 16
      %v1421 = vld [vmem:[%s1420] sm:$0x3]
      %v1423 = vlaneseq
      %v1424 = vshrl.u32 %v1423, 7
      %v1425 = vsub.s32 0, %v1424
      %v1426 = vrot.slane %v1421, %v1425
      %v1427 = vlaneseq
      %v1428 = vshrl.u32 %v1427, 7
      %v1429 = vsub.s32 1, %v1428
      %v1430 = vrot.slane %v1421, %v1429
      %v1433 = vmul.f32 %v1418, %v1426
      %v1434 = vmul.f32 %v1416, %v1430
      %v1435 = vmul.f32 %v1419, %v1426
      %v1436 = vmul.f32 %v1417, %v1430
      %s1437 = scalar_lea.vmem %s3, 192
      %v1438 = vld [vmem:[%s1437] sm:$0xff]
      %v1439 = vld [vmem:[%s1437 + $0x8] sm:$0xff]
      %v1440 = vld [vmem:[%s1437 + $0x10] sm:$0xf]
      %v1442 = vsel %vm430, %v1438, 0
      %v1445 = vsel %vm430, %v1439, 0
      %v1448 = vsel %vm430, %v1440, 0
      %1450 = vmatprep.subr.mxu0 %v1434
      %1451 = vmatpush1.msra.mxu0 %v1433
      %1452 = vmatprep.subr.mxu0 %v1436
      %1453 = vmatpush1.msra.mxu0 %v1435
      %1454 = vmatprep.subr.mxu0 0.0
      %1455 = vmatpush1.msra.mxu0 0.0
      %1456 = vmatprep.subr.mxu0 0.0
      %1457 = vmatpush1.msra.mxu0 0.0
      %1458 = vmatprep.subr.mxu0 0.0
      %1459 = vmatpush1.msra.mxu0 0.0
      %1460 = vmatprep.subr.mxu0 0.0
      %1461 = vmatpush1.msra.mxu0 0.0
      %1462 = vmatprep.subr.mxu0 0.0
      %1463 = vmatpush1.msra.mxu0 0.0
      %1464 = vmatprep.subr.mxu0 0.0
      %1465 = vmatpush1.msra.mxu0 0.0
      %1466 = vmatprep.subr.mxu0 0.0
      %1467 = vmatpush1.msra.mxu0 0.0
      %1468 = vmatprep.subr.mxu0 0.0
      %1469 = vmatpush1.msra.mxu0 0.0
      %1470 = vmatprep.subr.mxu0 0.0
      %1471 = vmatpush1.msra.mxu0 0.0
      %1472 = vmatprep.subr.mxu0 0.0
      %1473 = vmatpush1.msra.mxu0 0.0
      %1474 = vmatprep.subr.mxu0 0.0
      %1475 = vmatpush1.msra.mxu0 0.0
      %1476 = vmatprep.subr.mxu0 0.0
      %1477 = vmatpush1.msra.mxu0 0.0
      %1478 = vmatprep.subr.mxu0 0.0
      %1479 = vmatpush1.msra.mxu0 0.0
      %1480 = vmatprep.subr.mxu0 0.0
      %1481 = vmatpush1.msra.mxu0 0.0
      %1482 = vmatprep.subr.mxu0 0.0
      %1483 = vmatpush1.msra.mxu0 0.0
      %1484 = vmatprep.subr.mxu0 0.0
      %1485 = vmatpush1.msra.mxu0 0.0
      %1486 = vmatprep.subr.mxu0 0.0
      %1487 = vmatpush1.msra.mxu0 0.0
      %1488 = vmatprep.subr.mxu0 0.0
      %1489 = vmatpush1.msra.mxu0 0.0
      %1490 = vmatprep.subr.mxu0 0.0
      %1491 = vmatpush1.msra.mxu0 0.0
      %1492 = vmatprep.subr.mxu0 0.0
      %1493 = vmatpush1.msra.mxu0 0.0
      %1494 = vmatprep.subr.mxu0 0.0
      %1495 = vmatpush1.msra.mxu0 0.0
      %1496 = vmatprep.subr.mxu0 0.0
      %1497 = vmatpush1.msra.mxu0 0.0
      %1498 = vmatprep.subr.mxu0 0.0
      %1499 = vmatpush1.msra.mxu0 0.0
      %1500 = vmatprep.subr.mxu0 0.0
      %1501 = vmatpush1.msra.mxu0 0.0
      %1502 = vmatprep.subr.mxu0 0.0
      %1503 = vmatpush1.msra.mxu0 0.0
      %1504 = vmatprep.subr.mxu0 0.0
      %1505 = vmatpush1.msra.mxu0 0.0
      %1506 = vmatprep.subr.mxu0 0.0
      %1507 = vmatpush1.msra.mxu0 0.0
      %1508 = vmatprep.subr.mxu0 0.0
      %1509 = vmatpush1.msra.mxu0 0.0
      %1510 = vmatprep.subr.mxu0 0.0
      %1511 = vmatpush1.msra.mxu0 0.0
      %1512 = vmatprep.subr.mxu0 0.0
      %1513 = vmatpush1.msra.mxu0 0.0
      %1514 = vmatprep.mubr.f32.mxu0 0.0
      %1515 = vmatmul.mubr.f32.gmra.mrb[0].mxu0 %v1442
      %v1516 = vpop.f32.mrb[0].mxu0
      %v1517 = vadd.f32 0.0, %v1516
      %v1518 = vpop.f32.mrb[0].mxu0
      %v1519 = vadd.f32 0.0, %v1518
      %1520 = vmatprep.mubr.f32.mxu0 0.0
      %1521 = vmatmul.mubr.f32.gmra.mrb[0].mxu0 %v1445
      %v1522 = vpop.f32.mrb[0].mxu0
      %v1523 = vadd.f32 0.0, %v1522
      %v1524 = vpop.f32.mrb[0].mxu0
      %v1525 = vadd.f32 0.0, %v1524
      %1526 = vmatprep.mubr.f32.mxu0 0.0
      %1527 = vmatmul.mubr.f32.gmra.mrb[0].mxu0 %v1448
      %v1528 = vpop.f32.mrb[0].mxu0
      %v1529 = vadd.f32 0.0, %v1528
      %v1530 = vpop.f32.mrb[0].mxu0
      %v1531 = vadd.f32 0.0, %v1530
      %1532 = vdwg.mxu0
      %v1533 = vadd.f32 %v1401, %v1517
      %v1534 = vadd.f32 %v1402, %v1519
      %v1535 = vadd.f32 %v1403, %v1523
      %v1536 = vadd.f32 %v1404, %v1525
      %v1537 = vadd.f32 %v1405, %v1529
      %v1538 = vadd.f32 %v1406, %v1531
      %1539 = vrot.lane.b32.xlu0 %v358, 14
      %v1540 = vpop.permute.xlu0 %1539
      %1541 = vrot.lane.b32.xlu0 %v360, 14
      %v1542 = vpop.permute.xlu0 %1541
      %1543 = vrot.lane.b32.xlu0 %v359, 14
      %v1544 = vpop.permute.xlu0 %1543
      %1545 = vrot.lane.b32.xlu0 %v361, 14
      %v1546 = vpop.permute.xlu0 %1545
      %vm1547 = vcmp.lt.s32.totalorder %v371, 14
      %v1548 = vsel %vm1547, %v1540, %v1544
      %v1549 = vsel %vm1547, %v1542, %v1546
      %v1550 = vsel %vm1547, %v1544, %v1540
      %v1551 = vsel %vm1547, %v1546, %v1542
      %s1552 = scalar_lea.vmem %s5, 18
      %v1553 = vld [vmem:[%s1552] sm:$0x3]
      %v1555 = vlaneseq
      %v1556 = vshrl.u32 %v1555, 7
      %v1557 = vsub.s32 0, %v1556
      %v1558 = vrot.slane %v1553, %v1557
      %v1559 = vlaneseq
      %v1560 = vshrl.u32 %v1559, 7
      %v1561 = vsub.s32 1, %v1560
      %v1562 = vrot.slane %v1553, %v1561
      %v1565 = vmul.f32 %v1550, %v1558
      %v1566 = vmul.f32 %v1548, %v1562
      %v1567 = vmul.f32 %v1551, %v1558
      %v1568 = vmul.f32 %v1549, %v1562
      %s1569 = scalar_lea.vmem %s3, 216
      %v1570 = vld [vmem:[%s1569] sm:$0xff]
      %v1571 = vld [vmem:[%s1569 + $0x8] sm:$0xff]
      %v1572 = vld [vmem:[%s1569 + $0x10] sm:$0xf]
      %v1574 = vsel %vm430, %v1570, 0
      %v1577 = vsel %vm430, %v1571, 0
      %v1580 = vsel %vm430, %v1572, 0
      %1582 = vmatprep.subr.mxu0 %v1566
      %1583 = vmatpush1.msra.mxu0 %v1565
      %1584 = vmatprep.subr.mxu0 %v1568
      %1585 = vmatpush1.msra.mxu0 %v1567
      %1586 = vmatprep.subr.mxu0 0.0
      %1587 = vmatpush1.msra.mxu0 0.0
      %1588 = vmatprep.subr.mxu0 0.0
      %1589 = vmatpush1.msra.mxu0 0.0
      %1590 = vmatprep.subr.mxu0 0.0
      %1591 = vmatpush1.msra.mxu0 0.0
      %1592 = vmatprep.subr.mxu0 0.0
      %1593 = vmatpush1.msra.mxu0 0.0
      %1594 = vmatprep.subr.mxu0 0.0
      %1595 = vmatpush1.msra.mxu0 0.0
      %1596 = vmatprep.subr.mxu0 0.0
      %1597 = vmatpush1.msra.mxu0 0.0
      %1598 = vmatprep.subr.mxu0 0.0
      %1599 = vmatpush1.msra.mxu0 0.0
      %1600 = vmatprep.subr.mxu0 0.0
      %1601 = vmatpush1.msra.mxu0 0.0
      %1602 = vmatprep.subr.mxu0 0.0
      %1603 = vmatpush1.msra.mxu0 0.0
      %1604 = vmatprep.subr.mxu0 0.0
      %1605 = vmatpush1.msra.mxu0 0.0
      %1606 = vmatprep.subr.mxu0 0.0
      %1607 = vmatpush1.msra.mxu0 0.0
      %1608 = vmatprep.subr.mxu0 0.0
      %1609 = vmatpush1.msra.mxu0 0.0
      %1610 = vmatprep.subr.mxu0 0.0
      %1611 = vmatpush1.msra.mxu0 0.0
      %1612 = vmatprep.subr.mxu0 0.0
      %1613 = vmatpush1.msra.mxu0 0.0
      %1614 = vmatprep.subr.mxu0 0.0
      %1615 = vmatpush1.msra.mxu0 0.0
      %1616 = vmatprep.subr.mxu0 0.0
      %1617 = vmatpush1.msra.mxu0 0.0
      %1618 = vmatprep.subr.mxu0 0.0
      %1619 = vmatpush1.msra.mxu0 0.0
      %1620 = vmatprep.subr.mxu0 0.0
      %1621 = vmatpush1.msra.mxu0 0.0
      %1622 = vmatprep.subr.mxu0 0.0
      %1623 = vmatpush1.msra.mxu0 0.0
      %1624 = vmatprep.subr.mxu0 0.0
      %1625 = vmatpush1.msra.mxu0 0.0
      %1626 = vmatprep.subr.mxu0 0.0
      %1627 = vmatpush1.msra.mxu0 0.0
      %1628 = vmatprep.subr.mxu0 0.0
      %1629 = vmatpush1.msra.mxu0 0.0
      %1630 = vmatprep.subr.mxu0 0.0
      %1631 = vmatpush1.msra.mxu0 0.0
      %1632 = vmatprep.subr.mxu0 0.0
      %1633 = vmatpush1.msra.mxu0 0.0
      %1634 = vmatprep.subr.mxu0 0.0
      %1635 = vmatpush1.msra.mxu0 0.0
      %1636 = vmatprep.subr.mxu0 0.0
      %1637 = vmatpush1.msra.mxu0 0.0
      %1638 = vmatprep.subr.mxu0 0.0
      %1639 = vmatpush1.msra.mxu0 0.0
      %1640 = vmatprep.subr.mxu0 0.0
      %1641 = vmatpush1.msra.mxu0 0.0
      %1642 = vmatprep.subr.mxu0 0.0
      %1643 = vmatpush1.msra.mxu0 0.0
      %1644 = vmatprep.subr.mxu0 0.0
      %1645 = vmatpush1.msra.mxu0 0.0
      %1646 = vmatprep.mubr.f32.mxu0 0.0
      %1647 = vmatmul.mubr.f32.gmra.mrb[0].mxu0 %v1574
      %v1648 = vpop.f32.mrb[0].mxu0
      %v1649 = vadd.f32 0.0, %v1648
      %v1650 = vpop.f32.mrb[0].mxu0
      %v1651 = vadd.f32 0.0, %v1650
      %1652 = vmatprep.mubr.f32.mxu0 0.0
      %1653 = vmatmul.mubr.f32.gmra.mrb[0].mxu0 %v1577
      %v1654 = vpop.f32.mrb[0].mxu0
      %v1655 = vadd.f32 0.0, %v1654
      %v1656 = vpop.f32.mrb[0].mxu0
      %v1657 = vadd.f32 0.0, %v1656
      %1658 = vmatprep.mubr.f32.mxu0 0.0
      %1659 = vmatmul.mubr.f32.gmra.mrb[0].mxu0 %v1580
      %v1660 = vpop.f32.mrb[0].mxu0
      %v1661 = vadd.f32 0.0, %v1660
      %v1662 = vpop.f32.mrb[0].mxu0
      %v1663 = vadd.f32 0.0, %v1662
      %1664 = vdwg.mxu0
      %v1665 = vadd.f32 %v1533, %v1649
      %v1666 = vadd.f32 %v1534, %v1651
      %v1667 = vadd.f32 %v1535, %v1655
      %v1668 = vadd.f32 %v1536, %v1657
      %v1669 = vadd.f32 %v1537, %v1661
      %v1670 = vadd.f32 %v1538, %v1663
      %1671 = vrot.lane.b32.xlu0 %v358, 2
      %v1672 = vpop.permute.xlu0 %1671
      %1673 = vrot.lane.b32.xlu0 %v360, 2
      %v1674 = vpop.permute.xlu0 %1673
      %1675 = vrot.lane.b32.xlu0 %v359, 2
      %v1676 = vpop.permute.xlu0 %1675
      %1677 = vrot.lane.b32.xlu0 %v361, 2
      %v1678 = vpop.permute.xlu0 %1677
      %vm1679 = vcmp.lt.s32.totalorder %v371, 2
      %v1680 = vsel %vm1679, %v1672, %v1676
      %v1681 = vsel %vm1679, %v1674, %v1678
      %v1682 = vsel %vm1679, %v1676, %v1672
      %v1683 = vsel %vm1679, %v1678, %v1674
      %s1684 = scalar_lea.vmem %s5, 20
      %v1685 = vld [vmem:[%s1684] sm:$0x3]
      %v1687 = vlaneseq
      %v1688 = vshrl.u32 %v1687, 7
      %v1689 = vsub.s32 0, %v1688
      %v1690 = vrot.slane %v1685, %v1689
      %v1691 = vlaneseq
      %v1692 = vshrl.u32 %v1691, 7
      %v1693 = vsub.s32 1, %v1692
      %v1694 = vrot.slane %v1685, %v1693
      %v1697 = vmul.f32 %v1682, %v1690
      %v1698 = vmul.f32 %v1680, %v1694
      %v1699 = vmul.f32 %v1683, %v1690
      %v1700 = vmul.f32 %v1681, %v1694
      %s1701 = scalar_lea.vmem %s3, 240
      %v1702 = vld [vmem:[%s1701] sm:$0xff]
      %v1703 = vld [vmem:[%s1701 + $0x8] sm:$0xff]
      %v1704 = vld [vmem:[%s1701 + $0x10] sm:$0xf]
      %v1706 = vsel %vm430, %v1702, 0
      %v1709 = vsel %vm430, %v1703, 0
      %v1712 = vsel %vm430, %v1704, 0
      %1714 = vmatprep.subr.mxu0 %v1698
      %1715 = vmatpush1.msra.mxu0 %v1697
      %1716 = vmatprep.subr.mxu0 %v1700
      %1717 = vmatpush1.msra.mxu0 %v1699
      %1718 = vmatprep.subr.mxu0 0.0
      %1719 = vmatpush1.msra.mxu0 0.0
      %1720 = vmatprep.subr.mxu0 0.0
      %1721 = vmatpush1.msra.mxu0 0.0
      %1722 = vmatprep.subr.mxu0 0.0
      %1723 = vmatpush1.msra.mxu0 0.0
      %1724 = vmatprep.subr.mxu0 0.0
      %1725 = vmatpush1.msra.mxu0 0.0
      %1726 = vmatprep.subr.mxu0 0.0
      %1727 = vmatpush1.msra.mxu0 0.0
      %1728 = vmatprep.subr.mxu0 0.0
      %1729 = vmatpush1.msra.mxu0 0.0
      %1730 = vmatprep.subr.mxu0 0.0
      %1731 = vmatpush1.msra.mxu0 0.0
      %1732 = vmatprep.subr.mxu0 0.0
      %1733 = vmatpush1.msra.mxu0 0.0
      %1734 = vmatprep.subr.mxu0 0.0
      %1735 = vmatpush1.msra.mxu0 0.0
      %1736 = vmatprep.subr.mxu0 0.0
      %1737 = vmatpush1.msra.mxu0 0.0
      %1738 = vmatprep.subr.mxu0 0.0
      %1739 = vmatpush1.msra.mxu0 0.0
      %1740 = vmatprep.subr.mxu0 0.0
      %1741 = vmatpush1.msra.mxu0 0.0
      %1742 = vmatprep.subr.mxu0 0.0
      %1743 = vmatpush1.msra.mxu0 0.0
      %1744 = vmatprep.subr.mxu0 0.0
      %1745 = vmatpush1.msra.mxu0 0.0
      %1746 = vmatprep.subr.mxu0 0.0
      %1747 = vmatpush1.msra.mxu0 0.0
      %1748 = vmatprep.subr.mxu0 0.0
      %1749 = vmatpush1.msra.mxu0 0.0
      %1750 = vmatprep.subr.mxu0 0.0
      %1751 = vmatpush1.msra.mxu0 0.0
      %1752 = vmatprep.subr.mxu0 0.0
      %1753 = vmatpush1.msra.mxu0 0.0
      %1754 = vmatprep.subr.mxu0 0.0
      %1755 = vmatpush1.msra.mxu0 0.0
      %1756 = vmatprep.subr.mxu0 0.0
      %1757 = vmatpush1.msra.mxu0 0.0
      %1758 = vmatprep.subr.mxu0 0.0
      %1759 = vmatpush1.msra.mxu0 0.0
      %1760 = vmatprep.subr.mxu0 0.0
      %1761 = vmatpush1.msra.mxu0 0.0
      %1762 = vmatprep.subr.mxu0 0.0
      %1763 = vmatpush1.msra.mxu0 0.0
      %1764 = vmatprep.subr.mxu0 0.0
      %1765 = vmatpush1.msra.mxu0 0.0
      %1766 = vmatprep.subr.mxu0 0.0
      %1767 = vmatpush1.msra.mxu0 0.0
      %1768 = vmatprep.subr.mxu0 0.0
      %1769 = vmatpush1.msra.mxu0 0.0
      %1770 = vmatprep.subr.mxu0 0.0
      %1771 = vmatpush1.msra.mxu0 0.0
      %1772 = vmatprep.subr.mxu0 0.0
      %1773 = vmatpush1.msra.mxu0 0.0
      %1774 = vmatprep.subr.mxu0 0.0
      %1775 = vmatpush1.msra.mxu0 0.0
      %1776 = vmatprep.subr.mxu0 0.0
      %1777 = vmatpush1.msra.mxu0 0.0
      %1778 = vmatprep.mubr.f32.mxu0 0.0
      %1779 = vmatmul.mubr.f32.gmra.mrb[0].mxu0 %v1706
      %v1780 = vpop.f32.mrb[0].mxu0
      %v1781 = vadd.f32 0.0, %v1780
      %v1782 = vpop.f32.mrb[0].mxu0
      %v1783 = vadd.f32 0.0, %v1782
      %1784 = vmatprep.mubr.f32.mxu0 0.0
      %1785 = vmatmul.mubr.f32.gmra.mrb[0].mxu0 %v1709
      %v1786 = vpop.f32.mrb[0].mxu0
      %v1787 = vadd.f32 0.0, %v1786
      %v1788 = vpop.f32.mrb[0].mxu0
      %v1789 = vadd.f32 0.0, %v1788
      %1790 = vmatprep.mubr.f32.mxu0 0.0
      %1791 = vmatmul.mubr.f32.gmra.mrb[0].mxu0 %v1712
      %v1792 = vpop.f32.mrb[0].mxu0
      %v1793 = vadd.f32 0.0, %v1792
      %v1794 = vpop.f32.mrb[0].mxu0
      %v1795 = vadd.f32 0.0, %v1794
      %1796 = vdwg.mxu0
      %v1797 = vadd.f32 %v1665, %v1781
      %v1798 = vadd.f32 %v1666, %v1783
      %v1799 = vadd.f32 %v1667, %v1787
      %v1800 = vadd.f32 %v1668, %v1789
      %v1801 = vadd.f32 %v1669, %v1793
      %v1802 = vadd.f32 %v1670, %v1795
      %1803 = vrot.lane.b32.xlu0 %v358, 1
      %v1804 = vpop.permute.xlu0 %1803
      %1805 = vrot.lane.b32.xlu0 %v360, 1
      %v1806 = vpop.permute.xlu0 %1805
      %1807 = vrot.lane.b32.xlu0 %v359, 1
      %v1808 = vpop.permute.xlu0 %1807
      %1809 = vrot.lane.b32.xlu0 %v361, 1
      %v1810 = vpop.permute.xlu0 %1809
      %vm1811 = vcmp.lt.s32.totalorder %v371, 1
      %v1812 = vsel %vm1811, %v1804, %v1808
      %v1813 = vsel %vm1811, %v1806, %v1810
      %v1814 = vsel %vm1811, %v1808, %v1804
      %v1815 = vsel %vm1811, %v1810, %v1806
      %s1816 = scalar_lea.vmem %s5, 22
      %v1817 = vld [vmem:[%s1816] sm:$0x3]
      %v1819 = vlaneseq
      %v1820 = vshrl.u32 %v1819, 7
      %v1821 = vsub.s32 0, %v1820
      %v1822 = vrot.slane %v1817, %v1821
      %v1823 = vlaneseq
      %v1824 = vshrl.u32 %v1823, 7
      %v1825 = vsub.s32 1, %v1824
      %v1826 = vrot.slane %v1817, %v1825
      %v1829 = vmul.f32 %v1814, %v1822
      %v1830 = vmul.f32 %v1812, %v1826
      %v1831 = vmul.f32 %v1815, %v1822
      %v1832 = vmul.f32 %v1813, %v1826
      %s1833 = scalar_lea.vmem %s3, 264
      %v1834 = vld [vmem:[%s1833] sm:$0xff]
      %v1835 = vld [vmem:[%s1833 + $0x8] sm:$0xff]
      %v1836 = vld [vmem:[%s1833 + $0x10] sm:$0xf]
      %v1838 = vsel %vm430, %v1834, 0
      %v1841 = vsel %vm430, %v1835, 0
      %v1844 = vsel %vm430, %v1836, 0
      %1846 = vmatprep.subr.mxu0 %v1830
      %1847 = vmatpush1.msra.mxu0 %v1829
      %1848 = vmatprep.subr.mxu0 %v1832
      %1849 = vmatpush1.msra.mxu0 %v1831
      %1850 = vmatprep.subr.mxu0 0.0
      %1851 = vmatpush1.msra.mxu0 0.0
      %1852 = vmatprep.subr.mxu0 0.0
      %1853 = vmatpush1.msra.mxu0 0.0
      %1854 = vmatprep.subr.mxu0 0.0
      %1855 = vmatpush1.msra.mxu0 0.0
      %1856 = vmatprep.subr.mxu0 0.0
      %1857 = vmatpush1.msra.mxu0 0.0
      %1858 = vmatprep.subr.mxu0 0.0
      %1859 = vmatpush1.msra.mxu0 0.0
      %1860 = vmatprep.subr.mxu0 0.0
      %1861 = vmatpush1.msra.mxu0 0.0
      %1862 = vmatprep.subr.mxu0 0.0
      %1863 = vmatpush1.msra.mxu0 0.0
      %1864 = vmatprep.subr.mxu0 0.0
      %1865 = vmatpush1.msra.mxu0 0.0
      %1866 = vmatprep.subr.mxu0 0.0
      %1867 = vmatpush1.msra.mxu0 0.0
      %1868 = vmatprep.subr.mxu0 0.0
      %1869 = vmatpush1.msra.mxu0 0.0
      %1870 = vmatprep.subr.mxu0 0.0
      %1871 = vmatpush1.msra.mxu0 0.0
      %1872 = vmatprep.subr.mxu0 0.0
      %1873 = vmatpush1.msra.mxu0 0.0
      %1874 = vmatprep.subr.mxu0 0.0
      %1875 = vmatpush1.msra.mxu0 0.0
      %1876 = vmatprep.subr.mxu0 0.0
      %1877 = vmatpush1.msra.mxu0 0.0
      %1878 = vmatprep.subr.mxu0 0.0
      %1879 = vmatpush1.msra.mxu0 0.0
      %1880 = vmatprep.subr.mxu0 0.0
      %1881 = vmatpush1.msra.mxu0 0.0
      %1882 = vmatprep.subr.mxu0 0.0
      %1883 = vmatpush1.msra.mxu0 0.0
      %1884 = vmatprep.subr.mxu0 0.0
      %1885 = vmatpush1.msra.mxu0 0.0
      %1886 = vmatprep.subr.mxu0 0.0
      %1887 = vmatpush1.msra.mxu0 0.0
      %1888 = vmatprep.subr.mxu0 0.0
      %1889 = vmatpush1.msra.mxu0 0.0
      %1890 = vmatprep.subr.mxu0 0.0
      %1891 = vmatpush1.msra.mxu0 0.0
      %1892 = vmatprep.subr.mxu0 0.0
      %1893 = vmatpush1.msra.mxu0 0.0
      %1894 = vmatprep.subr.mxu0 0.0
      %1895 = vmatpush1.msra.mxu0 0.0
      %1896 = vmatprep.subr.mxu0 0.0
      %1897 = vmatpush1.msra.mxu0 0.0
      %1898 = vmatprep.subr.mxu0 0.0
      %1899 = vmatpush1.msra.mxu0 0.0
      %1900 = vmatprep.subr.mxu0 0.0
      %1901 = vmatpush1.msra.mxu0 0.0
      %1902 = vmatprep.subr.mxu0 0.0
      %1903 = vmatpush1.msra.mxu0 0.0
      %1904 = vmatprep.subr.mxu0 0.0
      %1905 = vmatpush1.msra.mxu0 0.0
      %1906 = vmatprep.subr.mxu0 0.0
      %1907 = vmatpush1.msra.mxu0 0.0
      %1908 = vmatprep.subr.mxu0 0.0
      %1909 = vmatpush1.msra.mxu0 0.0
      %1910 = vmatprep.mubr.f32.mxu0 0.0
      %1911 = vmatmul.mubr.f32.gmra.mrb[0].mxu0 %v1838
      %v1912 = vpop.f32.mrb[0].mxu0
      %v1913 = vadd.f32 0.0, %v1912
      %v1914 = vpop.f32.mrb[0].mxu0
      %v1915 = vadd.f32 0.0, %v1914
      %1916 = vmatprep.mubr.f32.mxu0 0.0
      %1917 = vmatmul.mubr.f32.gmra.mrb[0].mxu0 %v1841
      %v1918 = vpop.f32.mrb[0].mxu0
      %v1919 = vadd.f32 0.0, %v1918
      %v1920 = vpop.f32.mrb[0].mxu0
      %v1921 = vadd.f32 0.0, %v1920
      %1922 = vmatprep.mubr.f32.mxu0 0.0
      %1923 = vmatmul.mubr.f32.gmra.mrb[0].mxu0 %v1844
      %v1924 = vpop.f32.mrb[0].mxu0
      %v1925 = vadd.f32 0.0, %v1924
      %v1926 = vpop.f32.mrb[0].mxu0
      %v1927 = vadd.f32 0.0, %v1926
      %1928 = vdwg.mxu0
      %v1929 = vadd.f32 %v1797, %v1913
      %v1930 = vadd.f32 %v1798, %v1915
      %v1931 = vadd.f32 %v1799, %v1919
      %v1932 = vadd.f32 %v1800, %v1921
      %v1933 = vadd.f32 %v1801, %v1925
      %v1934 = vadd.f32 %v1802, %v1927
      %s1935 = scalar_lea.vmem %s3, 288
      %v1936 = vld [vmem:[%s1935] sm:$0xff]
      %v1937 = vld [vmem:[%s1935 + $0x8] sm:$0xff]
      %v1938 = vld [vmem:[%s1935 + $0x10] sm:$0xf]
      %v1940 = vsel %vm430, %v1936, 0
      %v1943 = vsel %vm430, %v1937, 0
      %v1946 = vsel %vm430, %v1938, 0
      %1948 = vmatprep.subr.mxu0 %v359
      %1949 = vmatpush1.msra.mxu0 %v358
      %1950 = vmatprep.subr.mxu0 %v361
      %1951 = vmatpush1.msra.mxu0 %v360
      %1952 = vmatprep.subr.mxu0 0.0
      %1953 = vmatpush1.msra.mxu0 0.0
      %1954 = vmatprep.subr.mxu0 0.0
      %1955 = vmatpush1.msra.mxu0 0.0
      %1956 = vmatprep.subr.mxu0 0.0
      %1957 = vmatpush1.msra.mxu0 0.0
      %1958 = vmatprep.subr.mxu0 0.0
      %1959 = vmatpush1.msra.mxu0 0.0
      %1960 = vmatprep.subr.mxu0 0.0
      %1961 = vmatpush1.msra.mxu0 0.0
      %1962 = vmatprep.subr.mxu0 0.0
      %1963 = vmatpush1.msra.mxu0 0.0
      %1964 = vmatprep.subr.mxu0 0.0
      %1965 = vmatpush1.msra.mxu0 0.0
      %1966 = vmatprep.subr.mxu0 0.0
      %1967 = vmatpush1.msra.mxu0 0.0
      %1968 = vmatprep.subr.mxu0 0.0
      %1969 = vmatpush1.msra.mxu0 0.0
      %1970 = vmatprep.subr.mxu0 0.0
      %1971 = vmatpush1.msra.mxu0 0.0
      %1972 = vmatprep.subr.mxu0 0.0
      %1973 = vmatpush1.msra.mxu0 0.0
      %1974 = vmatprep.subr.mxu0 0.0
      %1975 = vmatpush1.msra.mxu0 0.0
      %1976 = vmatprep.subr.mxu0 0.0
      %1977 = vmatpush1.msra.mxu0 0.0
      %1978 = vmatprep.subr.mxu0 0.0
      %1979 = vmatpush1.msra.mxu0 0.0
      %1980 = vmatprep.subr.mxu0 0.0
      %1981 = vmatpush1.msra.mxu0 0.0
      %1982 = vmatprep.subr.mxu0 0.0
      %1983 = vmatpush1.msra.mxu0 0.0
      %1984 = vmatprep.subr.mxu0 0.0
      %1985 = vmatpush1.msra.mxu0 0.0
      %1986 = vmatprep.subr.mxu0 0.0
      %1987 = vmatpush1.msra.mxu0 0.0
      %1988 = vmatprep.subr.mxu0 0.0
      %1989 = vmatpush1.msra.mxu0 0.0
      %1990 = vmatprep.subr.mxu0 0.0
      %1991 = vmatpush1.msra.mxu0 0.0
      %1992 = vmatprep.subr.mxu0 0.0
      %1993 = vmatpush1.msra.mxu0 0.0
      %1994 = vmatprep.subr.mxu0 0.0
      %1995 = vmatpush1.msra.mxu0 0.0
      %1996 = vmatprep.subr.mxu0 0.0
      %1997 = vmatpush1.msra.mxu0 0.0
      %1998 = vmatprep.subr.mxu0 0.0
      %1999 = vmatpush1.msra.mxu0 0.0
      %2000 = vmatprep.subr.mxu0 0.0
      %2001 = vmatpush1.msra.mxu0 0.0
      %2002 = vmatprep.subr.mxu0 0.0
      %2003 = vmatpush1.msra.mxu0 0.0
      %2004 = vmatprep.subr.mxu0 0.0
      %2005 = vmatpush1.msra.mxu0 0.0
      %2006 = vmatprep.subr.mxu0 0.0
      %2007 = vmatpush1.msra.mxu0 0.0
      %2008 = vmatprep.subr.mxu0 0.0
      %2009 = vmatpush1.msra.mxu0 0.0
      %2010 = vmatprep.subr.mxu0 0.0
      %2011 = vmatpush1.msra.mxu0 0.0
      %2012 = vmatprep.mubr.f32.mxu0 0.0
      %2013 = vmatmul.mubr.f32.gmra.mrb[0].mxu0 %v1940
      %v2014 = vpop.f32.mrb[0].mxu0
      %v2015 = vadd.f32 0.0, %v2014
      %v2016 = vpop.f32.mrb[0].mxu0
      %v2017 = vadd.f32 0.0, %v2016
      %2018 = vmatprep.mubr.f32.mxu0 0.0
      %2019 = vmatmul.mubr.f32.gmra.mrb[0].mxu0 %v1943
      %v2020 = vpop.f32.mrb[0].mxu0
      %v2021 = vadd.f32 0.0, %v2020
      %v2022 = vpop.f32.mrb[0].mxu0
      %v2023 = vadd.f32 0.0, %v2022
      %2024 = vmatprep.mubr.f32.mxu0 0.0
      %2025 = vmatmul.mubr.f32.gmra.mrb[0].mxu0 %v1946
      %v2026 = vpop.f32.mrb[0].mxu0
      %v2027 = vadd.f32 0.0, %v2026
      %v2028 = vpop.f32.mrb[0].mxu0
      %v2029 = vadd.f32 0.0, %v2028
      %2030 = vdwg.mxu0
      %v2031 = vadd.f32 %v1929, %v2015
      %v2032 = vadd.f32 %v1930, %v2017
      %v2033 = vadd.f32 %v1931, %v2021
      %v2034 = vadd.f32 %v1932, %v2023
      %v2035 = vadd.f32 %v1933, %v2027
      %v2036 = vadd.f32 %v1934, %v2029
      %2037 = vrot.lane.b32.xlu0 %v358, 127
      %v2038 = vpop.permute.xlu0 %2037
      %2039 = vrot.lane.b32.xlu0 %v360, 127
      %v2040 = vpop.permute.xlu0 %2039
      %2041 = vrot.lane.b32.xlu0 %v359, 127
      %v2042 = vpop.permute.xlu0 %2041
      %2043 = vrot.lane.b32.xlu0 %v361, 127
      %v2044 = vpop.permute.xlu0 %2043
      %vm2045 = vcmp.lt.s32.totalorder %v371, 127
      %v2046 = vsel %vm2045, %v2038, %v2042
      %v2047 = vsel %vm2045, %v2040, %v2044
      %v2048 = vsel %vm2045, %v2042, %v2038
      %v2049 = vsel %vm2045, %v2044, %v2040
      %s2050 = scalar_lea.vmem %s5, 26
      %v2051 = vld [vmem:[%s2050] sm:$0x3]
      %v2053 = vlaneseq
      %v2054 = vshrl.u32 %v2053, 7
      %v2055 = vsub.s32 0, %v2054
      %v2056 = vrot.slane %v2051, %v2055
      %v2057 = vlaneseq
      %v2058 = vshrl.u32 %v2057, 7
      %v2059 = vsub.s32 1, %v2058
      %v2060 = vrot.slane %v2051, %v2059
      %v2063 = vmul.f32 %v2046, %v2056
      %v2064 = vmul.f32 %v2048, %v2060
      %v2065 = vmul.f32 %v2047, %v2056
      %v2066 = vmul.f32 %v2049, %v2060
      %s2067 = scalar_lea.vmem %s3, 312
      %v2068 = vld [vmem:[%s2067] sm:$0xff]
      %v2069 = vld [vmem:[%s2067 + $0x8] sm:$0xff]
      %v2070 = vld [vmem:[%s2067 + $0x10] sm:$0xf]
      %v2072 = vsel %vm430, %v2068, 0
      %v2075 = vsel %vm430, %v2069, 0
      %v2078 = vsel %vm430, %v2070, 0
      %2080 = vmatprep.subr.mxu0 %v2064
      %2081 = vmatpush1.msra.mxu0 %v2063
      %2082 = vmatprep.subr.mxu0 %v2066
      %2083 = vmatpush1.msra.mxu0 %v2065
      %2084 = vmatprep.subr.mxu0 0.0
      %2085 = vmatpush1.msra.mxu0 0.0
      %2086 = vmatprep.subr.mxu0 0.0
      %2087 = vmatpush1.msra.mxu0 0.0
      %2088 = vmatprep.subr.mxu0 0.0
      %2089 = vmatpush1.msra.mxu0 0.0
      %2090 = vmatprep.subr.mxu0 0.0
      %2091 = vmatpush1.msra.mxu0 0.0
      %2092 = vmatprep.subr.mxu0 0.0
      %2093 = vmatpush1.msra.mxu0 0.0
      %2094 = vmatprep.subr.mxu0 0.0
      %2095 = vmatpush1.msra.mxu0 0.0
      %2096 = vmatprep.subr.mxu0 0.0
      %2097 = vmatpush1.msra.mxu0 0.0
      %2098 = vmatprep.subr.mxu0 0.0
      %2099 = vmatpush1.msra.mxu0 0.0
      %2100 = vmatprep.subr.mxu0 0.0
      %2101 = vmatpush1.msra.mxu0 0.0
      %2102 = vmatprep.subr.mxu0 0.0
      %2103 = vmatpush1.msra.mxu0 0.0
      %2104 = vmatprep.subr.mxu0 0.0
      %2105 = vmatpush1.msra.mxu0 0.0
      %2106 = vmatprep.subr.mxu0 0.0
      %2107 = vmatpush1.msra.mxu0 0.0
      %2108 = vmatprep.subr.mxu0 0.0
      %2109 = vmatpush1.msra.mxu0 0.0
      %2110 = vmatprep.subr.mxu0 0.0
      %2111 = vmatpush1.msra.mxu0 0.0
      %2112 = vmatprep.subr.mxu0 0.0
      %2113 = vmatpush1.msra.mxu0 0.0
      %2114 = vmatprep.subr.mxu0 0.0
      %2115 = vmatpush1.msra.mxu0 0.0
      %2116 = vmatprep.subr.mxu0 0.0
      %2117 = vmatpush1.msra.mxu0 0.0
      %2118 = vmatprep.subr.mxu0 0.0
      %2119 = vmatpush1.msra.mxu0 0.0
      %2120 = vmatprep.subr.mxu0 0.0
      %2121 = vmatpush1.msra.mxu0 0.0
      %2122 = vmatprep.subr.mxu0 0.0
      %2123 = vmatpush1.msra.mxu0 0.0
      %2124 = vmatprep.subr.mxu0 0.0
      %2125 = vmatpush1.msra.mxu0 0.0
      %2126 = vmatprep.subr.mxu0 0.0
      %2127 = vmatpush1.msra.mxu0 0.0
      %2128 = vmatprep.subr.mxu0 0.0
      %2129 = vmatpush1.msra.mxu0 0.0
      %2130 = vmatprep.subr.mxu0 0.0
      %2131 = vmatpush1.msra.mxu0 0.0
      %2132 = vmatprep.subr.mxu0 0.0
      %2133 = vmatpush1.msra.mxu0 0.0
      %2134 = vmatprep.subr.mxu0 0.0
      %2135 = vmatpush1.msra.mxu0 0.0
      %2136 = vmatprep.subr.mxu0 0.0
      %2137 = vmatpush1.msra.mxu0 0.0
      %2138 = vmatprep.subr.mxu0 0.0
      %2139 = vmatpush1.msra.mxu0 0.0
      %2140 = vmatprep.subr.mxu0 0.0
      %2141 = vmatpush1.msra.mxu0 0.0
      %2142 = vmatprep.subr.mxu0 0.0
      %2143 = vmatpush1.msra.mxu0 0.0
      %2144 = vmatprep.mubr.f32.mxu0 0.0
      %2145 = vmatmul.mubr.f32.gmra.mrb[0].mxu0 %v2072
      %v2146 = vpop.f32.mrb[0].mxu0
      %v2147 = vadd.f32 0.0, %v2146
      %v2148 = vpop.f32.mrb[0].mxu0
      %v2149 = vadd.f32 0.0, %v2148
      %2150 = vmatprep.mubr.f32.mxu0 0.0
      %2151 = vmatmul.mubr.f32.gmra.mrb[0].mxu0 %v2075
      %v2152 = vpop.f32.mrb[0].mxu0
      %v2153 = vadd.f32 0.0, %v2152
      %v2154 = vpop.f32.mrb[0].mxu0
      %v2155 = vadd.f32 0.0, %v2154
      %2156 = vmatprep.mubr.f32.mxu0 0.0
      %2157 = vmatmul.mubr.f32.gmra.mrb[0].mxu0 %v2078
      %v2158 = vpop.f32.mrb[0].mxu0
      %v2159 = vadd.f32 0.0, %v2158
      %v2160 = vpop.f32.mrb[0].mxu0
      %v2161 = vadd.f32 0.0, %v2160
      %2162 = vdwg.mxu0
      %v2163 = vadd.f32 %v2031, %v2147
      %v2164 = vadd.f32 %v2032, %v2149
      %v2165 = vadd.f32 %v2033, %v2153
      %v2166 = vadd.f32 %v2034, %v2155
      %v2167 = vadd.f32 %v2035, %v2159
      %v2168 = vadd.f32 %v2036, %v2161
      %2169 = vrot.lane.b32.xlu0 %v358, 126
      %v2170 = vpop.permute.xlu0 %2169
      %2171 = vrot.lane.b32.xlu0 %v360, 126
      %v2172 = vpop.permute.xlu0 %2171
      %2173 = vrot.lane.b32.xlu0 %v359, 126
      %v2174 = vpop.permute.xlu0 %2173
      %2175 = vrot.lane.b32.xlu0 %v361, 126
      %v2176 = vpop.permute.xlu0 %2175
      %vm2177 = vcmp.lt.s32.totalorder %v371, 126
      %v2178 = vsel %vm2177, %v2170, %v2174
      %v2179 = vsel %vm2177, %v2172, %v2176
      %v2180 = vsel %vm2177, %v2174, %v2170
      %v2181 = vsel %vm2177, %v2176, %v2172
      %s2182 = scalar_lea.vmem %s5, 28
      %v2183 = vld [vmem:[%s2182] sm:$0x3]
      %v2185 = vlaneseq
      %v2186 = vshrl.u32 %v2185, 7
      %v2187 = vsub.s32 0, %v2186
      %v2188 = vrot.slane %v2183, %v2187
      %v2189 = vlaneseq
      %v2190 = vshrl.u32 %v2189, 7
      %v2191 = vsub.s32 1, %v2190
      %v2192 = vrot.slane %v2183, %v2191
      %v2195 = vmul.f32 %v2178, %v2188
      %v2196 = vmul.f32 %v2180, %v2192
      %v2197 = vmul.f32 %v2179, %v2188
      %v2198 = vmul.f32 %v2181, %v2192
      %s2199 = scalar_lea.vmem %s3, 336
      %v2200 = vld [vmem:[%s2199] sm:$0xff]
      %v2201 = vld [vmem:[%s2199 + $0x8] sm:$0xff]
      %v2202 = vld [vmem:[%s2199 + $0x10] sm:$0xf]
      %v2204 = vsel %vm430, %v2200, 0
      %v2207 = vsel %vm430, %v2201, 0
      %v2210 = vsel %vm430, %v2202, 0
      %2212 = vmatprep.subr.mxu0 %v2196
      %2213 = vmatpush1.msra.mxu0 %v2195
      %2214 = vmatprep.subr.mxu0 %v2198
      %2215 = vmatpush1.msra.mxu0 %v2197
      %2216 = vmatprep.subr.mxu0 0.0
      %2217 = vmatpush1.msra.mxu0 0.0
      %2218 = vmatprep.subr.mxu0 0.0
      %2219 = vmatpush1.msra.mxu0 0.0
      %2220 = vmatprep.subr.mxu0 0.0
      %2221 = vmatpush1.msra.mxu0 0.0
      %2222 = vmatprep.subr.mxu0 0.0
      %2223 = vmatpush1.msra.mxu0 0.0
      %2224 = vmatprep.subr.mxu0 0.0
      %2225 = vmatpush1.msra.mxu0 0.0
      %2226 = vmatprep.subr.mxu0 0.0
      %2227 = vmatpush1.msra.mxu0 0.0
      %2228 = vmatprep.subr.mxu0 0.0
      %2229 = vmatpush1.msra.mxu0 0.0
      %2230 = vmatprep.subr.mxu0 0.0
      %2231 = vmatpush1.msra.mxu0 0.0
      %2232 = vmatprep.subr.mxu0 0.0
      %2233 = vmatpush1.msra.mxu0 0.0
      %2234 = vmatprep.subr.mxu0 0.0
      %2235 = vmatpush1.msra.mxu0 0.0
      %2236 = vmatprep.subr.mxu0 0.0
      %2237 = vmatpush1.msra.mxu0 0.0
      %2238 = vmatprep.subr.mxu0 0.0
      %2239 = vmatpush1.msra.mxu0 0.0
      %2240 = vmatprep.subr.mxu0 0.0
      %2241 = vmatpush1.msra.mxu0 0.0
      %2242 = vmatprep.subr.mxu0 0.0
      %2243 = vmatpush1.msra.mxu0 0.0
      %2244 = vmatprep.subr.mxu0 0.0
      %2245 = vmatpush1.msra.mxu0 0.0
      %2246 = vmatprep.subr.mxu0 0.0
      %2247 = vmatpush1.msra.mxu0 0.0
      %2248 = vmatprep.subr.mxu0 0.0
      %2249 = vmatpush1.msra.mxu0 0.0
      %2250 = vmatprep.subr.mxu0 0.0
      %2251 = vmatpush1.msra.mxu0 0.0
      %2252 = vmatprep.subr.mxu0 0.0
      %2253 = vmatpush1.msra.mxu0 0.0
      %2254 = vmatprep.subr.mxu0 0.0
      %2255 = vmatpush1.msra.mxu0 0.0
      %2256 = vmatprep.subr.mxu0 0.0
      %2257 = vmatpush1.msra.mxu0 0.0
      %2258 = vmatprep.subr.mxu0 0.0
      %2259 = vmatpush1.msra.mxu0 0.0
      %2260 = vmatprep.subr.mxu0 0.0
      %2261 = vmatpush1.msra.mxu0 0.0
      %2262 = vmatprep.subr.mxu0 0.0
      %2263 = vmatpush1.msra.mxu0 0.0
      %2264 = vmatprep.subr.mxu0 0.0
      %2265 = vmatpush1.msra.mxu0 0.0
      %2266 = vmatprep.subr.mxu0 0.0
      %2267 = vmatpush1.msra.mxu0 0.0
      %2268 = vmatprep.subr.mxu0 0.0
      %2269 = vmatpush1.msra.mxu0 0.0
      %2270 = vmatprep.subr.mxu0 0.0
      %2271 = vmatpush1.msra.mxu0 0.0
      %2272 = vmatprep.subr.mxu0 0.0
      %2273 = vmatpush1.msra.mxu0 0.0
      %2274 = vmatprep.subr.mxu0 0.0
      %2275 = vmatpush1.msra.mxu0 0.0
      %2276 = vmatprep.mubr.f32.mxu0 0.0
      %2277 = vmatmul.mubr.f32.gmra.mrb[0].mxu0 %v2204
      %v2278 = vpop.f32.mrb[0].mxu0
      %v2279 = vadd.f32 0.0, %v2278
      %v2280 = vpop.f32.mrb[0].mxu0
      %v2281 = vadd.f32 0.0, %v2280
      %2282 = vmatprep.mubr.f32.mxu0 0.0
      %2283 = vmatmul.mubr.f32.gmra.mrb[0].mxu0 %v2207
      %v2284 = vpop.f32.mrb[0].mxu0
      %v2285 = vadd.f32 0.0, %v2284
      %v2286 = vpop.f32.mrb[0].mxu0
      %v2287 = vadd.f32 0.0, %v2286
      %2288 = vmatprep.mubr.f32.mxu0 0.0
      %2289 = vmatmul.mubr.f32.gmra.mrb[0].mxu0 %v2210
      %v2290 = vpop.f32.mrb[0].mxu0
      %v2291 = vadd.f32 0.0, %v2290
      %v2292 = vpop.f32.mrb[0].mxu0
      %v2293 = vadd.f32 0.0, %v2292
      %2294 = vdwg.mxu0
      %v2295 = vadd.f32 %v2163, %v2279
      %v2296 = vadd.f32 %v2164, %v2281
      %v2297 = vadd.f32 %v2165, %v2285
      %v2298 = vadd.f32 %v2166, %v2287
      %v2299 = vadd.f32 %v2167, %v2291
      %v2300 = vadd.f32 %v2168, %v2293
      %2301 = vrot.lane.b32.xlu0 %v358, 114
      %v2302 = vpop.permute.xlu0 %2301
      %2303 = vrot.lane.b32.xlu0 %v360, 114
      %v2304 = vpop.permute.xlu0 %2303
      %2305 = vrot.lane.b32.xlu0 %v359, 114
      %v2306 = vpop.permute.xlu0 %2305
      %2307 = vrot.lane.b32.xlu0 %v361, 114
      %v2308 = vpop.permute.xlu0 %2307
      %vm2309 = vcmp.lt.s32.totalorder %v371, 114
      %v2310 = vsel %vm2309, %v2302, %v2306
      %v2311 = vsel %vm2309, %v2304, %v2308
      %v2312 = vsel %vm2309, %v2306, %v2302
      %v2313 = vsel %vm2309, %v2308, %v2304
      %s2314 = scalar_lea.vmem %s5, 30
      %v2315 = vld [vmem:[%s2314] sm:$0x3]
      %v2317 = vlaneseq
      %v2318 = vshrl.u32 %v2317, 7
      %v2319 = vsub.s32 0, %v2318
      %v2320 = vrot.slane %v2315, %v2319
      %v2321 = vlaneseq
      %v2322 = vshrl.u32 %v2321, 7
      %v2323 = vsub.s32 1, %v2322
      %v2324 = vrot.slane %v2315, %v2323
      %v2327 = vmul.f32 %v2310, %v2320
      %v2328 = vmul.f32 %v2312, %v2324
      %v2329 = vmul.f32 %v2311, %v2320
      %v2330 = vmul.f32 %v2313, %v2324
      %s2331 = scalar_lea.vmem %s3, 360
      %v2332 = vld [vmem:[%s2331] sm:$0xff]
      %v2333 = vld [vmem:[%s2331 + $0x8] sm:$0xff]
      %v2334 = vld [vmem:[%s2331 + $0x10] sm:$0xf]
      %v2336 = vsel %vm430, %v2332, 0
      %v2339 = vsel %vm430, %v2333, 0
      %v2342 = vsel %vm430, %v2334, 0
      %2344 = vmatprep.subr.mxu0 %v2328
      %2345 = vmatpush1.msra.mxu0 %v2327
      %2346 = vmatprep.subr.mxu0 %v2330
      %2347 = vmatpush1.msra.mxu0 %v2329
      %2348 = vmatprep.subr.mxu0 0.0
      %2349 = vmatpush1.msra.mxu0 0.0
      %2350 = vmatprep.subr.mxu0 0.0
      %2351 = vmatpush1.msra.mxu0 0.0
      %2352 = vmatprep.subr.mxu0 0.0
      %2353 = vmatpush1.msra.mxu0 0.0
      %2354 = vmatprep.subr.mxu0 0.0
      %2355 = vmatpush1.msra.mxu0 0.0
      %2356 = vmatprep.subr.mxu0 0.0
      %2357 = vmatpush1.msra.mxu0 0.0
      %2358 = vmatprep.subr.mxu0 0.0
      %2359 = vmatpush1.msra.mxu0 0.0
      %2360 = vmatprep.subr.mxu0 0.0
      %2361 = vmatpush1.msra.mxu0 0.0
      %2362 = vmatprep.subr.mxu0 0.0
      %2363 = vmatpush1.msra.mxu0 0.0
      %2364 = vmatprep.subr.mxu0 0.0
      %2365 = vmatpush1.msra.mxu0 0.0
      %2366 = vmatprep.subr.mxu0 0.0
      %2367 = vmatpush1.msra.mxu0 0.0
      %2368 = vmatprep.subr.mxu0 0.0
      %2369 = vmatpush1.msra.mxu0 0.0
      %2370 = vmatprep.subr.mxu0 0.0
      %2371 = vmatpush1.msra.mxu0 0.0
      %2372 = vmatprep.subr.mxu0 0.0
      %2373 = vmatpush1.msra.mxu0 0.0
      %2374 = vmatprep.subr.mxu0 0.0
      %2375 = vmatpush1.msra.mxu0 0.0
      %2376 = vmatprep.subr.mxu0 0.0
      %2377 = vmatpush1.msra.mxu0 0.0
      %2378 = vmatprep.subr.mxu0 0.0
      %2379 = vmatpush1.msra.mxu0 0.0
      %2380 = vmatprep.subr.mxu0 0.0
      %2381 = vmatpush1.msra.mxu0 0.0
      %2382 = vmatprep.subr.mxu0 0.0
      %2383 = vmatpush1.msra.mxu0 0.0
      %2384 = vmatprep.subr.mxu0 0.0
      %2385 = vmatpush1.msra.mxu0 0.0
      %2386 = vmatprep.subr.mxu0 0.0
      %2387 = vmatpush1.msra.mxu0 0.0
      %2388 = vmatprep.subr.mxu0 0.0
      %2389 = vmatpush1.msra.mxu0 0.0
      %2390 = vmatprep.subr.mxu0 0.0
      %2391 = vmatpush1.msra.mxu0 0.0
      %2392 = vmatprep.subr.mxu0 0.0
      %2393 = vmatpush1.msra.mxu0 0.0
      %2394 = vmatprep.subr.mxu0 0.0
      %2395 = vmatpush1.msra.mxu0 0.0
      %2396 = vmatprep.subr.mxu0 0.0
      %2397 = vmatpush1.msra.mxu0 0.0
      %2398 = vmatprep.subr.mxu0 0.0
      %2399 = vmatpush1.msra.mxu0 0.0
      %2400 = vmatprep.subr.mxu0 0.0
      %2401 = vmatpush1.msra.mxu0 0.0
      %2402 = vmatprep.subr.mxu0 0.0
      %2403 = vmatpush1.msra.mxu0 0.0
      %2404 = vmatprep.subr.mxu0 0.0
      %2405 = vmatpush1.msra.mxu0 0.0
      %2406 = vmatprep.subr.mxu0 0.0
      %2407 = vmatpush1.msra.mxu0 0.0
      %2408 = vmatprep.mubr.f32.mxu0 0.0
      %2409 = vmatmul.mubr.f32.gmra.mrb[0].mxu0 %v2336
      %v2410 = vpop.f32.mrb[0].mxu0
      %v2411 = vadd.f32 0.0, %v2410
      %v2412 = vpop.f32.mrb[0].mxu0
      %v2413 = vadd.f32 0.0, %v2412
      %2414 = vmatprep.mubr.f32.mxu0 0.0
      %2415 = vmatmul.mubr.f32.gmra.mrb[0].mxu0 %v2339
      %v2416 = vpop.f32.mrb[0].mxu0
      %v2417 = vadd.f32 0.0, %v2416
      %v2418 = vpop.f32.mrb[0].mxu0
      %v2419 = vadd.f32 0.0, %v2418
      %2420 = vmatprep.mubr.f32.mxu0 0.0
      %2421 = vmatmul.mubr.f32.gmra.mrb[0].mxu0 %v2342
      %v2422 = vpop.f32.mrb[0].mxu0
      %v2423 = vadd.f32 0.0, %v2422
      %v2424 = vpop.f32.mrb[0].mxu0
      %v2425 = vadd.f32 0.0, %v2424
      %2426 = vdwg.mxu0
      %v2427 = vadd.f32 %v2295, %v2411
      %v2428 = vadd.f32 %v2296, %v2413
      %v2429 = vadd.f32 %v2297, %v2417
      %v2430 = vadd.f32 %v2298, %v2419
      %v2431 = vadd.f32 %v2299, %v2423
      %v2432 = vadd.f32 %v2300, %v2425
      %2433 = vrot.lane.b32.xlu0 %v358, 113
      %v2434 = vpop.permute.xlu0 %2433
      %2435 = vrot.lane.b32.xlu0 %v360, 113
      %v2436 = vpop.permute.xlu0 %2435
      %2437 = vrot.lane.b32.xlu0 %v359, 113
      %v2438 = vpop.permute.xlu0 %2437
      %2439 = vrot.lane.b32.xlu0 %v361, 113
      %v2440 = vpop.permute.xlu0 %2439
      %vm2441 = vcmp.lt.s32.totalorder %v371, 113
      %v2442 = vsel %vm2441, %v2434, %v2438
      %v2443 = vsel %vm2441, %v2436, %v2440
      %v2444 = vsel %vm2441, %v2438, %v2434
      %v2445 = vsel %vm2441, %v2440, %v2436
      %s2446 = scalar_lea.vmem %s5, 32
      %v2447 = vld [vmem:[%s2446] sm:$0x3]
      %v2449 = vlaneseq
      %v2450 = vshrl.u32 %v2449, 7
      %v2451 = vsub.s32 0, %v2450
      %v2452 = vrot.slane %v2447, %v2451
      %v2453 = vlaneseq
      %v2454 = vshrl.u32 %v2453, 7
      %v2455 = vsub.s32 1, %v2454
      %v2456 = vrot.slane %v2447, %v2455
      %v2459 = vmul.f32 %v2442, %v2452
      %v2460 = vmul.f32 %v2444, %v2456
      %v2461 = vmul.f32 %v2443, %v2452
      %v2462 = vmul.f32 %v2445, %v2456
      %s2463 = scalar_lea.vmem %s3, 384
      %v2464 = vld [vmem:[%s2463] sm:$0xff]
      %v2465 = vld [vmem:[%s2463 + $0x8] sm:$0xff]
      %v2466 = vld [vmem:[%s2463 + $0x10] sm:$0xf]
      %v2468 = vsel %vm430, %v2464, 0
      %v2471 = vsel %vm430, %v2465, 0
      %v2474 = vsel %vm430, %v2466, 0
      %2476 = vmatprep.subr.mxu0 %v2460
      %2477 = vmatpush1.msra.mxu0 %v2459
      %2478 = vmatprep.subr.mxu0 %v2462
      %2479 = vmatpush1.msra.mxu0 %v2461
      %2480 = vmatprep.subr.mxu0 0.0
      %2481 = vmatpush1.msra.mxu0 0.0
      %2482 = vmatprep.subr.mxu0 0.0
      %2483 = vmatpush1.msra.mxu0 0.0
      %2484 = vmatprep.subr.mxu0 0.0
      %2485 = vmatpush1.msra.mxu0 0.0
      %2486 = vmatprep.subr.mxu0 0.0
      %2487 = vmatpush1.msra.mxu0 0.0
      %2488 = vmatprep.subr.mxu0 0.0
      %2489 = vmatpush1.msra.mxu0 0.0
      %2490 = vmatprep.subr.mxu0 0.0
      %2491 = vmatpush1.msra.mxu0 0.0
      %2492 = vmatprep.subr.mxu0 0.0
      %2493 = vmatpush1.msra.mxu0 0.0
      %2494 = vmatprep.subr.mxu0 0.0
      %2495 = vmatpush1.msra.mxu0 0.0
      %2496 = vmatprep.subr.mxu0 0.0
      %2497 = vmatpush1.msra.mxu0 0.0
      %2498 = vmatprep.subr.mxu0 0.0
      %2499 = vmatpush1.msra.mxu0 0.0
      %2500 = vmatprep.subr.mxu0 0.0
      %2501 = vmatpush1.msra.mxu0 0.0
      %2502 = vmatprep.subr.mxu0 0.0
      %2503 = vmatpush1.msra.mxu0 0.0
      %2504 = vmatprep.subr.mxu0 0.0
      %2505 = vmatpush1.msra.mxu0 0.0
      %2506 = vmatprep.subr.mxu0 0.0
      %2507 = vmatpush1.msra.mxu0 0.0
      %2508 = vmatprep.subr.mxu0 0.0
      %2509 = vmatpush1.msra.mxu0 0.0
      %2510 = vmatprep.subr.mxu0 0.0
      %2511 = vmatpush1.msra.mxu0 0.0
      %2512 = vmatprep.subr.mxu0 0.0
      %2513 = vmatpush1.msra.mxu0 0.0
      %2514 = vmatprep.subr.mxu0 0.0
      %2515 = vmatpush1.msra.mxu0 0.0
      %2516 = vmatprep.subr.mxu0 0.0
      %2517 = vmatpush1.msra.mxu0 0.0
      %2518 = vmatprep.subr.mxu0 0.0
      %2519 = vmatpush1.msra.mxu0 0.0
      %2520 = vmatprep.subr.mxu0 0.0
      %2521 = vmatpush1.msra.mxu0 0.0
      %2522 = vmatprep.subr.mxu0 0.0
      %2523 = vmatpush1.msra.mxu0 0.0
      %2524 = vmatprep.subr.mxu0 0.0
      %2525 = vmatpush1.msra.mxu0 0.0
      %2526 = vmatprep.subr.mxu0 0.0
      %2527 = vmatpush1.msra.mxu0 0.0
      %2528 = vmatprep.subr.mxu0 0.0
      %2529 = vmatpush1.msra.mxu0 0.0
      %2530 = vmatprep.subr.mxu0 0.0
      %2531 = vmatpush1.msra.mxu0 0.0
      %2532 = vmatprep.subr.mxu0 0.0
      %2533 = vmatpush1.msra.mxu0 0.0
      %2534 = vmatprep.subr.mxu0 0.0
      %2535 = vmatpush1.msra.mxu0 0.0
      %2536 = vmatprep.subr.mxu0 0.0
      %2537 = vmatpush1.msra.mxu0 0.0
      %2538 = vmatprep.subr.mxu0 0.0
      %2539 = vmatpush1.msra.mxu0 0.0
      %2540 = vmatprep.mubr.f32.mxu0 0.0
      %2541 = vmatmul.mubr.f32.gmra.mrb[0].mxu0 %v2468
      %v2542 = vpop.f32.mrb[0].mxu0
      %v2543 = vadd.f32 0.0, %v2542
      %v2544 = vpop.f32.mrb[0].mxu0
      %v2545 = vadd.f32 0.0, %v2544
      %2546 = vmatprep.mubr.f32.mxu0 0.0
      %2547 = vmatmul.mubr.f32.gmra.mrb[0].mxu0 %v2471
      %v2548 = vpop.f32.mrb[0].mxu0
      %v2549 = vadd.f32 0.0, %v2548
      %v2550 = vpop.f32.mrb[0].mxu0
      %v2551 = vadd.f32 0.0, %v2550
      %2552 = vmatprep.mubr.f32.mxu0 0.0
      %2553 = vmatmul.mubr.f32.gmra.mrb[0].mxu0 %v2474
      %v2554 = vpop.f32.mrb[0].mxu0
      %v2555 = vadd.f32 0.0, %v2554
      %v2556 = vpop.f32.mrb[0].mxu0
      %v2557 = vadd.f32 0.0, %v2556
      %2558 = vdwg.mxu0
      %v2559 = vadd.f32 %v2427, %v2543
      %v2560 = vadd.f32 %v2428, %v2545
      %v2561 = vadd.f32 %v2429, %v2549
      %v2562 = vadd.f32 %v2430, %v2551
      %v2563 = vadd.f32 %v2431, %v2555
      %v2564 = vadd.f32 %v2432, %v2557
      %2565 = vrot.lane.b32.xlu0 %v358, 112
      %v2566 = vpop.permute.xlu0 %2565
      %2567 = vrot.lane.b32.xlu0 %v360, 112
      %v2568 = vpop.permute.xlu0 %2567
      %2569 = vrot.lane.b32.xlu0 %v359, 112
      %v2570 = vpop.permute.xlu0 %2569
      %2571 = vrot.lane.b32.xlu0 %v361, 112
      %v2572 = vpop.permute.xlu0 %2571
      %vm2573 = vcmp.lt.s32.totalorder %v371, 112
      %v2574 = vsel %vm2573, %v2566, %v2570
      %v2575 = vsel %vm2573, %v2568, %v2572
      %v2576 = vsel %vm2573, %v2570, %v2566
      %v2577 = vsel %vm2573, %v2572, %v2568
      %s2578 = scalar_lea.vmem %s5, 34
      %v2579 = vld [vmem:[%s2578] sm:$0x3]
      %v2581 = vlaneseq
      %v2582 = vshrl.u32 %v2581, 7
      %v2583 = vsub.s32 0, %v2582
      %v2584 = vrot.slane %v2579, %v2583
      %v2585 = vlaneseq
      %v2586 = vshrl.u32 %v2585, 7
      %v2587 = vsub.s32 1, %v2586
      %v2588 = vrot.slane %v2579, %v2587
      %v2591 = vmul.f32 %v2574, %v2584
      %v2592 = vmul.f32 %v2576, %v2588
      %v2593 = vmul.f32 %v2575, %v2584
      %v2594 = vmul.f32 %v2577, %v2588
      %s2595 = scalar_lea.vmem %s3, 408
      %v2596 = vld [vmem:[%s2595] sm:$0xff]
      %v2597 = vld [vmem:[%s2595 + $0x8] sm:$0xff]
      %v2598 = vld [vmem:[%s2595 + $0x10] sm:$0xf]
      %v2600 = vsel %vm430, %v2596, 0
      %v2603 = vsel %vm430, %v2597, 0
      %v2606 = vsel %vm430, %v2598, 0
      %2608 = vmatprep.subr.mxu0 %v2592
      %2609 = vmatpush1.msra.mxu0 %v2591
      %2610 = vmatprep.subr.mxu0 %v2594
      %2611 = vmatpush1.msra.mxu0 %v2593
      %2612 = vmatprep.subr.mxu0 0.0
      %2613 = vmatpush1.msra.mxu0 0.0
      %2614 = vmatprep.subr.mxu0 0.0
      %2615 = vmatpush1.msra.mxu0 0.0
      %2616 = vmatprep.subr.mxu0 0.0
      %2617 = vmatpush1.msra.mxu0 0.0
      %2618 = vmatprep.subr.mxu0 0.0
      %2619 = vmatpush1.msra.mxu0 0.0
      %2620 = vmatprep.subr.mxu0 0.0
      %2621 = vmatpush1.msra.mxu0 0.0
      %2622 = vmatprep.subr.mxu0 0.0
      %2623 = vmatpush1.msra.mxu0 0.0
      %2624 = vmatprep.subr.mxu0 0.0
      %2625 = vmatpush1.msra.mxu0 0.0
      %2626 = vmatprep.subr.mxu0 0.0
      %2627 = vmatpush1.msra.mxu0 0.0
      %2628 = vmatprep.subr.mxu0 0.0
      %2629 = vmatpush1.msra.mxu0 0.0
      %2630 = vmatprep.subr.mxu0 0.0
      %2631 = vmatpush1.msra.mxu0 0.0
      %2632 = vmatprep.subr.mxu0 0.0
      %2633 = vmatpush1.msra.mxu0 0.0
      %2634 = vmatprep.subr.mxu0 0.0
      %2635 = vmatpush1.msra.mxu0 0.0
      %2636 = vmatprep.subr.mxu0 0.0
      %2637 = vmatpush1.msra.mxu0 0.0
      %2638 = vmatprep.subr.mxu0 0.0
      %2639 = vmatpush1.msra.mxu0 0.0
      %2640 = vmatprep.subr.mxu0 0.0
      %2641 = vmatpush1.msra.mxu0 0.0
      %2642 = vmatprep.subr.mxu0 0.0
      %2643 = vmatpush1.msra.mxu0 0.0
      %2644 = vmatprep.subr.mxu0 0.0
      %2645 = vmatpush1.msra.mxu0 0.0
      %2646 = vmatprep.subr.mxu0 0.0
      %2647 = vmatpush1.msra.mxu0 0.0
      %2648 = vmatprep.subr.mxu0 0.0
      %2649 = vmatpush1.msra.mxu0 0.0
      %2650 = vmatprep.subr.mxu0 0.0
      %2651 = vmatpush1.msra.mxu0 0.0
      %2652 = vmatprep.subr.mxu0 0.0
      %2653 = vmatpush1.msra.mxu0 0.0
      %2654 = vmatprep.subr.mxu0 0.0
      %2655 = vmatpush1.msra.mxu0 0.0
      %2656 = vmatprep.subr.mxu0 0.0
      %2657 = vmatpush1.msra.mxu0 0.0
      %2658 = vmatprep.subr.mxu0 0.0
      %2659 = vmatpush1.msra.mxu0 0.0
      %2660 = vmatprep.subr.mxu0 0.0
      %2661 = vmatpush1.msra.mxu0 0.0
      %2662 = vmatprep.subr.mxu0 0.0
      %2663 = vmatpush1.msra.mxu0 0.0
      %2664 = vmatprep.subr.mxu0 0.0
      %2665 = vmatpush1.msra.mxu0 0.0
      %2666 = vmatprep.subr.mxu0 0.0
      %2667 = vmatpush1.msra.mxu0 0.0
      %2668 = vmatprep.subr.mxu0 0.0
      %2669 = vmatpush1.msra.mxu0 0.0
      %2670 = vmatprep.subr.mxu0 0.0
      %2671 = vmatpush1.msra.mxu0 0.0
      %2672 = vmatprep.mubr.f32.mxu0 0.0
      %2673 = vmatmul.mubr.f32.gmra.mrb[0].mxu0 %v2600
      %v2674 = vpop.f32.mrb[0].mxu0
      %v2675 = vadd.f32 0.0, %v2674
      %v2676 = vpop.f32.mrb[0].mxu0
      %v2677 = vadd.f32 0.0, %v2676
      %2678 = vmatprep.mubr.f32.mxu0 0.0
      %2679 = vmatmul.mubr.f32.gmra.mrb[0].mxu0 %v2603
      %v2680 = vpop.f32.mrb[0].mxu0
      %v2681 = vadd.f32 0.0, %v2680
      %v2682 = vpop.f32.mrb[0].mxu0
      %v2683 = vadd.f32 0.0, %v2682
      %2684 = vmatprep.mubr.f32.mxu0 0.0
      %2685 = vmatmul.mubr.f32.gmra.mrb[0].mxu0 %v2606
      %v2686 = vpop.f32.mrb[0].mxu0
      %v2687 = vadd.f32 0.0, %v2686
      %v2688 = vpop.f32.mrb[0].mxu0
      %v2689 = vadd.f32 0.0, %v2688
      %2690 = vdwg.mxu0
      %v2691 = vadd.f32 %v2559, %v2675
      %v2692 = vadd.f32 %v2560, %v2677
      %v2693 = vadd.f32 %v2561, %v2681
      %v2694 = vadd.f32 %v2562, %v2683
      %v2695 = vadd.f32 %v2563, %v2687
      %v2696 = vadd.f32 %v2564, %v2689
      %2697 = vrot.lane.b32.xlu0 %v358, 111
      %v2698 = vpop.permute.xlu0 %2697
      %2699 = vrot.lane.b32.xlu0 %v360, 111
      %v2700 = vpop.permute.xlu0 %2699
      %2701 = vrot.lane.b32.xlu0 %v359, 111
      %v2702 = vpop.permute.xlu0 %2701
      %2703 = vrot.lane.b32.xlu0 %v361, 111
      %v2704 = vpop.permute.xlu0 %2703
      %vm2705 = vcmp.lt.s32.totalorder %v371, 111
      %v2706 = vsel %vm2705, %v2698, %v2702
      %v2707 = vsel %vm2705, %v2700, %v2704
      %v2708 = vsel %vm2705, %v2702, %v2698
      %v2709 = vsel %vm2705, %v2704, %v2700
      %s2710 = scalar_lea.vmem %s5, 36
      %v2711 = vld [vmem:[%s2710] sm:$0x3]
      %v2713 = vlaneseq
      %v2714 = vshrl.u32 %v2713, 7
      %v2715 = vsub.s32 0, %v2714
      %v2716 = vrot.slane %v2711, %v2715
      %v2717 = vlaneseq
      %v2718 = vshrl.u32 %v2717, 7
      %v2719 = vsub.s32 1, %v2718
      %v2720 = vrot.slane %v2711, %v2719
      %v2723 = vmul.f32 %v2706, %v2716
      %v2724 = vmul.f32 %v2708, %v2720
      %v2725 = vmul.f32 %v2707, %v2716
      %v2726 = vmul.f32 %v2709, %v2720
      %s2727 = scalar_lea.vmem %s3, 432
      %v2728 = vld [vmem:[%s2727] sm:$0xff]
      %v2729 = vld [vmem:[%s2727 + $0x8] sm:$0xff]
      %v2730 = vld [vmem:[%s2727 + $0x10] sm:$0xf]
      %v2732 = vsel %vm430, %v2728, 0
      %v2735 = vsel %vm430, %v2729, 0
      %v2738 = vsel %vm430, %v2730, 0
      %2740 = vmatprep.subr.mxu0 %v2724
      %2741 = vmatpush1.msra.mxu0 %v2723
      %2742 = vmatprep.subr.mxu0 %v2726
      %2743 = vmatpush1.msra.mxu0 %v2725
      %2744 = vmatprep.subr.mxu0 0.0
      %2745 = vmatpush1.msra.mxu0 0.0
      %2746 = vmatprep.subr.mxu0 0.0
      %2747 = vmatpush1.msra.mxu0 0.0
      %2748 = vmatprep.subr.mxu0 0.0
      %2749 = vmatpush1.msra.mxu0 0.0
      %2750 = vmatprep.subr.mxu0 0.0
      %2751 = vmatpush1.msra.mxu0 0.0
      %2752 = vmatprep.subr.mxu0 0.0
      %2753 = vmatpush1.msra.mxu0 0.0
      %2754 = vmatprep.subr.mxu0 0.0
      %2755 = vmatpush1.msra.mxu0 0.0
      %2756 = vmatprep.subr.mxu0 0.0
      %2757 = vmatpush1.msra.mxu0 0.0
      %2758 = vmatprep.subr.mxu0 0.0
      %2759 = vmatpush1.msra.mxu0 0.0
      %2760 = vmatprep.subr.mxu0 0.0
      %2761 = vmatpush1.msra.mxu0 0.0
      %2762 = vmatprep.subr.mxu0 0.0
      %2763 = vmatpush1.msra.mxu0 0.0
      %2764 = vmatprep.subr.mxu0 0.0
      %2765 = vmatpush1.msra.mxu0 0.0
      %2766 = vmatprep.subr.mxu0 0.0
      %2767 = vmatpush1.msra.mxu0 0.0
      %2768 = vmatprep.subr.mxu0 0.0
      %2769 = vmatpush1.msra.mxu0 0.0
      %2770 = vmatprep.subr.mxu0 0.0
      %2771 = vmatpush1.msra.mxu0 0.0
      %2772 = vmatprep.subr.mxu0 0.0
      %2773 = vmatpush1.msra.mxu0 0.0
      %2774 = vmatprep.subr.mxu0 0.0
      %2775 = vmatpush1.msra.mxu0 0.0
      %2776 = vmatprep.subr.mxu0 0.0
      %2777 = vmatpush1.msra.mxu0 0.0
      %2778 = vmatprep.subr.mxu0 0.0
      %2779 = vmatpush1.msra.mxu0 0.0
      %2780 = vmatprep.subr.mxu0 0.0
      %2781 = vmatpush1.msra.mxu0 0.0
      %2782 = vmatprep.subr.mxu0 0.0
      %2783 = vmatpush1.msra.mxu0 0.0
      %2784 = vmatprep.subr.mxu0 0.0
      %2785 = vmatpush1.msra.mxu0 0.0
      %2786 = vmatprep.subr.mxu0 0.0
      %2787 = vmatpush1.msra.mxu0 0.0
      %2788 = vmatprep.subr.mxu0 0.0
      %2789 = vmatpush1.msra.mxu0 0.0
      %2790 = vmatprep.subr.mxu0 0.0
      %2791 = vmatpush1.msra.mxu0 0.0
      %2792 = vmatprep.subr.mxu0 0.0
      %2793 = vmatpush1.msra.mxu0 0.0
      %2794 = vmatprep.subr.mxu0 0.0
      %2795 = vmatpush1.msra.mxu0 0.0
      %2796 = vmatprep.subr.mxu0 0.0
      %2797 = vmatpush1.msra.mxu0 0.0
      %2798 = vmatprep.subr.mxu0 0.0
      %2799 = vmatpush1.msra.mxu0 0.0
      %2800 = vmatprep.subr.mxu0 0.0
      %2801 = vmatpush1.msra.mxu0 0.0
      %2802 = vmatprep.subr.mxu0 0.0
      %2803 = vmatpush1.msra.mxu0 0.0
      %2804 = vmatprep.mubr.f32.mxu0 0.0
      %2805 = vmatmul.mubr.f32.gmra.mrb[0].mxu0 %v2732
      %v2806 = vpop.f32.mrb[0].mxu0
      %v2807 = vadd.f32 0.0, %v2806
      %v2808 = vpop.f32.mrb[0].mxu0
      %v2809 = vadd.f32 0.0, %v2808
      %2810 = vmatprep.mubr.f32.mxu0 0.0
      %2811 = vmatmul.mubr.f32.gmra.mrb[0].mxu0 %v2735
      %v2812 = vpop.f32.mrb[0].mxu0
      %v2813 = vadd.f32 0.0, %v2812
      %v2814 = vpop.f32.mrb[0].mxu0
      %v2815 = vadd.f32 0.0, %v2814
      %2816 = vmatprep.mubr.f32.mxu0 0.0
      %2817 = vmatmul.mubr.f32.gmra.mrb[0].mxu0 %v2738
      %v2818 = vpop.f32.mrb[0].mxu0
      %v2819 = vadd.f32 0.0, %v2818
      %v2820 = vpop.f32.mrb[0].mxu0
      %v2821 = vadd.f32 0.0, %v2820
      %2822 = vdwg.mxu0
      %v2823 = vadd.f32 %v2691, %v2807
      %v2824 = vadd.f32 %v2692, %v2809
      %v2825 = vadd.f32 %v2693, %v2813
      %v2826 = vadd.f32 %v2694, %v2815
      %v2827 = vadd.f32 %v2695, %v2819
      %v2828 = vadd.f32 %v2696, %v2821
      %2829 = vrot.lane.b32.xlu0 %v358, 110
      %v2830 = vpop.permute.xlu0 %2829
      %2831 = vrot.lane.b32.xlu0 %v360, 110
      %v2832 = vpop.permute.xlu0 %2831
      %2833 = vrot.lane.b32.xlu0 %v359, 110
      %v2834 = vpop.permute.xlu0 %2833
      %2835 = vrot.lane.b32.xlu0 %v361, 110
      %v2836 = vpop.permute.xlu0 %2835
      %vm2837 = vcmp.lt.s32.totalorder %v371, 110
      %v2838 = vsel %vm2837, %v2830, %v2834
      %v2839 = vsel %vm2837, %v2832, %v2836
      %v2840 = vsel %vm2837, %v2834, %v2830
      %v2841 = vsel %vm2837, %v2836, %v2832
      %s2842 = scalar_lea.vmem %s5, 38
      %v2843 = vld [vmem:[%s2842] sm:$0x3]
      %v2845 = vlaneseq
      %v2846 = vshrl.u32 %v2845, 7
      %v2847 = vsub.s32 0, %v2846
      %v2848 = vrot.slane %v2843, %v2847
      %v2849 = vlaneseq
      %v2850 = vshrl.u32 %v2849, 7
      %v2851 = vsub.s32 1, %v2850
      %v2852 = vrot.slane %v2843, %v2851
      %v2855 = vmul.f32 %v2838, %v2848
      %v2856 = vmul.f32 %v2840, %v2852
      %v2857 = vmul.f32 %v2839, %v2848
      %v2858 = vmul.f32 %v2841, %v2852
      %s2859 = scalar_lea.vmem %s3, 456
      %v2860 = vld [vmem:[%s2859] sm:$0xff]
      %v2861 = vld [vmem:[%s2859 + $0x8] sm:$0xff]
      %v2862 = vld [vmem:[%s2859 + $0x10] sm:$0xf]
      %v2864 = vsel %vm430, %v2860, 0
      %v2867 = vsel %vm430, %v2861, 0
      %v2870 = vsel %vm430, %v2862, 0
      %2872 = vmatprep.subr.mxu0 %v2856
      %2873 = vmatpush1.msra.mxu0 %v2855
      %2874 = vmatprep.subr.mxu0 %v2858
      %2875 = vmatpush1.msra.mxu0 %v2857
      %2876 = vmatprep.subr.mxu0 0.0
      %2877 = vmatpush1.msra.mxu0 0.0
      %2878 = vmatprep.subr.mxu0 0.0
      %2879 = vmatpush1.msra.mxu0 0.0
      %2880 = vmatprep.subr.mxu0 0.0
      %2881 = vmatpush1.msra.mxu0 0.0
      %2882 = vmatprep.subr.mxu0 0.0
      %2883 = vmatpush1.msra.mxu0 0.0
      %2884 = vmatprep.subr.mxu0 0.0
      %2885 = vmatpush1.msra.mxu0 0.0
      %2886 = vmatprep.subr.mxu0 0.0
      %2887 = vmatpush1.msra.mxu0 0.0
      %2888 = vmatprep.subr.mxu0 0.0
      %2889 = vmatpush1.msra.mxu0 0.0
      %2890 = vmatprep.subr.mxu0 0.0
      %2891 = vmatpush1.msra.mxu0 0.0
      %2892 = vmatprep.subr.mxu0 0.0
      %2893 = vmatpush1.msra.mxu0 0.0
      %2894 = vmatprep.subr.mxu0 0.0
      %2895 = vmatpush1.msra.mxu0 0.0
      %2896 = vmatprep.subr.mxu0 0.0
      %2897 = vmatpush1.msra.mxu0 0.0
      %2898 = vmatprep.subr.mxu0 0.0
      %2899 = vmatpush1.msra.mxu0 0.0
      %2900 = vmatprep.subr.mxu0 0.0
      %2901 = vmatpush1.msra.mxu0 0.0
      %2902 = vmatprep.subr.mxu0 0.0
      %2903 = vmatpush1.msra.mxu0 0.0
      %2904 = vmatprep.subr.mxu0 0.0
      %2905 = vmatpush1.msra.mxu0 0.0
      %2906 = vmatprep.subr.mxu0 0.0
      %2907 = vmatpush1.msra.mxu0 0.0
      %2908 = vmatprep.subr.mxu0 0.0
      %2909 = vmatpush1.msra.mxu0 0.0
      %2910 = vmatprep.subr.mxu0 0.0
      %2911 = vmatpush1.msra.mxu0 0.0
      %2912 = vmatprep.subr.mxu0 0.0
      %2913 = vmatpush1.msra.mxu0 0.0
      %2914 = vmatprep.subr.mxu0 0.0
      %2915 = vmatpush1.msra.mxu0 0.0
      %2916 = vmatprep.subr.mxu0 0.0
      %2917 = vmatpush1.msra.mxu0 0.0
      %2918 = vmatprep.subr.mxu0 0.0
      %2919 = vmatpush1.msra.mxu0 0.0
      %2920 = vmatprep.subr.mxu0 0.0
      %2921 = vmatpush1.msra.mxu0 0.0
      %2922 = vmatprep.subr.mxu0 0.0
      %2923 = vmatpush1.msra.mxu0 0.0
      %2924 = vmatprep.subr.mxu0 0.0
      %2925 = vmatpush1.msra.mxu0 0.0
      %2926 = vmatprep.subr.mxu0 0.0
      %2927 = vmatpush1.msra.mxu0 0.0
      %2928 = vmatprep.subr.mxu0 0.0
      %2929 = vmatpush1.msra.mxu0 0.0
      %2930 = vmatprep.subr.mxu0 0.0
      %2931 = vmatpush1.msra.mxu0 0.0
      %2932 = vmatprep.subr.mxu0 0.0
      %2933 = vmatpush1.msra.mxu0 0.0
      %2934 = vmatprep.subr.mxu0 0.0
      %2935 = vmatpush1.msra.mxu0 0.0
      %2936 = vmatprep.mubr.f32.mxu0 0.0
      %2937 = vmatmul.mubr.f32.gmra.mrb[0].mxu0 %v2864
      %v2938 = vpop.f32.mrb[0].mxu0
      %v2939 = vadd.f32 0.0, %v2938
      %v2940 = vpop.f32.mrb[0].mxu0
      %v2941 = vadd.f32 0.0, %v2940
      %2942 = vmatprep.mubr.f32.mxu0 0.0
      %2943 = vmatmul.mubr.f32.gmra.mrb[0].mxu0 %v2867
      %v2944 = vpop.f32.mrb[0].mxu0
      %v2945 = vadd.f32 0.0, %v2944
      %v2946 = vpop.f32.mrb[0].mxu0
      %v2947 = vadd.f32 0.0, %v2946
      %2948 = vmatprep.mubr.f32.mxu0 0.0
      %2949 = vmatmul.mubr.f32.gmra.mrb[0].mxu0 %v2870
      %v2950 = vpop.f32.mrb[0].mxu0
      %v2951 = vadd.f32 0.0, %v2950
      %v2952 = vpop.f32.mrb[0].mxu0
      %v2953 = vadd.f32 0.0, %v2952
      %2954 = vdwg.mxu0
      %v2955 = vadd.f32 %v2823, %v2939
      %v2956 = vadd.f32 %v2824, %v2941
      %v2957 = vadd.f32 %v2825, %v2945
      %v2958 = vadd.f32 %v2826, %v2947
      %v2959 = vadd.f32 %v2827, %v2951
      %v2960 = vadd.f32 %v2828, %v2953
      %2961 = vrot.lane.b32.xlu0 %v358, 98
      %v2962 = vpop.permute.xlu0 %2961
      %2963 = vrot.lane.b32.xlu0 %v360, 98
      %v2964 = vpop.permute.xlu0 %2963
      %2965 = vrot.lane.b32.xlu0 %v359, 98
      %v2966 = vpop.permute.xlu0 %2965
      %2967 = vrot.lane.b32.xlu0 %v361, 98
      %v2968 = vpop.permute.xlu0 %2967
      %vm2969 = vcmp.lt.s32.totalorder %v371, 98
      %v2970 = vsel %vm2969, %v2962, %v2966
      %v2971 = vsel %vm2969, %v2964, %v2968
      %v2972 = vsel %vm2969, %v2966, %v2962
      %v2973 = vsel %vm2969, %v2968, %v2964
      %s2974 = scalar_lea.vmem %s5, 40
      %v2975 = vld [vmem:[%s2974] sm:$0x3]
      %v2977 = vlaneseq
      %v2978 = vshrl.u32 %v2977, 7
      %v2979 = vsub.s32 0, %v2978
      %v2980 = vrot.slane %v2975, %v2979
      %v2981 = vlaneseq
      %v2982 = vshrl.u32 %v2981, 7
      %v2983 = vsub.s32 1, %v2982
      %v2984 = vrot.slane %v2975, %v2983
      %v2987 = vmul.f32 %v2970, %v2980
      %v2988 = vmul.f32 %v2972, %v2984
      %v2989 = vmul.f32 %v2971, %v2980
      %v2990 = vmul.f32 %v2973, %v2984
      %s2991 = scalar_lea.vmem %s3, 480
      %v2992 = vld [vmem:[%s2991] sm:$0xff]
      %v2993 = vld [vmem:[%s2991 + $0x8] sm:$0xff]
      %v2994 = vld [vmem:[%s2991 + $0x10] sm:$0xf]
      %v2996 = vsel %vm430, %v2992, 0
      %v2999 = vsel %vm430, %v2993, 0
      %v3002 = vsel %vm430, %v2994, 0
      %3004 = vmatprep.subr.mxu0 %v2988
      %3005 = vmatpush1.msra.mxu0 %v2987
      %3006 = vmatprep.subr.mxu0 %v2990
      %3007 = vmatpush1.msra.mxu0 %v2989
      %3008 = vmatprep.subr.mxu0 0.0
      %3009 = vmatpush1.msra.mxu0 0.0
      %3010 = vmatprep.subr.mxu0 0.0
      %3011 = vmatpush1.msra.mxu0 0.0
      %3012 = vmatprep.subr.mxu0 0.0
      %3013 = vmatpush1.msra.mxu0 0.0
      %3014 = vmatprep.subr.mxu0 0.0
      %3015 = vmatpush1.msra.mxu0 0.0
      %3016 = vmatprep.subr.mxu0 0.0
      %3017 = vmatpush1.msra.mxu0 0.0
      %3018 = vmatprep.subr.mxu0 0.0
      %3019 = vmatpush1.msra.mxu0 0.0
      %3020 = vmatprep.subr.mxu0 0.0
      %3021 = vmatpush1.msra.mxu0 0.0
      %3022 = vmatprep.subr.mxu0 0.0
      %3023 = vmatpush1.msra.mxu0 0.0
      %3024 = vmatprep.subr.mxu0 0.0
      %3025 = vmatpush1.msra.mxu0 0.0
      %3026 = vmatprep.subr.mxu0 0.0
      %3027 = vmatpush1.msra.mxu0 0.0
      %3028 = vmatprep.subr.mxu0 0.0
      %3029 = vmatpush1.msra.mxu0 0.0
      %3030 = vmatprep.subr.mxu0 0.0
      %3031 = vmatpush1.msra.mxu0 0.0
      %3032 = vmatprep.subr.mxu0 0.0
      %3033 = vmatpush1.msra.mxu0 0.0
      %3034 = vmatprep.subr.mxu0 0.0
      %3035 = vmatpush1.msra.mxu0 0.0
      %3036 = vmatprep.subr.mxu0 0.0
      %3037 = vmatpush1.msra.mxu0 0.0
      %3038 = vmatprep.subr.mxu0 0.0
      %3039 = vmatpush1.msra.mxu0 0.0
      %3040 = vmatprep.subr.mxu0 0.0
      %3041 = vmatpush1.msra.mxu0 0.0
      %3042 = vmatprep.subr.mxu0 0.0
      %3043 = vmatpush1.msra.mxu0 0.0
      %3044 = vmatprep.subr.mxu0 0.0
      %3045 = vmatpush1.msra.mxu0 0.0
      %3046 = vmatprep.subr.mxu0 0.0
      %3047 = vmatpush1.msra.mxu0 0.0
      %3048 = vmatprep.subr.mxu0 0.0
      %3049 = vmatpush1.msra.mxu0 0.0
      %3050 = vmatprep.subr.mxu0 0.0
      %3051 = vmatpush1.msra.mxu0 0.0
      %3052 = vmatprep.subr.mxu0 0.0
      %3053 = vmatpush1.msra.mxu0 0.0
      %3054 = vmatprep.subr.mxu0 0.0
      %3055 = vmatpush1.msra.mxu0 0.0
      %3056 = vmatprep.subr.mxu0 0.0
      %3057 = vmatpush1.msra.mxu0 0.0
      %3058 = vmatprep.subr.mxu0 0.0
      %3059 = vmatpush1.msra.mxu0 0.0
      %3060 = vmatprep.subr.mxu0 0.0
      %3061 = vmatpush1.msra.mxu0 0.0
      %3062 = vmatprep.subr.mxu0 0.0
      %3063 = vmatpush1.msra.mxu0 0.0
      %3064 = vmatprep.subr.mxu0 0.0
      %3065 = vmatpush1.msra.mxu0 0.0
      %3066 = vmatprep.subr.mxu0 0.0
      %3067 = vmatpush1.msra.mxu0 0.0
      %3068 = vmatprep.mubr.f32.mxu0 0.0
      %3069 = vmatmul.mubr.f32.gmra.mrb[0].mxu0 %v2996
      %v3070 = vpop.f32.mrb[0].mxu0
      %v3071 = vadd.f32 0.0, %v3070
      %v3072 = vpop.f32.mrb[0].mxu0
      %v3073 = vadd.f32 0.0, %v3072
      %3074 = vmatprep.mubr.f32.mxu0 0.0
      %3075 = vmatmul.mubr.f32.gmra.mrb[0].mxu0 %v2999
      %v3076 = vpop.f32.mrb[0].mxu0
      %v3077 = vadd.f32 0.0, %v3076
      %v3078 = vpop.f32.mrb[0].mxu0
      %v3079 = vadd.f32 0.0, %v3078
      %3080 = vmatprep.mubr.f32.mxu0 0.0
      %3081 = vmatmul.mubr.f32.gmra.mrb[0].mxu0 %v3002
      %v3082 = vpop.f32.mrb[0].mxu0
      %v3083 = vadd.f32 0.0, %v3082
      %v3084 = vpop.f32.mrb[0].mxu0
      %v3085 = vadd.f32 0.0, %v3084
      %3086 = vdwg.mxu0
      %v3087 = vadd.f32 %v2955, %v3071
      %v3088 = vadd.f32 %v2956, %v3073
      %v3089 = vadd.f32 %v2957, %v3077
      %v3090 = vadd.f32 %v2958, %v3079
      %v3091 = vadd.f32 %v2959, %v3083
      %v3092 = vadd.f32 %v2960, %v3085
      %3093 = vrot.lane.b32.xlu0 %v358, 97
      %v3094 = vpop.permute.xlu0 %3093
      %3095 = vrot.lane.b32.xlu0 %v360, 97
      %v3096 = vpop.permute.xlu0 %3095
      %3097 = vrot.lane.b32.xlu0 %v359, 97
      %v3098 = vpop.permute.xlu0 %3097
      %3099 = vrot.lane.b32.xlu0 %v361, 97
      %v3100 = vpop.permute.xlu0 %3099
      %vm3101 = vcmp.lt.s32.totalorder %v371, 97
      %v3102 = vsel %vm3101, %v3094, %v3098
      %v3103 = vsel %vm3101, %v3096, %v3100
      %v3104 = vsel %vm3101, %v3098, %v3094
      %v3105 = vsel %vm3101, %v3100, %v3096
      %s3106 = scalar_lea.vmem %s5, 42
      %v3107 = vld [vmem:[%s3106] sm:$0x3]
      %v3109 = vlaneseq
      %v3110 = vshrl.u32 %v3109, 7
      %v3111 = vsub.s32 0, %v3110
      %v3112 = vrot.slane %v3107, %v3111
      %v3113 = vlaneseq
      %v3114 = vshrl.u32 %v3113, 7
      %v3115 = vsub.s32 1, %v3114
      %v3116 = vrot.slane %v3107, %v3115
      %v3119 = vmul.f32 %v3102, %v3112
      %v3120 = vmul.f32 %v3104, %v3116
      %v3121 = vmul.f32 %v3103, %v3112
      %v3122 = vmul.f32 %v3105, %v3116
      %s3123 = scalar_lea.vmem %s3, 504
      %v3124 = vld [vmem:[%s3123] sm:$0xff]
      %v3125 = vld [vmem:[%s3123 + $0x8] sm:$0xff]
      %v3126 = vld [vmem:[%s3123 + $0x10] sm:$0xf]
      %v3128 = vsel %vm430, %v3124, 0
      %v3131 = vsel %vm430, %v3125, 0
      %v3134 = vsel %vm430, %v3126, 0
      %3136 = vmatprep.subr.mxu0 %v3120
      %3137 = vmatpush1.msra.mxu0 %v3119
      %3138 = vmatprep.subr.mxu0 %v3122
      %3139 = vmatpush1.msra.mxu0 %v3121
      %3140 = vmatprep.subr.mxu0 0.0
      %3141 = vmatpush1.msra.mxu0 0.0
      %3142 = vmatprep.subr.mxu0 0.0
      %3143 = vmatpush1.msra.mxu0 0.0
      %3144 = vmatprep.subr.mxu0 0.0
      %3145 = vmatpush1.msra.mxu0 0.0
      %3146 = vmatprep.subr.mxu0 0.0
      %3147 = vmatpush1.msra.mxu0 0.0
      %3148 = vmatprep.subr.mxu0 0.0
      %3149 = vmatpush1.msra.mxu0 0.0
      %3150 = vmatprep.subr.mxu0 0.0
      %3151 = vmatpush1.msra.mxu0 0.0
      %3152 = vmatprep.subr.mxu0 0.0
      %3153 = vmatpush1.msra.mxu0 0.0
      %3154 = vmatprep.subr.mxu0 0.0
      %3155 = vmatpush1.msra.mxu0 0.0
      %3156 = vmatprep.subr.mxu0 0.0
      %3157 = vmatpush1.msra.mxu0 0.0
      %3158 = vmatprep.subr.mxu0 0.0
      %3159 = vmatpush1.msra.mxu0 0.0
      %3160 = vmatprep.subr.mxu0 0.0
      %3161 = vmatpush1.msra.mxu0 0.0
      %3162 = vmatprep.subr.mxu0 0.0
      %3163 = vmatpush1.msra.mxu0 0.0
      %3164 = vmatprep.subr.mxu0 0.0
      %3165 = vmatpush1.msra.mxu0 0.0
      %3166 = vmatprep.subr.mxu0 0.0
      %3167 = vmatpush1.msra.mxu0 0.0
      %3168 = vmatprep.subr.mxu0 0.0
      %3169 = vmatpush1.msra.mxu0 0.0
      %3170 = vmatprep.subr.mxu0 0.0
      %3171 = vmatpush1.msra.mxu0 0.0
      %3172 = vmatprep.subr.mxu0 0.0
      %3173 = vmatpush1.msra.mxu0 0.0
      %3174 = vmatprep.subr.mxu0 0.0
      %3175 = vmatpush1.msra.mxu0 0.0
      %3176 = vmatprep.subr.mxu0 0.0
      %3177 = vmatpush1.msra.mxu0 0.0
      %3178 = vmatprep.subr.mxu0 0.0
      %3179 = vmatpush1.msra.mxu0 0.0
      %3180 = vmatprep.subr.mxu0 0.0
      %3181 = vmatpush1.msra.mxu0 0.0
      %3182 = vmatprep.subr.mxu0 0.0
      %3183 = vmatpush1.msra.mxu0 0.0
      %3184 = vmatprep.subr.mxu0 0.0
      %3185 = vmatpush1.msra.mxu0 0.0
      %3186 = vmatprep.subr.mxu0 0.0
      %3187 = vmatpush1.msra.mxu0 0.0
      %3188 = vmatprep.subr.mxu0 0.0
      %3189 = vmatpush1.msra.mxu0 0.0
      %3190 = vmatprep.subr.mxu0 0.0
      %3191 = vmatpush1.msra.mxu0 0.0
      %3192 = vmatprep.subr.mxu0 0.0
      %3193 = vmatpush1.msra.mxu0 0.0
      %3194 = vmatprep.subr.mxu0 0.0
      %3195 = vmatpush1.msra.mxu0 0.0
      %3196 = vmatprep.subr.mxu0 0.0
      %3197 = vmatpush1.msra.mxu0 0.0
      %3198 = vmatprep.subr.mxu0 0.0
      %3199 = vmatpush1.msra.mxu0 0.0
      %3200 = vmatprep.mubr.f32.mxu0 0.0
      %3201 = vmatmul.mubr.f32.gmra.mrb[0].mxu0 %v3128
      %v3202 = vpop.f32.mrb[0].mxu0
      %v3203 = vadd.f32 0.0, %v3202
      %v3204 = vpop.f32.mrb[0].mxu0
      %v3205 = vadd.f32 0.0, %v3204
      %3206 = vmatprep.mubr.f32.mxu0 0.0
      %3207 = vmatmul.mubr.f32.gmra.mrb[0].mxu0 %v3131
      %v3208 = vpop.f32.mrb[0].mxu0
      %v3209 = vadd.f32 0.0, %v3208
      %v3210 = vpop.f32.mrb[0].mxu0
      %v3211 = vadd.f32 0.0, %v3210
      %3212 = vmatprep.mubr.f32.mxu0 0.0
      %3213 = vmatmul.mubr.f32.gmra.mrb[0].mxu0 %v3134
      %v3214 = vpop.f32.mrb[0].mxu0
      %v3215 = vadd.f32 0.0, %v3214
      %v3216 = vpop.f32.mrb[0].mxu0
      %v3217 = vadd.f32 0.0, %v3216
      %3218 = vdwg.mxu0
      %v3219 = vadd.f32 %v3087, %v3203
      %v3220 = vadd.f32 %v3088, %v3205
      %v3221 = vadd.f32 %v3089, %v3209
      %v3222 = vadd.f32 %v3090, %v3211
      %v3223 = vadd.f32 %v3091, %v3215
      %v3224 = vadd.f32 %v3092, %v3217
      %3225 = vrot.lane.b32.xlu0 %v358, 96
      %v3226 = vpop.permute.xlu0 %3225
      %3227 = vrot.lane.b32.xlu0 %v360, 96
      %v3228 = vpop.permute.xlu0 %3227
      %3229 = vrot.lane.b32.xlu0 %v359, 96
      %v3230 = vpop.permute.xlu0 %3229
      %3231 = vrot.lane.b32.xlu0 %v361, 96
      %v3232 = vpop.permute.xlu0 %3231
      %vm3233 = vcmp.lt.s32.totalorder %v371, 96
      %v3234 = vsel %vm3233, %v3226, %v3230
      %v3235 = vsel %vm3233, %v3228, %v3232
      %v3236 = vsel %vm3233, %v3230, %v3226
      %v3237 = vsel %vm3233, %v3232, %v3228
      %s3238 = scalar_lea.vmem %s5, 44
      %v3239 = vld [vmem:[%s3238] sm:$0x3]
      %v3241 = vlaneseq
      %v3242 = vshrl.u32 %v3241, 7
      %v3243 = vsub.s32 0, %v3242
      %v3244 = vrot.slane %v3239, %v3243
      %v3245 = vlaneseq
      %v3246 = vshrl.u32 %v3245, 7
      %v3247 = vsub.s32 1, %v3246
      %v3248 = vrot.slane %v3239, %v3247
      %v3251 = vmul.f32 %v3234, %v3244
      %v3252 = vmul.f32 %v3236, %v3248
      %v3253 = vmul.f32 %v3235, %v3244
      %v3254 = vmul.f32 %v3237, %v3248
      %s3255 = scalar_lea.vmem %s3, 528
      %v3256 = vld [vmem:[%s3255] sm:$0xff]
      %v3257 = vld [vmem:[%s3255 + $0x8] sm:$0xff]
      %v3258 = vld [vmem:[%s3255 + $0x10] sm:$0xf]
      %v3260 = vsel %vm430, %v3256, 0
      %v3263 = vsel %vm430, %v3257, 0
      %v3266 = vsel %vm430, %v3258, 0
      %3268 = vmatprep.subr.mxu0 %v3252
      %3269 = vmatpush1.msra.mxu0 %v3251
      %3270 = vmatprep.subr.mxu0 %v3254
      %3271 = vmatpush1.msra.mxu0 %v3253
      %3272 = vmatprep.subr.mxu0 0.0
      %3273 = vmatpush1.msra.mxu0 0.0
      %3274 = vmatprep.subr.mxu0 0.0
      %3275 = vmatpush1.msra.mxu0 0.0
      %3276 = vmatprep.subr.mxu0 0.0
      %3277 = vmatpush1.msra.mxu0 0.0
      %3278 = vmatprep.subr.mxu0 0.0
      %3279 = vmatpush1.msra.mxu0 0.0
      %3280 = vmatprep.subr.mxu0 0.0
      %3281 = vmatpush1.msra.mxu0 0.0
      %3282 = vmatprep.subr.mxu0 0.0
      %3283 = vmatpush1.msra.mxu0 0.0
      %3284 = vmatprep.subr.mxu0 0.0
      %3285 = vmatpush1.msra.mxu0 0.0
      %3286 = vmatprep.subr.mxu0 0.0
      %3287 = vmatpush1.msra.mxu0 0.0
      %3288 = vmatprep.subr.mxu0 0.0
      %3289 = vmatpush1.msra.mxu0 0.0
      %3290 = vmatprep.subr.mxu0 0.0
      %3291 = vmatpush1.msra.mxu0 0.0
      %3292 = vmatprep.subr.mxu0 0.0
      %3293 = vmatpush1.msra.mxu0 0.0
      %3294 = vmatprep.subr.mxu0 0.0
      %3295 = vmatpush1.msra.mxu0 0.0
      %3296 = vmatprep.subr.mxu0 0.0
      %3297 = vmatpush1.msra.mxu0 0.0
      %3298 = vmatprep.subr.mxu0 0.0
      %3299 = vmatpush1.msra.mxu0 0.0
      %3300 = vmatprep.subr.mxu0 0.0
      %3301 = vmatpush1.msra.mxu0 0.0
      %3302 = vmatprep.subr.mxu0 0.0
      %3303 = vmatpush1.msra.mxu0 0.0
      %3304 = vmatprep.subr.mxu0 0.0
      %3305 = vmatpush1.msra.mxu0 0.0
      %3306 = vmatprep.subr.mxu0 0.0
      %3307 = vmatpush1.msra.mxu0 0.0
      %3308 = vmatprep.subr.mxu0 0.0
      %3309 = vmatpush1.msra.mxu0 0.0
      %3310 = vmatprep.subr.mxu0 0.0
      %3311 = vmatpush1.msra.mxu0 0.0
      %3312 = vmatprep.subr.mxu0 0.0
      %3313 = vmatpush1.msra.mxu0 0.0
      %3314 = vmatprep.subr.mxu0 0.0
      %3315 = vmatpush1.msra.mxu0 0.0
      %3316 = vmatprep.subr.mxu0 0.0
      %3317 = vmatpush1.msra.mxu0 0.0
      %3318 = vmatprep.subr.mxu0 0.0
      %3319 = vmatpush1.msra.mxu0 0.0
      %3320 = vmatprep.subr.mxu0 0.0
      %3321 = vmatpush1.msra.mxu0 0.0
      %3322 = vmatprep.subr.mxu0 0.0
      %3323 = vmatpush1.msra.mxu0 0.0
      %3324 = vmatprep.subr.mxu0 0.0
      %3325 = vmatpush1.msra.mxu0 0.0
      %3326 = vmatprep.subr.mxu0 0.0
      %3327 = vmatpush1.msra.mxu0 0.0
      %3328 = vmatprep.subr.mxu0 0.0
      %3329 = vmatpush1.msra.mxu0 0.0
      %3330 = vmatprep.subr.mxu0 0.0
      %3331 = vmatpush1.msra.mxu0 0.0
      %3332 = vmatprep.mubr.f32.mxu0 0.0
      %3333 = vmatmul.mubr.f32.gmra.mrb[0].mxu0 %v3260
      %v3334 = vpop.f32.mrb[0].mxu0
      %v3335 = vadd.f32 0.0, %v3334
      %v3336 = vpop.f32.mrb[0].mxu0
      %v3337 = vadd.f32 0.0, %v3336
      %3338 = vmatprep.mubr.f32.mxu0 0.0
      %3339 = vmatmul.mubr.f32.gmra.mrb[0].mxu0 %v3263
      %v3340 = vpop.f32.mrb[0].mxu0
      %v3341 = vadd.f32 0.0, %v3340
      %v3342 = vpop.f32.mrb[0].mxu0
      %v3343 = vadd.f32 0.0, %v3342
      %3344 = vmatprep.mubr.f32.mxu0 0.0
      %3345 = vmatmul.mubr.f32.gmra.mrb[0].mxu0 %v3266
      %v3346 = vpop.f32.mrb[0].mxu0
      %v3347 = vadd.f32 0.0, %v3346
      %v3348 = vpop.f32.mrb[0].mxu0
      %v3349 = vadd.f32 0.0, %v3348
      %3350 = vdwg.mxu0
      %v3351 = vadd.f32 %v3219, %v3335
      %v3352 = vadd.f32 %v3220, %v3337
      %v3353 = vadd.f32 %v3221, %v3341
      %v3354 = vadd.f32 %v3222, %v3343
      %v3355 = vadd.f32 %v3223, %v3347
      %v3356 = vadd.f32 %v3224, %v3349
      %3357 = vrot.lane.b32.xlu0 %v358, 95
      %v3358 = vpop.permute.xlu0 %3357
      %3359 = vrot.lane.b32.xlu0 %v360, 95
      %v3360 = vpop.permute.xlu0 %3359
      %3361 = vrot.lane.b32.xlu0 %v359, 95
      %v3362 = vpop.permute.xlu0 %3361
      %3363 = vrot.lane.b32.xlu0 %v361, 95
      %v3364 = vpop.permute.xlu0 %3363
      %vm3365 = vcmp.lt.s32.totalorder %v371, 95
      %v3366 = vsel %vm3365, %v3358, %v3362
      %v3367 = vsel %vm3365, %v3360, %v3364
      %v3368 = vsel %vm3365, %v3362, %v3358
      %v3369 = vsel %vm3365, %v3364, %v3360
      %s3370 = scalar_lea.vmem %s5, 46
      %v3371 = vld [vmem:[%s3370] sm:$0x3]
      %v3373 = vlaneseq
      %v3374 = vshrl.u32 %v3373, 7
      %v3375 = vsub.s32 0, %v3374
      %v3376 = vrot.slane %v3371, %v3375
      %v3377 = vlaneseq
      %v3378 = vshrl.u32 %v3377, 7
      %v3379 = vsub.s32 1, %v3378
      %v3380 = vrot.slane %v3371, %v3379
      %v3383 = vmul.f32 %v3366, %v3376
      %v3384 = vmul.f32 %v3368, %v3380
      %v3385 = vmul.f32 %v3367, %v3376
      %v3386 = vmul.f32 %v3369, %v3380
      %s3387 = scalar_lea.vmem %s3, 552
      %v3388 = vld [vmem:[%s3387] sm:$0xff]
      %v3389 = vld [vmem:[%s3387 + $0x8] sm:$0xff]
      %v3390 = vld [vmem:[%s3387 + $0x10] sm:$0xf]
      %v3392 = vsel %vm430, %v3388, 0
      %v3395 = vsel %vm430, %v3389, 0
      %v3398 = vsel %vm430, %v3390, 0
      %3400 = vmatprep.subr.mxu0 %v3384
      %3401 = vmatpush1.msra.mxu0 %v3383
      %3402 = vmatprep.subr.mxu0 %v3386
      %3403 = vmatpush1.msra.mxu0 %v3385
      %3404 = vmatprep.subr.mxu0 0.0
      %3405 = vmatpush1.msra.mxu0 0.0
      %3406 = vmatprep.subr.mxu0 0.0
      %3407 = vmatpush1.msra.mxu0 0.0
      %3408 = vmatprep.subr.mxu0 0.0
      %3409 = vmatpush1.msra.mxu0 0.0
      %3410 = vmatprep.subr.mxu0 0.0
      %3411 = vmatpush1.msra.mxu0 0.0
      %3412 = vmatprep.subr.mxu0 0.0
      %3413 = vmatpush1.msra.mxu0 0.0
      %3414 = vmatprep.subr.mxu0 0.0
      %3415 = vmatpush1.msra.mxu0 0.0
      %3416 = vmatprep.subr.mxu0 0.0
      %3417 = vmatpush1.msra.mxu0 0.0
      %3418 = vmatprep.subr.mxu0 0.0
      %3419 = vmatpush1.msra.mxu0 0.0
      %3420 = vmatprep.subr.mxu0 0.0
      %3421 = vmatpush1.msra.mxu0 0.0
      %3422 = vmatprep.subr.mxu0 0.0
      %3423 = vmatpush1.msra.mxu0 0.0
      %3424 = vmatprep.subr.mxu0 0.0
      %3425 = vmatpush1.msra.mxu0 0.0
      %3426 = vmatprep.subr.mxu0 0.0
      %3427 = vmatpush1.msra.mxu0 0.0
      %3428 = vmatprep.subr.mxu0 0.0
      %3429 = vmatpush1.msra.mxu0 0.0
      %3430 = vmatprep.subr.mxu0 0.0
      %3431 = vmatpush1.msra.mxu0 0.0
      %3432 = vmatprep.subr.mxu0 0.0
      %3433 = vmatpush1.msra.mxu0 0.0
      %3434 = vmatprep.subr.mxu0 0.0
      %3435 = vmatpush1.msra.mxu0 0.0
      %3436 = vmatprep.subr.mxu0 0.0
      %3437 = vmatpush1.msra.mxu0 0.0
      %3438 = vmatprep.subr.mxu0 0.0
      %3439 = vmatpush1.msra.mxu0 0.0
      %3440 = vmatprep.subr.mxu0 0.0
      %3441 = vmatpush1.msra.mxu0 0.0
      %3442 = vmatprep.subr.mxu0 0.0
      %3443 = vmatpush1.msra.mxu0 0.0
      %3444 = vmatprep.subr.mxu0 0.0
      %3445 = vmatpush1.msra.mxu0 0.0
      %3446 = vmatprep.subr.mxu0 0.0
      %3447 = vmatpush1.msra.mxu0 0.0
      %3448 = vmatprep.subr.mxu0 0.0
      %3449 = vmatpush1.msra.mxu0 0.0
      %3450 = vmatprep.subr.mxu0 0.0
      %3451 = vmatpush1.msra.mxu0 0.0
      %3452 = vmatprep.subr.mxu0 0.0
      %3453 = vmatpush1.msra.mxu0 0.0
      %3454 = vmatprep.subr.mxu0 0.0
      %3455 = vmatpush1.msra.mxu0 0.0
      %3456 = vmatprep.subr.mxu0 0.0
      %3457 = vmatpush1.msra.mxu0 0.0
      %3458 = vmatprep.subr.mxu0 0.0
      %3459 = vmatpush1.msra.mxu0 0.0
      %3460 = vmatprep.subr.mxu0 0.0
      %3461 = vmatpush1.msra.mxu0 0.0
      %3462 = vmatprep.subr.mxu0 0.0
      %3463 = vmatpush1.msra.mxu0 0.0
      %3464 = vmatprep.mubr.f32.mxu0 0.0
      %3465 = vmatmul.mubr.f32.gmra.mrb[0].mxu0 %v3392
      %v3466 = vpop.f32.mrb[0].mxu0
      %v3467 = vadd.f32 0.0, %v3466
      %v3468 = vpop.f32.mrb[0].mxu0
      %v3469 = vadd.f32 0.0, %v3468
      %3470 = vmatprep.mubr.f32.mxu0 0.0
      %3471 = vmatmul.mubr.f32.gmra.mrb[0].mxu0 %v3395
      %v3472 = vpop.f32.mrb[0].mxu0
      %v3473 = vadd.f32 0.0, %v3472
      %v3474 = vpop.f32.mrb[0].mxu0
      %v3475 = vadd.f32 0.0, %v3474
      %3476 = vmatprep.mubr.f32.mxu0 0.0
      %3477 = vmatmul.mubr.f32.gmra.mrb[0].mxu0 %v3398
      %v3478 = vpop.f32.mrb[0].mxu0
      %v3479 = vadd.f32 0.0, %v3478
      %v3480 = vpop.f32.mrb[0].mxu0
      %v3481 = vadd.f32 0.0, %v3480
      %3482 = vdwg.mxu0
      %v3483 = vadd.f32 %v3351, %v3467
      %v3484 = vadd.f32 %v3352, %v3469
      %v3485 = vadd.f32 %v3353, %v3473
      %v3486 = vadd.f32 %v3354, %v3475
      %v3487 = vadd.f32 %v3355, %v3479
      %v3488 = vadd.f32 %v3356, %v3481
      %3489 = vrot.lane.b32.xlu0 %v358, 94
      %v3490 = vpop.permute.xlu0 %3489
      %3491 = vrot.lane.b32.xlu0 %v360, 94
      %v3492 = vpop.permute.xlu0 %3491
      %3493 = vrot.lane.b32.xlu0 %v359, 94
      %v3494 = vpop.permute.xlu0 %3493
      %3495 = vrot.lane.b32.xlu0 %v361, 94
      %v3496 = vpop.permute.xlu0 %3495
      %vm3497 = vcmp.lt.s32.totalorder %v371, 94
      %v3498 = vsel %vm3497, %v3490, %v3494
      %v3499 = vsel %vm3497, %v3492, %v3496
      %v3500 = vsel %vm3497, %v3494, %v3490
      %v3501 = vsel %vm3497, %v3496, %v3492
      %s3502 = scalar_lea.vmem %s5, 48
      %v3503 = vld [vmem:[%s3502] sm:$0x3]
      %v3505 = vlaneseq
      %v3506 = vshrl.u32 %v3505, 7
      %v3507 = vsub.s32 0, %v3506
      %v3508 = vrot.slane %v3503, %v3507
      %v3509 = vlaneseq
      %v3510 = vshrl.u32 %v3509, 7
      %v3511 = vsub.s32 1, %v3510
      %v3512 = vrot.slane %v3503, %v3511
      %v3515 = vmul.f32 %v3498, %v3508
      %v3516 = vmul.f32 %v3500, %v3512
      %v3517 = vmul.f32 %v3499, %v3508
      %v3518 = vmul.f32 %v3501, %v3512
      %s3519 = scalar_lea.vmem %s3, 576
      %v3520 = vld [vmem:[%s3519] sm:$0xff]
      %v3521 = vld [vmem:[%s3519 + $0x8] sm:$0xff]
      %v3522 = vld [vmem:[%s3519 + $0x10] sm:$0xf]
      %v3524 = vsel %vm430, %v3520, 0
      %v3527 = vsel %vm430, %v3521, 0
      %v3530 = vsel %vm430, %v3522, 0
      %3532 = vmatprep.subr.mxu0 %v3516
      %3533 = vmatpush1.msra.mxu0 %v3515
      %3534 = vmatprep.subr.mxu0 %v3518
      %3535 = vmatpush1.msra.mxu0 %v3517
      %3536 = vmatprep.subr.mxu0 0.0
      %3537 = vmatpush1.msra.mxu0 0.0
      %3538 = vmatprep.subr.mxu0 0.0
      %3539 = vmatpush1.msra.mxu0 0.0
      %3540 = vmatprep.subr.mxu0 0.0
      %3541 = vmatpush1.msra.mxu0 0.0
      %3542 = vmatprep.subr.mxu0 0.0
      %3543 = vmatpush1.msra.mxu0 0.0
      %3544 = vmatprep.subr.mxu0 0.0
      %3545 = vmatpush1.msra.mxu0 0.0
      %3546 = vmatprep.subr.mxu0 0.0
      %3547 = vmatpush1.msra.mxu0 0.0
      %3548 = vmatprep.subr.mxu0 0.0
      %3549 = vmatpush1.msra.mxu0 0.0
      %3550 = vmatprep.subr.mxu0 0.0
      %3551 = vmatpush1.msra.mxu0 0.0
      %3552 = vmatprep.subr.mxu0 0.0
      %3553 = vmatpush1.msra.mxu0 0.0
      %3554 = vmatprep.subr.mxu0 0.0
      %3555 = vmatpush1.msra.mxu0 0.0
      %3556 = vmatprep.subr.mxu0 0.0
      %3557 = vmatpush1.msra.mxu0 0.0
      %3558 = vmatprep.subr.mxu0 0.0
      %3559 = vmatpush1.msra.mxu0 0.0
      %3560 = vmatprep.subr.mxu0 0.0
      %3561 = vmatpush1.msra.mxu0 0.0
      %3562 = vmatprep.subr.mxu0 0.0
      %3563 = vmatpush1.msra.mxu0 0.0
      %3564 = vmatprep.subr.mxu0 0.0
      %3565 = vmatpush1.msra.mxu0 0.0
      %3566 = vmatprep.subr.mxu0 0.0
      %3567 = vmatpush1.msra.mxu0 0.0
      %3568 = vmatprep.subr.mxu0 0.0
      %3569 = vmatpush1.msra.mxu0 0.0
      %3570 = vmatprep.subr.mxu0 0.0
      %3571 = vmatpush1.msra.mxu0 0.0
      %3572 = vmatprep.subr.mxu0 0.0
      %3573 = vmatpush1.msra.mxu0 0.0
      %3574 = vmatprep.subr.mxu0 0.0
      %3575 = vmatpush1.msra.mxu0 0.0
      %3576 = vmatprep.subr.mxu0 0.0
      %3577 = vmatpush1.msra.mxu0 0.0
      %3578 = vmatprep.subr.mxu0 0.0
      %3579 = vmatpush1.msra.mxu0 0.0
      %3580 = vmatprep.subr.mxu0 0.0
      %3581 = vmatpush1.msra.mxu0 0.0
      %3582 = vmatprep.subr.mxu0 0.0
      %3583 = vmatpush1.msra.mxu0 0.0
      %3584 = vmatprep.subr.mxu0 0.0
      %3585 = vmatpush1.msra.mxu0 0.0
      %3586 = vmatprep.subr.mxu0 0.0
      %3587 = vmatpush1.msra.mxu0 0.0
      %3588 = vmatprep.subr.mxu0 0.0
      %3589 = vmatpush1.msra.mxu0 0.0
      %3590 = vmatprep.subr.mxu0 0.0
      %3591 = vmatpush1.msra.mxu0 0.0
      %3592 = vmatprep.subr.mxu0 0.0
      %3593 = vmatpush1.msra.mxu0 0.0
      %3594 = vmatprep.subr.mxu0 0.0
      %3595 = vmatpush1.msra.mxu0 0.0
      %3596 = vmatprep.mubr.f32.mxu0 0.0
      %3597 = vmatmul.mubr.f32.gmra.mrb[0].mxu0 %v3524
      %v3598 = vpop.f32.mrb[0].mxu0
      %v3599 = vadd.f32 0.0, %v3598
      %v3600 = vpop.f32.mrb[0].mxu0
      %v3601 = vadd.f32 0.0, %v3600
      %3602 = vmatprep.mubr.f32.mxu0 0.0
      %3603 = vmatmul.mubr.f32.gmra.mrb[0].mxu0 %v3527
      %v3604 = vpop.f32.mrb[0].mxu0
      %v3605 = vadd.f32 0.0, %v3604
      %v3606 = vpop.f32.mrb[0].mxu0
      %v3607 = vadd.f32 0.0, %v3606
      %3608 = vmatprep.mubr.f32.mxu0 0.0
      %3609 = vmatmul.mubr.f32.gmra.mrb[0].mxu0 %v3530
      %v3610 = vpop.f32.mrb[0].mxu0
      %v3611 = vadd.f32 0.0, %v3610
      %v3612 = vpop.f32.mrb[0].mxu0
      %v3613 = vadd.f32 0.0, %v3612
      %3614 = vdwg.mxu0
      %v3615 = vadd.f32 %v3483, %v3599
      %v3616 = vadd.f32 %v3484, %v3601
      %v3617 = vadd.f32 %v3485, %v3605
      %v3618 = vadd.f32 %v3486, %v3607
      %v3619 = vadd.f32 %v3487, %v3611
      %v3620 = vadd.f32 %v3488, %v3613
      %v3621 = vld [vmem:[%s4] sm:$0xff]
      %v3622 = vld [vmem:[%s4 + $0x8] sm:$0xff]
      %v3623 = vld [vmem:[%s4 + $0x10] sm:$0xf]
      %3625 = vset.pattern.permute.xlu0 0
      %3626 = vperm.xlu0 %3625, %v3621
      %v3627 = vpop.permute.xlu0 %3626
      %3630 = vset.pattern.permute.xlu0 0
      %3631 = vperm.xlu0 %3630, %v3622
      %v3632 = vpop.permute.xlu0 %3631
      %3635 = vset.pattern.permute.xlu0 0
      %3636 = vperm.xlu0 %3635, %v3623
      %v3637 = vpop.permute.xlu0 %3636
      %v3639 = vadd.f32 %v3615, %v3627
      %v3640 = vadd.f32 %v3616, %v3627
      %v3641 = vadd.f32 %v3617, %v3632
      %v3642 = vadd.f32 %v3618, %v3632
      %v3643 = vadd.f32 %v3619, %v3637
      %v3644 = vadd.f32 %v3620, %v3637
      %v3645 = vmax.f32 %v3639, 0.0
      %v3646 = vmax.f32 %v3640, 0.0
      %v3647 = vmax.f32 %v3641, 0.0
      %v3648 = vmax.f32 %v3642, 0.0
      %v3649 = vmax.f32 %v3643, 0.0
      %v3650 = vmax.f32 %v3644, 0.0
      %3651 = vst [vmem:[%s251] sm:$0xff] %v3645
      %3652 = vst [vmem:[%s251 + $0x8] sm:$0xff] %v3646
      %3653 = vst [vmem:[%s251 + $0x10] sm:$0xff] %v3647
      %3654 = vst [vmem:[%s251 + $0x18] sm:$0xff] %v3648
      %3655 = vst [vmem:[%s251 + $0x20] sm:$0xf] %v3649
      %3656 = vst [vmem:[%s251 + $0x28] sm:$0xf] %v3650
      %p3657 = scmp.lt.s32.totalorder %s17, 1
      %s3658 = scalar_select %p3657, %s17, 1
      %s3659 = smul.addr %s3658, 6
      %s3660 = smul.addr %s3659, 8
      %s3661 = scalar_lea.vmem %s6, %s3660
      // Predicated region
      $region45: #{forward.1} parent=43 // pred_check
        %p3662 = pneg %p166
      $region46: #{forward.1} parent=43 // pred_check_branch
        %3664 = sbr.rel (%p3662) target = $region48
      $region47: #{forward.1} parent=43 // pred_region
        _
      $region48: #{forward.1} parent=43 // pred_fallthru
        _
    $region44: #{forward.1} parent=5 // pred_fallthru
      _
    %p3665 = scmp.le.s32.totalorder 2, %s12
    // Predicated region
    $region49: #{forward.1} parent=5 // pred_check
      %p3666 = pneg %p3665
    $region50: #{forward.1} parent=5 // pred_check_branch
      %3668 = sbr.rel (%p3666) target = $region52
    $region51: #{forward.1} parent=5 // pred_region
      %s3669 = ssub.s32 %s12, 2
      // Predicated region
      $region53: #{forward.1} parent=51 // pred_check
        %p3670 = pneg %p172
      $region54: #{forward.1} parent=51 // pred_check_branch
        %3672 = sbr.rel (%p3670) target = $region56
      $region55: #{forward.1} parent=51 // pred_region
        %p3673 = scmp.lt.s32.totalorder %s18, 1
        %s3674 = scalar_select %p3673, %s18, 1
        %s3675 = smul.addr %s3674, 6
        %s3676 = smul.addr %s3675, 8
        %s3677 = scalar_lea.vmem %s6, %s3676
      $region56: #{forward.1} parent=51 // pred_fallthru
        _
    $region52: #{forward.1} parent=5 // pred_fallthru
      _
  $region6: #{forward.1} parent=0 // loop_footer
    %s16 = sadd.s32 1, %s12
  $region7: #{forward.1} parent=0 // loop_footer_branch
    %11 = sbr.rel target = $region3
  $region8: #{forward.1} parent=0 // loop_exit
    _

</llo_original>
